<compile_context>
chip_gen: v7x
topology: tpu7x:2x2x1
jax: 0.10.0
libtpu: 0.0.40
codegen_flags: <defaults>
</compile_context>

<pallas_src>
import functools

import jax
import jax.numpy as jnp
from jax.experimental import pallas as pl
from jax.experimental.pallas import tpu as pltpu


def _vmem_limit_bytes():
    # Generation-aware scoped-VMEM limit: ~96 MiB on v5e/v6e (128 MiB VMEM),
    # ~48 MiB on v7x (64 MiB VMEM).  Falls back to a safe 48 MiB.
    try:
        cap = int(pltpu.get_tpu_info().vmem_capacity_bytes)
    except Exception:
        cap = 64 * 1024 * 1024
    return max(32 * 1024 * 1024, min((cap * 3) // 4, 100 * 1024 * 1024))


_VMEM_LIMIT = _vmem_limit_bytes()


# ----------------------------------------------------------------------------------
# Fused query encoder: ONE pallas_call computing
#     sign_k * ((E[ent_ids_k] + R[rel_ids_k]) @ W + b)   reduced over k by mean/max.
# Entity/relation tables stay in HBM; rows are gathered with parallel async DMAs.
# ----------------------------------------------------------------------------------
def _fused_encode_kernel(eid_ref, rid_ref, ent_hbm, rel_hbm, w_ref, b_ref,
                         out_ref, ent_buf, rel_buf, sem,
                         *, num_branches, batch, signs, reduce_op):
    total = num_branches * batch
    padded = ent_buf.shape[0]
    d = ent_buf.shape[1]
    if padded > total:
        # Only zero the pad rows (they feed the MXU but are never read back).
        pad = padded - total
        ent_buf[pl.ds(total, pad), :] = jnp.zeros((pad, d), ent_buf.dtype)
        rel_buf[pl.ds(total, pad), :] = jnp.zeros((pad, d), rel_buf.dtype)

    # Issue all row-gather DMAs up front (ids live in SMEM via scalar prefetch),
    # then wait once.  No scalar-dependent VMEM loads / masked sublane stores.
    copies = []
    for idx in range(total):
        copies.append(pltpu.make_async_copy(
            ent_hbm.at[eid_ref[idx]], ent_buf.at[idx], sem.at[0, idx]))
        copies.append(pltpu.make_async_copy(
            rel_hbm.at[rid_ref[idx]], rel_buf.at[idx], sem.at[1, idx]))
    for c in copies:
        c.start()
    for c in copies:
        c.wait()

    # One batched bf16 MXU matmul shared by every branch; f32 accumulation + f32 bias.
    x = (ent_buf[...] + rel_buf[...]).astype(jnp.bfloat16)
    proj = jnp.dot(x, w_ref[...], preferred_element_type=jnp.float32) + b_ref[...]

    def branch(k):
        sl = proj[k * batch:(k + 1) * batch, :]
        return -sl if signs[k] < 0 else sl

    acc = branch(0)
    for k in range(1, num_branches):
        nxt = branch(k)
        if reduce_op == "mean":       # intersection
            acc = acc + nxt
        else:                         # union ("max")
            acc = jnp.maximum(acc, nxt)
    if reduce_op == "mean" and num_branches > 1:
        acc = acc * (1.0 / num_branches)
    out_ref[...] = acc


def fused_encode(entity_table, relation_table, w_bf16, b, ent_ids, rel_ids, signs,
                 reduce_op):
    """entity_table [Ne,D] f32 (HBM), relation_table [Nr,D] f32 (HBM), w [D,D] bf16,
    b [1,D] f32, ent_ids/rel_ids [K,B] int32, signs static tuple of +/-1.  -> [B,D] f32."""
    K, B = ent_ids.shape
    if rel_ids.shape != (K, B):
        raise ValueError("ent_ids / rel_ids shape mismatch in fused_encode")
    _, D = entity_table.shape
    total = K * B
    padded_rows = max(8, ((total + 7) // 8) * 8)
    kernel = functools.partial(
        _fused_encode_kernel, num_branches=K, batch=B,
        signs=tuple(float(s) for s in signs), reduce_op=reduce_op)
    return pl.pallas_call(
        kernel,
        out_shape=jax.ShapeDtypeStruct((B, D), jnp.float32),
        grid_spec=pltpu.PrefetchScalarGridSpec(
            num_scalar_prefetch=2,
            grid=(1,),
            in_specs=[
                pl.BlockSpec(memory_space=pl.ANY),          # entity table stays in HBM
                pl.BlockSpec(memory_space=pl.ANY),          # relation table stays in HBM
                pl.BlockSpec((D, D), lambda i, e, r: (0, 0)),
                pl.BlockSpec((1, D), lambda i, e, r: (0, 0)),
            ],
            out_specs=pl.BlockSpec((B, D), lambda i, e, r: (0, 0)),
            scratch_shapes=[
                pltpu.VMEM((padded_rows, D), jnp.float32),
                pltpu.VMEM((padded_rows, D), jnp.float32),
                pltpu.SemaphoreType.DMA((2, total)),
            ]),
        compiler_params=pltpu.CompilerParams(vmem_limit_bytes=_VMEM_LIMIT),
    )(ent_ids.reshape(-1).astype(jnp.int32),
      rel_ids.reshape(-1).astype(jnp.int32),
      entity_table, relation_table, w_bf16, b)


# ----------------------------------------------------------------------------------
# Scoring: query @ entity_embedding.T, tiled over the (padded) entity axis.
#   * entity table pre-transposed + zero-padded once to bf16 [D, N_pad] (mult. of 512)
#   * [B, D] bf16 query block resident across grid steps, f32 accumulation on the MXU
#   * tile axis "parallel"; tile count chosen even and >=6 for 2-TC balance on v7x
# ----------------------------------------------------------------------------------
def _scoring_kernel(q_ref, et_ref, out_ref):
    out_ref[...] = jnp.dot(q_ref[...], et_ref[...], preferred_element_type=jnp.float32)


def _choose_tile_n(n_pad, d, batch, vmem_limit):
    # Double-buffered RHS (bf16) + double-buffered out (f32) must fit with headroom.
    budget = vmem_limit // 3

    def tile_bytes(t):
        return 2 * (d * t * 2) + 2 * (batch * t * 4)

    cands = [t for t in range(128, min(n_pad, 4096) + 1, 128)
             if n_pad % t == 0 and tile_bytes(t) <= budget]
    if not cands:
        cands = [128 if n_pad % 128 == 0 else n_pad]
    # Prefer an even grid count >=6 (2-TC balance + pipelining), then even >=2, then any.
    for pred in (lambda t: (n_pad // t) % 2 == 0 and (n_pad // t) >= 6,
                 lambda t: (n_pad // t) % 2 == 0 and (n_pad // t) >= 2,
                 lambda t: True):
        sel = [t for t in cands if pred(t)]
        if sel:
            return max(sel)
    return cands[-1]


def scoring_pallas(q, entity_table_t_bf16, n_valid=None):
    B, D = q.shape
    _, N_pad = entity_table_t_bf16.shape
    tile_n = _choose_tile_n(N_pad, D, B, _VMEM_LIMIT)
    q_bf16 = q.astype(jnp.bfloat16)   # documented tradeoff: scores carry ~bf16 precision
    out = pl.pallas_call(
        _scoring_kernel,
        out_shape=jax.ShapeDtypeStruct((B, N_pad), jnp.float32),
        grid_spec=pltpu.PrefetchScalarGridSpec(
            num_scalar_prefetch=0,
            grid=(N_pad // tile_n,),
            in_specs=[
                pl.BlockSpec((B, D), lambda n: (0, 0)),        # resident query block
                pl.BlockSpec((D, tile_n), lambda n: (0, n)),   # streamed bf16 RHS slab
            ],
            out_specs=pl.BlockSpec((B, tile_n), lambda n: (0, n)),
        ),
        compiler_params=pltpu.CompilerParams(
            dimension_semantics=("parallel",),
            vmem_limit_bytes=_VMEM_LIMIT,
        ),
    )(q_bf16, entity_table_t_bf16)
    if n_valid is not None and n_valid != N_pad:
        out = out[:, :n_valid]
    return out


# ----------------------------------------------------------------------------------
# Composable fallback kernels (general query trees the fused matcher doesn't cover).
# ----------------------------------------------------------------------------------
def _gather_kernel(ids_ref, table_hbm, out_ref, sem):
    # Row-DMA gather straight from HBM into the lane-dense [B, D] output block.
    rows = out_ref.shape[0]
    copies = [pltpu.make_async_copy(table_hbm.at[ids_ref[b]], out_ref.at[b], sem.at[b])
              for b in range(rows)]
    for c in copies:
        c.start()
    for c in copies:
        c.wait()


def embedding_gather(table, ids):
    ids = jnp.asarray(ids, jnp.int32).reshape(-1)
    B = ids.shape[0]
    _, D = table.shape
    return pl.pallas_call(
        _gather_kernel,
        out_shape=jax.ShapeDtypeStruct((B, D), table.dtype),
        grid_spec=pltpu.PrefetchScalarGridSpec(
            num_scalar_prefetch=1,
            grid=(1,),
            in_specs=[pl.BlockSpec(memory_space=pl.ANY)],
            out_specs=pl.BlockSpec((B, D), lambda i, ids_ref: (0, 0)),
            scratch_shapes=[pltpu.SemaphoreType.DMA((B,))]),
        compiler_params=pltpu.CompilerParams(vmem_limit_bytes=_VMEM_LIMIT),
    )(ids, table)


def _projection_kernel(rid_ref, x_ref, rel_hbm, w_ref, b_ref, out_ref, rel_buf, sem):
    # Relation gather fused into the projection: row DMAs from HBM, then add + matmul.
    B = x_ref.shape[0]
    copies = [pltpu.make_async_copy(rel_hbm.at[rid_ref[b]], rel_buf.at[b], sem.at[b])
              for b in range(B)]
    for c in copies:
        c.start()
    for c in copies:
        c.wait()
    h = (x_ref[...] + rel_buf[pl.ds(0, B), :]).astype(jnp.bfloat16)
    out_ref[...] = jnp.dot(h, w_ref[...], preferred_element_type=jnp.float32) + b_ref[...]


def projection_pallas(x, rel_ids, relation_table, w_bf16, b):
    B, D = x.shape
    padded_b = max(8, ((B + 7) // 8) * 8)
    return pl.pallas_call(
        _projection_kernel,
        out_shape=jax.ShapeDtypeStruct((B, D), jnp.float32),
        grid_spec=pltpu.PrefetchScalarGridSpec(
            num_scalar_prefetch=1,
            grid=(1,),
            in_specs=[
                pl.BlockSpec((B, D), lambda i, r: (0, 0)),
                pl.BlockSpec(memory_space=pl.ANY),             # relation table in HBM
                pl.BlockSpec((D, D), lambda i, r: (0, 0)),
                pl.BlockSpec((1, D), lambda i, r: (0, 0)),
            ],
            out_specs=pl.BlockSpec((B, D), lambda i, r: (0, 0)),
            scratch_shapes=[pltpu.VMEM((padded_b, D), jnp.float32),
                            pltpu.SemaphoreType.DMA((B,))]),
        compiler_params=pltpu.CompilerParams(vmem_limit_bytes=_VMEM_LIMIT),
    )(jnp.asarray(rel_ids, jnp.int32).reshape(-1),
      jnp.asarray(x, jnp.float32), relation_table, w_bf16, b)


def _reduce_kernel(x_ref, out_ref, *, signs, reduce_op):
    # Negation folded in as per-input compile-time signs (no separate negation kernel).
    def signed(k):
        v = x_ref[k]
        return -v if signs[k] < 0 else v

    acc = signed(0)
    for k in range(1, x_ref.shape[0]):
        if reduce_op == "mean":
            acc = acc + signed(k)
        else:
            acc = jnp.maximum(acc, signed(k))
    if reduce_op == "mean" and x_ref.shape[0] > 1:
        acc = acc * (1.0 / x_ref.shape[0])
    out_ref[...] = acc


def reduce_pallas(stacked, signs, reduce_op):
    K, B, D = stacked.shape
    kernel = functools.partial(_reduce_kernel,
                               signs=tuple(float(s) for s in signs),
                               reduce_op=reduce_op)
    return pl.pallas_call(
        kernel,
        out_shape=jax.ShapeDtypeStruct((B, D), jnp.float32),
        grid_spec=pltpu.PrefetchScalarGridSpec(
            num_scalar_prefetch=0,
            grid=(1,),
            in_specs=[pl.BlockSpec((K, B, D), lambda i: (0, 0, 0))],
            out_specs=pl.BlockSpec((B, D), lambda i: (0, 0))),
        compiler_params=pltpu.CompilerParams(vmem_limit_bytes=_VMEM_LIMIT),
    )(stacked.astype(jnp.float32))


def _negation_kernel(x_ref, out_ref):
    out_ref[...] = -x_ref[...]


def negation_pallas(x):
    B, D = x.shape
    return pl.pallas_call(
        _negation_kernel,
        out_shape=jax.ShapeDtypeStruct((B, D), jnp.float32),
        grid_spec=pltpu.PrefetchScalarGridSpec(
            num_scalar_prefetch=0,
            grid=(1,),
            in_specs=[pl.BlockSpec((B, D), lambda i: (0, 0))],
            out_specs=pl.BlockSpec((B, D), lambda i: (0, 0))),
        compiler_params=pltpu.CompilerParams(vmem_limit_bytes=_VMEM_LIMIT),
    )(jnp.asarray(x, jnp.float32))


# ----------------------------------------------------------------------------------
# IterativeModel: recursive forward over the structured query (Python control flow).
# Trees of the form i/u over (optionally negated) 1-hop projections of entity sets are
# executed by the single fused kernel; everything else composes the fallback kernels.
# ----------------------------------------------------------------------------------
class IterativeModelPallas:
    def __init__(self, num_entities, num_relations, embedding_size, key):
        self.num_entities = num_entities
        self.num_relations = num_relations
        self.embedding_size = embedding_size
        k1, k2, k3, k4 = jax.random.split(key, 4)
        s = 1.0 / jnp.sqrt(jnp.float32(embedding_size))
        self.entity_embedding = (
            jax.random.normal(k1, (num_entities, embedding_size), jnp.float32) * s)
        self.relation_embedding = (
            jax.random.normal(k2, (num_relations, embedding_size), jnp.float32) * s)
        self.proj_w = (
            jax.random.normal(k3, (embedding_size, embedding_size), jnp.float32) * s)
        self.proj_b = jax.random.normal(k4, (1, embedding_size), jnp.float32) * s
        # bf16 copy of the projection weight used on the MXU (f32 master kept).
        self.proj_w_bf16 = self.proj_w.astype(jnp.bfloat16)
        # Pre-transposed, zero-padded bf16 [D, N_pad] table for scoring (built once).
        n_pad = ((num_entities + 511) // 512) * 512
        et = self.entity_embedding.T.astype(jnp.bfloat16)
        if n_pad != num_entities:
            et = jnp.pad(et, ((0, 0), (0, n_pad - num_entities)))
        self.entity_embedding_t = et
        self._n_pad = n_pad

    # --- concrete ops (abstract in the PyTorch base class) ---
    def projection(self, relation_ids, sub_query_encoding):
        return projection_pallas(sub_query_encoding, relation_ids,
                                 self.relation_embedding, self.proj_w_bf16,
                                 self.proj_b)

    def higher_projection(self, relation_ids, sub_query_encoding):
        return self.projection(relation_ids, sub_query_encoding)

    def intersection(self, sub_query_encoding_list):
        stacked = jnp.stack(sub_query_encoding_list, axis=0)
        return reduce_pallas(stacked, (1.0,) * stacked.shape[0], "mean")

    def union(self, sub_query_encoding_list):
        stacked = jnp.stack(sub_query_encoding_list, axis=0)
        return reduce_pallas(stacked, (1.0,) * stacked.shape[0], "max")

    def negation(self, sub_query_encoding):
        return negation_pallas(sub_query_encoding)

    def scoring(self, query_encoding):
        # TODO(synk): batch multiple query encodings into one scoring call (>=128 rows)
        # to raise arithmetic intensity of this HBM-bound kernel.
        return scoring_pallas(query_encoding, self.entity_embedding_t,
                              self.num_entities)

    # --- fused fast path ---
    def _match_simple_projection(self, q):
        """Return (sign, rel_ids, ent_ids) if q is ('p', r, ('e', e)) or 'n' of it."""
        sign = 1.0
        if q[0] == 'n':
            sign = -1.0
            q = q[1]
        if (q[0] == 'p' and isinstance(q[2], (tuple, list)) and q[2][0] == 'e'):
            return sign, q[1], q[2][1]
        return None

    def _try_fused(self, q):
        op = q[0]
        if op in ('i', 'u'):
            branches = []
            for sub in q[1:]:
                m = self._match_simple_projection(sub)
                if m is None:
                    return None
                branches.append(m)
            reduce_op = 'mean' if op == 'i' else 'max'
        else:
            m = self._match_simple_projection(q)
            if m is None:
                return None
            branches = [m]
            reduce_op = 'single'
        # Shape validation: all branch id vectors must be 1-D and of identical length.
        rel_list, ent_list = [], []
        batch_len = None
        for _, rel, ent in branches:
            r = jnp.asarray(rel, jnp.int32)
            e = jnp.asarray(ent, jnp.int32)
            if r.ndim != 1 or e.ndim != 1 or r.shape[0] != e.shape[0]:
                return None
            if batch_len is None:
                batch_len = r.shape[0]
            elif r.shape[0] != batch_len:
                return None
            rel_list.append(r)
            ent_list.append(e)
        signs = tuple(m[0] for m in branches)
        rel_ids = jnp.stack(rel_list, axis=0)
        ent_ids = jnp.stack(ent_list, axis=0)
        return fused_encode(self.entity_embedding, self.relation_embedding,
                            self.proj_w_bf16, self.proj_b, ent_ids, rel_ids,
                            signs, reduce_op)

    # --- general recursive path (matches the PyTorch module structure) ---
    def _forward_composed(self, q, fuse):
        op = q[0]
        if op == 'p':
            sub = self.forward(q[2], fuse=fuse)
            if q[2][0] == 'e':
                return self.projection(q[1], sub)
            return self.higher_projection(q[1], sub)
        if op in ('i', 'u'):
            subs, signs = [], []
            for sq in q[1:]:
                if isinstance(sq, (tuple, list)) and sq[0] == 'n':
                    signs.append(-1.0)
                    subs.append(self.forward(sq[1], fuse=fuse))
                else:
                    signs.append(1.0)
                    subs.append(self.forward(sq, fuse=fuse))
            return reduce_pallas(jnp.stack(subs, axis=0), tuple(signs),
                                 'mean' if op == 'i' else 'max')
        if op == 'n':
            return self.negation(self.forward(q[1], fuse=fuse))
        if op == 'e':
            return embedding_gather(self.entity_embedding,
                                    jnp.asarray(q[1], jnp.int32))
        # TODO(synk): 'ap', 'rap', 'rp', 'np', 'nv' need the numeric-attribute
        # encoders (number_encoder_list / number_encoding) absent from the abstract
        # PyTorch module.
        raise NotImplementedError(
            f"branch '{op}' requires numeric encoders not present in this module")

    def forward(self, batched_structured_query, label=None, fuse=True):
        assert batched_structured_query[0] in [
            'p', 'e', 'i', 'u', 'n', 'ap', 'rp', 'rap', 'np', 'nv']
        result = None
        if fuse:
            result = self._try_fused(batched_structured_query)
        if result is None:
            result = self._forward_composed(batched_structured_query, fuse)
        if label is None:
            return result
        # TODO(synk): loss_fnt is abstract in the PyTorch module; returning encoding.
        return result


# ----------------------------------------------------------------------------------
# main
# ----------------------------------------------------------------------------------
if __name__ == "__main__":
    num_entities = 3072
    num_relations = 16
    embedding_size = 128
    batch = 8

    key = jax.random.PRNGKey(0)
    kmodel, ke1, ke2, kr1, kr2 = jax.random.split(key, 5)

    model = IterativeModelPallas(num_entities, num_relations, embedding_size, kmodel)

    ent_ids_a = jax.random.randint(ke1, (batch,), 0, num_entities, dtype=jnp.int32)
    ent_ids_b = jax.random.randint(ke2, (batch,), 0, num_entities, dtype=jnp.int32)
    rel_ids_a = jax.random.randint(kr1, (batch,), 0, num_relations, dtype=jnp.int32)
    rel_ids_b = jax.random.randint(kr2, (batch,), 0, num_relations, dtype=jnp.int32)

    # Query: ('i', ('p', r_a, ('e', e_a)), ('n', ('p', r_b, ('e', e_b))))  ("2in")
    @jax.jit
    def run_query(e_a, e_b, r_a, r_b):
        query = ('i', ('p', r_a, ('e', e_a)), ('n', ('p', r_b, ('e', e_b))))
        enc = model.forward(query)          # fused single-kernel query encoder
        return enc, model.scoring(enc)      # N-tiled bf16-streamed scoring

    encoding, scores = run_query(ent_ids_a, ent_ids_b, rel_ids_a, rel_ids_b)
    jax.block_until_ready((encoding, scores))

    assert encoding.shape == (batch, embedding_size)
    assert scores.shape == (batch, num_entities)
    assert bool(jnp.all(jnp.isfinite(encoding)))
    assert bool(jnp.all(jnp.isfinite(scores)))

    # --- semantics check 1: fused path == composed per-op Pallas path ---
    query = ('i', ('p', rel_ids_a, ('e', ent_ids_a)),
             ('n', ('p', rel_ids_b, ('e', ent_ids_b))))
    enc_composed = model.forward(query, fuse=False)
    assert bool(jnp.allclose(encoding, enc_composed, atol=1e-4, rtol=1e-4))

    q_union = ('u', ('p', rel_ids_a, ('e', ent_ids_a)),
               ('p', rel_ids_b, ('e', ent_ids_b)))
    assert bool(jnp.allclose(model.forward(q_union),
                             model.forward(q_union, fuse=False),
                             atol=1e-4, rtol=1e-4))

    # --- semantics check 2: against a pure-JAX f32 reference ---
    # (kernels use bf16 MXU inputs with f32 accumulation -> loose tolerances)
    E, R = model.entity_embedding, model.relation_embedding
    W, bias = model.proj_w, model.proj_b
    mm = functools.partial(jnp.matmul, precision=jax.lax.Precision.HIGHEST)
    proj_a = mm(E[ent_ids_a] + R[rel_ids_a], W) + bias
    proj_b = mm(E[ent_ids_b] + R[rel_ids_b], W) + bias
    enc_ref = 0.5 * (proj_a - proj_b)
    scores_ref = mm(enc_ref, E.T)
    assert bool(jnp.allclose(encoding, enc_ref, atol=1e-2, rtol=1e-2))
    assert bool(jnp.allclose(scores, scores_ref, atol=3e-2, rtol=3e-2))

    print("KERNEL_OK")
</pallas_src>

<mosaic_0001>
module attributes {stable_mosaic.version = 11 : i64} {
  func.func @_fused_encode_kernel(%arg0: i32, %arg1: memref<16xi32, #tpu.memory_space<smem>>, %arg2: memref<16xi32, #tpu.memory_space<smem>>, %arg3: memref<3072x128xf32, #tpu.memory_space<any>>, %arg4: memref<16x128xf32, #tpu.memory_space<any>>, %arg5: memref<128x128xbf16, #tpu.memory_space<vmem>>, %arg6: memref<1x128xf32, #tpu.memory_space<vmem>>, %arg7: memref<8x128xf32, #tpu.memory_space<vmem>>, %arg8: memref<16x128xf32, #tpu.memory_space<vmem>>, %arg9: memref<16x128xf32, #tpu.memory_space<vmem>>, %arg10: memref<2x16x!tpu.dma_semaphore, #tpu.memory_space<semaphore_mem>>) attributes {dimension_semantics = [#tpu.dimension_semantics<arbitrary>], iteration_bounds = array<i64: 1>, scalar_prefetch = 2 : i64, scratch_operands = 3 : i64, tpu.core_type = #tpu.core_type<tc>, window_params = [{}, {}, {pipeline_mode = #tpu.pipeline_mode<synchronous>, transform_indices = @transform_2, window_bounds = array<i64: 128, 128>}, {pipeline_mode = #tpu.pipeline_mode<synchronous>, transform_indices = @transform_3, window_bounds = array<i64: 1, 128>}, {pipeline_mode = #tpu.pipeline_mode<synchronous>, transform_indices = @transform_4, window_bounds = array<i64: 8, 128>}]} {
    %c0 = arith.constant 0 : index
    %0 = memref.load %arg1[%c0] : memref<16xi32, #tpu.memory_space<smem>>
    %c0_0 = arith.constant 0 : index
    %1 = memref.load %arg2[%c0_0] : memref<16xi32, #tpu.memory_space<smem>>
    %c1 = arith.constant 1 : index
    %2 = memref.load %arg1[%c1] : memref<16xi32, #tpu.memory_space<smem>>
    %c1_1 = arith.constant 1 : index
    %3 = memref.load %arg2[%c1_1] : memref<16xi32, #tpu.memory_space<smem>>
    %c2 = arith.constant 2 : index
    %4 = memref.load %arg1[%c2] : memref<16xi32, #tpu.memory_space<smem>>
    %c2_2 = arith.constant 2 : index
    %5 = memref.load %arg2[%c2_2] : memref<16xi32, #tpu.memory_space<smem>>
    %c3 = arith.constant 3 : index
    %6 = memref.load %arg1[%c3] : memref<16xi32, #tpu.memory_space<smem>>
    %c3_3 = arith.constant 3 : index
    %7 = memref.load %arg2[%c3_3] : memref<16xi32, #tpu.memory_space<smem>>
    %c4 = arith.constant 4 : index
    %8 = memref.load %arg1[%c4] : memref<16xi32, #tpu.memory_space<smem>>
    %c4_4 = arith.constant 4 : index
    %9 = memref.load %arg2[%c4_4] : memref<16xi32, #tpu.memory_space<smem>>
    %c5 = arith.constant 5 : index
    %10 = memref.load %arg1[%c5] : memref<16xi32, #tpu.memory_space<smem>>
    %c5_5 = arith.constant 5 : index
    %11 = memref.load %arg2[%c5_5] : memref<16xi32, #tpu.memory_space<smem>>
    %c6 = arith.constant 6 : index
    %12 = memref.load %arg1[%c6] : memref<16xi32, #tpu.memory_space<smem>>
    %c6_6 = arith.constant 6 : index
    %13 = memref.load %arg2[%c6_6] : memref<16xi32, #tpu.memory_space<smem>>
    %c7 = arith.constant 7 : index
    %14 = memref.load %arg1[%c7] : memref<16xi32, #tpu.memory_space<smem>>
    %c7_7 = arith.constant 7 : index
    %15 = memref.load %arg2[%c7_7] : memref<16xi32, #tpu.memory_space<smem>>
    %c8 = arith.constant 8 : index
    %16 = memref.load %arg1[%c8] : memref<16xi32, #tpu.memory_space<smem>>
    %c8_8 = arith.constant 8 : index
    %17 = memref.load %arg2[%c8_8] : memref<16xi32, #tpu.memory_space<smem>>
    %c9 = arith.constant 9 : index
    %18 = memref.load %arg1[%c9] : memref<16xi32, #tpu.memory_space<smem>>
    %c9_9 = arith.constant 9 : index
    %19 = memref.load %arg2[%c9_9] : memref<16xi32, #tpu.memory_space<smem>>
    %c10 = arith.constant 10 : index
    %20 = memref.load %arg1[%c10] : memref<16xi32, #tpu.memory_space<smem>>
    %c10_10 = arith.constant 10 : index
    %21 = memref.load %arg2[%c10_10] : memref<16xi32, #tpu.memory_space<smem>>
    %c11 = arith.constant 11 : index
    %22 = memref.load %arg1[%c11] : memref<16xi32, #tpu.memory_space<smem>>
    %c11_11 = arith.constant 11 : index
    %23 = memref.load %arg2[%c11_11] : memref<16xi32, #tpu.memory_space<smem>>
    %c12 = arith.constant 12 : index
    %24 = memref.load %arg1[%c12] : memref<16xi32, #tpu.memory_space<smem>>
    %c12_12 = arith.constant 12 : index
    %25 = memref.load %arg2[%c12_12] : memref<16xi32, #tpu.memory_space<smem>>
    %c13 = arith.constant 13 : index
    %26 = memref.load %arg1[%c13] : memref<16xi32, #tpu.memory_space<smem>>
    %c13_13 = arith.constant 13 : index
    %27 = memref.load %arg2[%c13_13] : memref<16xi32, #tpu.memory_space<smem>>
    %c14 = arith.constant 14 : index
    %28 = memref.load %arg1[%c14] : memref<16xi32, #tpu.memory_space<smem>>
    %c14_14 = arith.constant 14 : index
    %29 = memref.load %arg2[%c14_14] : memref<16xi32, #tpu.memory_space<smem>>
    %c15 = arith.constant 15 : index
    %30 = memref.load %arg1[%c15] : memref<16xi32, #tpu.memory_space<smem>>
    %c15_15 = arith.constant 15 : index
    %31 = memref.load %arg2[%c15_15] : memref<16xi32, #tpu.memory_space<smem>>
    %c0_i32 = arith.constant 0 : i32
    %c0_i32_16 = arith.constant 0 : i32
    %c0_i32_17 = arith.constant 0 : i32
    %c0_i32_18 = arith.constant 0 : i32
    %32 = tpu.memref_slice %arg3[%0, %c0_i32_18] : memref<3072x128xf32, #tpu.memory_space<any>> -> memref<1x128xf32, #tpu.memory_space<any>>
    %33 = tpu.memref_squeeze %32 : memref<1x128xf32, #tpu.memory_space<any>> -> memref<128xf32, #tpu.memory_space<any>>
    %c0_i32_19 = arith.constant 0 : i32
    %34 = tpu.memref_slice %arg8[%c0_i32, %c0_i32_19] : memref<16x128xf32, #tpu.memory_space<vmem>> -> memref<1x128xf32, #tpu.memory_space<vmem>>
    %35 = tpu.memref_squeeze %34 : memref<1x128xf32, #tpu.memory_space<vmem>> -> memref<128xf32, #tpu.memory_space<vmem>>
    %36 = tpu.memref_slice %arg10[%c0_i32_16, %c0_i32_17] : memref<2x16x!tpu.dma_semaphore, #tpu.memory_space<semaphore_mem>> -> memref<1x1x!tpu.dma_semaphore, #tpu.memory_space<semaphore_mem>>
    %37 = tpu.memref_squeeze %36 : memref<1x1x!tpu.dma_semaphore, #tpu.memory_space<semaphore_mem>> -> memref<!tpu.dma_semaphore, #tpu.memory_space<semaphore_mem>>
    tpu.enqueue_dma source(%33 : memref<128xf32, #tpu.memory_space<any>>) target(%35 : memref<128xf32, #tpu.memory_space<vmem>>) target_semaphore(%37 : memref<!tpu.dma_semaphore, #tpu.memory_space<semaphore_mem>>)
    %c0_i32_20 = arith.constant 0 : i32
    %c1_i32 = arith.constant 1 : i32
    %c0_i32_21 = arith.constant 0 : i32
    %c0_i32_22 = arith.constant 0 : i32
    %38 = tpu.memref_slice %arg4[%1, %c0_i32_22] : memref<16x128xf32, #tpu.memory_space<any>> -> memref<1x128xf32, #tpu.memory_space<any>>
    %39 = tpu.memref_squeeze %38 : memref<1x128xf32, #tpu.memory_space<any>> -> memref<128xf32, #tpu.memory_space<any>>
    %c0_i32_23 = arith.constant 0 : i32
    %40 = tpu.memref_slice %arg9[%c0_i32_20, %c0_i32_23] : memref<16x128xf32, #tpu.memory_space<vmem>> -> memref<1x128xf32, #tpu.memory_space<vmem>>
    %41 = tpu.memref_squeeze %40 : memref<1x128xf32, #tpu.memory_space<vmem>> -> memref<128xf32, #tpu.memory_space<vmem>>
    %42 = tpu.memref_slice %arg10[%c1_i32, %c0_i32_21] : memref<2x16x!tpu.dma_semaphore, #tpu.memory_space<semaphore_mem>> -> memref<1x1x!tpu.dma_semaphore, #tpu.memory_space<semaphore_mem>>
    %43 = tpu.memref_squeeze %42 : memref<1x1x!tpu.dma_semaphore, #tpu.memory_space<semaphore_mem>> -> memref<!tpu.dma_semaphore, #tpu.memory_space<semaphore_mem>>
    tpu.enqueue_dma source(%39 : memref<128xf32, #tpu.memory_space<any>>) target(%41 : memref<128xf32, #tpu.memory_space<vmem>>) target_semaphore(%43 : memref<!tpu.dma_semaphore, #tpu.memory_space<semaphore_mem>>)
    %c1_i32_24 = arith.constant 1 : i32
    %c0_i32_25 = arith.constant 0 : i32
    %c1_i32_26 = arith.constant 1 : i32
    %c0_i32_27 = arith.constant 0 : i32
    %44 = tpu.memref_slice %arg3[%2, %c0_i32_27] : memref<3072x128xf32, #tpu.memory_space<any>> -> memref<1x128xf32, #tpu.memory_space<any>>
    %45 = tpu.memref_squeeze %44 : memref<1x128xf32, #tpu.memory_space<any>> -> memref<128xf32, #tpu.memory_space<any>>
    %c0_i32_28 = arith.constant 0 : i32
    %46 = tpu.memref_slice %arg8[%c1_i32_24, %c0_i32_28] : memref<16x128xf32, #tpu.memory_space<vmem>> -> memref<1x128xf32, #tpu.memory_space<vmem>>
    %47 = tpu.memref_squeeze %46 : memref<1x128xf32, #tpu.memory_space<vmem>> -> memref<128xf32, #tpu.memory_space<vmem>>
    %48 = tpu.memref_slice %arg10[%c0_i32_25, %c1_i32_26] : memref<2x16x!tpu.dma_semaphore, #tpu.memory_space<semaphore_mem>> -> memref<1x1x!tpu.dma_semaphore, #tpu.memory_space<semaphore_mem>>
    %49 = tpu.memref_squeeze %48 : memref<1x1x!tpu.dma_semaphore, #tpu.memory_space<semaphore_mem>> -> memref<!tpu.dma_semaphore, #tpu.memory_space<semaphore_mem>>
    tpu.enqueue_dma source(%45 : memref<128xf32, #tpu.memory_space<any>>) target(%47 : memref<128xf32, #tpu.memory_space<vmem>>) target_semaphore(%49 : memref<!tpu.dma_semaphore, #tpu.memory_space<semaphore_mem>>)
    %c1_i32_29 = arith.constant 1 : i32
    %c1_i32_30 = arith.constant 1 : i32
    %c1_i32_31 = arith.constant 1 : i32
    %c0_i32_32 = arith.constant 0 : i32
    %50 = tpu.memref_slice %arg4[%3, %c0_i32_32] : memref<16x128xf32, #tpu.memory_space<any>> -> memref<1x128xf32, #tpu.memory_space<any>>
    %51 = tpu.memref_squeeze %50 : memref<1x128xf32, #tpu.memory_space<any>> -> memref<128xf32, #tpu.memory_space<any>>
    %c0_i32_33 = arith.constant 0 : i32
    %52 = tpu.memref_slice %arg9[%c1_i32_29, %c0_i32_33] : memref<16x128xf32, #tpu.memory_space<vmem>> -> memref<1x128xf32, #tpu.memory_space<vmem>>
    %53 = tpu.memref_squeeze %52 : memref<1x128xf32, #tpu.memory_space<vmem>> -> memref<128xf32, #tpu.memory_space<vmem>>
    %54 = tpu.memref_slice %arg10[%c1_i32_30, %c1_i32_31] : memref<2x16x!tpu.dma_semaphore, #tpu.memory_space<semaphore_mem>> -> memref<1x1x!tpu.dma_semaphore, #tpu.memory_space<semaphore_mem>>
    %55 = tpu.memref_squeeze %54 : memref<1x1x!tpu.dma_semaphore, #tpu.memory_space<semaphore_mem>> -> memref<!tpu.dma_semaphore, #tpu.memory_space<semaphore_mem>>
    tpu.enqueue_dma source(%51 : memref<128xf32, #tpu.memory_space<any>>) target(%53 : memref<128xf32, #tpu.memory_space<vmem>>) target_semaphore(%55 : memref<!tpu.dma_semaphore, #tpu.memory_space<semaphore_mem>>)
    %c2_i32 = arith.constant 2 : i32
    %c0_i32_34 = arith.constant 0 : i32
    %c2_i32_35 = arith.constant 2 : i32
    %c0_i32_36 = arith.constant 0 : i32
    %56 = tpu.memref_slice %arg3[%4, %c0_i32_36] : memref<3072x128xf32, #tpu.memory_space<any>> -> memref<1x128xf32, #tpu.memory_space<any>>
    %57 = tpu.memref_squeeze %56 : memref<1x128xf32, #tpu.memory_space<any>> -> memref<128xf32, #tpu.memory_space<any>>
    %c0_i32_37 = arith.constant 0 : i32
    %58 = tpu.memref_slice %arg8[%c2_i32, %c0_i32_37] : memref<16x128xf32, #tpu.memory_space<vmem>> -> memref<1x128xf32, #tpu.memory_space<vmem>>
    %59 = tpu.memref_squeeze %58 : memref<1x128xf32, #tpu.memory_space<vmem>> -> memref<128xf32, #tpu.memory_space<vmem>>
    %60 = tpu.memref_slice %arg10[%c0_i32_34, %c2_i32_35] : memref<2x16x!tpu.dma_semaphore, #tpu.memory_space<semaphore_mem>> -> memref<1x1x!tpu.dma_semaphore, #tpu.memory_space<semaphore_mem>>
    %61 = tpu.memref_squeeze %60 : memref<1x1x!tpu.dma_semaphore, #tpu.memory_space<semaphore_mem>> -> memref<!tpu.dma_semaphore, #tpu.memory_space<semaphore_mem>>
    tpu.enqueue_dma source(%57 : memref<128xf32, #tpu.memory_space<any>>) target(%59 : memref<128xf32, #tpu.memory_space<vmem>>) target_semaphore(%61 : memref<!tpu.dma_semaphore, #tpu.memory_space<semaphore_mem>>)
    %c2_i32_38 = arith.constant 2 : i32
    %c1_i32_39 = arith.constant 1 : i32
    %c2_i32_40 = arith.constant 2 : i32
    %c0_i32_41 = arith.constant 0 : i32
    %62 = tpu.memref_slice %arg4[%5, %c0_i32_41] : memref<16x128xf32, #tpu.memory_space<any>> -> memref<1x128xf32, #tpu.memory_space<any>>
    %63 = tpu.memref_squeeze %62 : memref<1x128xf32, #tpu.memory_space<any>> -> memref<128xf32, #tpu.memory_space<any>>
    %c0_i32_42 = arith.constant 0 : i32
    %64 = tpu.memref_slice %arg9[%c2_i32_38, %c0_i32_42] : memref<16x128xf32, #tpu.memory_space<vmem>> -> memref<1x128xf32, #tpu.memory_space<vmem>>
    %65 = tpu.memref_squeeze %64 : memref<1x128xf32, #tpu.memory_space<vmem>> -> memref<128xf32, #tpu.memory_space<vmem>>
    %66 = tpu.memref_slice %arg10[%c1_i32_39, %c2_i32_40] : memref<2x16x!tpu.dma_semaphore, #tpu.memory_space<semaphore_mem>> -> memref<1x1x!tpu.dma_semaphore, #tpu.memory_space<semaphore_mem>>
    %67 = tpu.memref_squeeze %66 : memref<1x1x!tpu.dma_semaphore, #tpu.memory_space<semaphore_mem>> -> memref<!tpu.dma_semaphore, #tpu.memory_space<semaphore_mem>>
    tpu.enqueue_dma source(%63 : memref<128xf32, #tpu.memory_space<any>>) target(%65 : memref<128xf32, #tpu.memory_space<vmem>>) target_semaphore(%67 : memref<!tpu.dma_semaphore, #tpu.memory_space<semaphore_mem>>)
    %c3_i32 = arith.constant 3 : i32
    %c0_i32_43 = arith.constant 0 : i32
    %c3_i32_44 = arith.constant 3 : i32
    %c0_i32_45 = arith.constant 0 : i32
    %68 = tpu.memref_slice %arg3[%6, %c0_i32_45] : memref<3072x128xf32, #tpu.memory_space<any>> -> memref<1x128xf32, #tpu.memory_space<any>>
    %69 = tpu.memref_squeeze %68 : memref<1x128xf32, #tpu.memory_space<any>> -> memref<128xf32, #tpu.memory_space<any>>
    %c0_i32_46 = arith.constant 0 : i32
    %70 = tpu.memref_slice %arg8[%c3_i32, %c0_i32_46] : memref<16x128xf32, #tpu.memory_space<vmem>> -> memref<1x128xf32, #tpu.memory_space<vmem>>
    %71 = tpu.memref_squeeze %70 : memref<1x128xf32, #tpu.memory_space<vmem>> -> memref<128xf32, #tpu.memory_space<vmem>>
    %72 = tpu.memref_slice %arg10[%c0_i32_43, %c3_i32_44] : memref<2x16x!tpu.dma_semaphore, #tpu.memory_space<semaphore_mem>> -> memref<1x1x!tpu.dma_semaphore, #tpu.memory_space<semaphore_mem>>
    %73 = tpu.memref_squeeze %72 : memref<1x1x!tpu.dma_semaphore, #tpu.memory_space<semaphore_mem>> -> memref<!tpu.dma_semaphore, #tpu.memory_space<semaphore_mem>>
    tpu.enqueue_dma source(%69 : memref<128xf32, #tpu.memory_space<any>>) target(%71 : memref<128xf32, #tpu.memory_space<vmem>>) target_semaphore(%73 : memref<!tpu.dma_semaphore, #tpu.memory_space<semaphore_mem>>)
    %c3_i32_47 = arith.constant 3 : i32
    %c1_i32_48 = arith.constant 1 : i32
    %c3_i32_49 = arith.constant 3 : i32
    %c0_i32_50 = arith.constant 0 : i32
    %74 = tpu.memref_slice %arg4[%7, %c0_i32_50] : memref<16x128xf32, #tpu.memory_space<any>> -> memref<1x128xf32, #tpu.memory_space<any>>
    %75 = tpu.memref_squeeze %74 : memref<1x128xf32, #tpu.memory_space<any>> -> memref<128xf32, #tpu.memory_space<any>>
    %c0_i32_51 = arith.constant 0 : i32
    %76 = tpu.memref_slice %arg9[%c3_i32_47, %c0_i32_51] : memref<16x128xf32, #tpu.memory_space<vmem>> -> memref<1x128xf32, #tpu.memory_space<vmem>>
    %77 = tpu.memref_squeeze %76 : memref<1x128xf32, #tpu.memory_space<vmem>> -> memref<128xf32, #tpu.memory_space<vmem>>
    %78 = tpu.memref_slice %arg10[%c1_i32_48, %c3_i32_49] : memref<2x16x!tpu.dma_semaphore, #tpu.memory_space<semaphore_mem>> -> memref<1x1x!tpu.dma_semaphore, #tpu.memory_space<semaphore_mem>>
    %79 = tpu.memref_squeeze %78 : memref<1x1x!tpu.dma_semaphore, #tpu.memory_space<semaphore_mem>> -> memref<!tpu.dma_semaphore, #tpu.memory_space<semaphore_mem>>
    tpu.enqueue_dma source(%75 : memref<128xf32, #tpu.memory_space<any>>) target(%77 : memref<128xf32, #tpu.memory_space<vmem>>) target_semaphore(%79 : memref<!tpu.dma_semaphore, #tpu.memory_space<semaphore_mem>>)
    %c4_i32 = arith.constant 4 : i32
    %c0_i32_52 = arith.constant 0 : i32
    %c4_i32_53 = arith.constant 4 : i32
    %c0_i32_54 = arith.constant 0 : i32
    %80 = tpu.memref_slice %arg3[%8, %c0_i32_54] : memref<3072x128xf32, #tpu.memory_space<any>> -> memref<1x128xf32, #tpu.memory_space<any>>
    %81 = tpu.memref_squeeze %80 : memref<1x128xf32, #tpu.memory_space<any>> -> memref<128xf32, #tpu.memory_space<any>>
    %c0_i32_55 = arith.constant 0 : i32
    %82 = tpu.memref_slice %arg8[%c4_i32, %c0_i32_55] : memref<16x128xf32, #tpu.memory_space<vmem>> -> memref<1x128xf32, #tpu.memory_space<vmem>>
    %83 = tpu.memref_squeeze %82 : memref<1x128xf32, #tpu.memory_space<vmem>> -> memref<128xf32, #tpu.memory_space<vmem>>
    %84 = tpu.memref_slice %arg10[%c0_i32_52, %c4_i32_53] : memref<2x16x!tpu.dma_semaphore, #tpu.memory_space<semaphore_mem>> -> memref<1x1x!tpu.dma_semaphore, #tpu.memory_space<semaphore_mem>>
    %85 = tpu.memref_squeeze %84 : memref<1x1x!tpu.dma_semaphore, #tpu.memory_space<semaphore_mem>> -> memref<!tpu.dma_semaphore, #tpu.memory_space<semaphore_mem>>
    tpu.enqueue_dma source(%81 : memref<128xf32, #tpu.memory_space<any>>) target(%83 : memref<128xf32, #tpu.memory_space<vmem>>) target_semaphore(%85 : memref<!tpu.dma_semaphore, #tpu.memory_space<semaphore_mem>>)
    %c4_i32_56 = arith.constant 4 : i32
    %c1_i32_57 = arith.constant 1 : i32
    %c4_i32_58 = arith.constant 4 : i32
    %c0_i32_59 = arith.constant 0 : i32
    %86 = tpu.memref_slice %arg4[%9, %c0_i32_59] : memref<16x128xf32, #tpu.memory_space<any>> -> memref<1x128xf32, #tpu.memory_space<any>>
    %87 = tpu.memref_squeeze %86 : memref<1x128xf32, #tpu.memory_space<any>> -> memref<128xf32, #tpu.memory_space<any>>
    %c0_i32_60 = arith.constant 0 : i32
    %88 = tpu.memref_slice %arg9[%c4_i32_56, %c0_i32_60] : memref<16x128xf32, #tpu.memory_space<vmem>> -> memref<1x128xf32, #tpu.memory_space<vmem>>
    %89 = tpu.memref_squeeze %88 : memref<1x128xf32, #tpu.memory_space<vmem>> -> memref<128xf32, #tpu.memory_space<vmem>>
    %90 = tpu.memref_slice %arg10[%c1_i32_57, %c4_i32_58] : memref<2x16x!tpu.dma_semaphore, #tpu.memory_space<semaphore_mem>> -> memref<1x1x!tpu.dma_semaphore, #tpu.memory_space<semaphore_mem>>
    %91 = tpu.memref_squeeze %90 : memref<1x1x!tpu.dma_semaphore, #tpu.memory_space<semaphore_mem>> -> memref<!tpu.dma_semaphore, #tpu.memory_space<semaphore_mem>>
    tpu.enqueue_dma source(%87 : memref<128xf32, #tpu.memory_space<any>>) target(%89 : memref<128xf32, #tpu.memory_space<vmem>>) target_semaphore(%91 : memref<!tpu.dma_semaphore, #tpu.memory_space<semaphore_mem>>)
    %c5_i32 = arith.constant 5 : i32
    %c0_i32_61 = arith.constant 0 : i32
    %c5_i32_62 = arith.constant 5 : i32
    %c0_i32_63 = arith.constant 0 : i32
    %92 = tpu.memref_slice %arg3[%10, %c0_i32_63] : memref<3072x128xf32, #tpu.memory_space<any>> -> memref<1x128xf32, #tpu.memory_space<any>>
    %93 = tpu.memref_squeeze %92 : memref<1x128xf32, #tpu.memory_space<any>> -> memref<128xf32, #tpu.memory_space<any>>
    %c0_i32_64 = arith.constant 0 : i32
    %94 = tpu.memref_slice %arg8[%c5_i32, %c0_i32_64] : memref<16x128xf32, #tpu.memory_space<vmem>> -> memref<1x128xf32, #tpu.memory_space<vmem>>
    %95 = tpu.memref_squeeze %94 : memref<1x128xf32, #tpu.memory_space<vmem>> -> memref<128xf32, #tpu.memory_space<vmem>>
    %96 = tpu.memref_slice %arg10[%c0_i32_61, %c5_i32_62] : memref<2x16x!tpu.dma_semaphore, #tpu.memory_space<semaphore_mem>> -> memref<1x1x!tpu.dma_semaphore, #tpu.memory_space<semaphore_mem>>
    %97 = tpu.memref_squeeze %96 : memref<1x1x!tpu.dma_semaphore, #tpu.memory_space<semaphore_mem>> -> memref<!tpu.dma_semaphore, #tpu.memory_space<semaphore_mem>>
    tpu.enqueue_dma source(%93 : memref<128xf32, #tpu.memory_space<any>>) target(%95 : memref<128xf32, #tpu.memory_space<vmem>>) target_semaphore(%97 : memref<!tpu.dma_semaphore, #tpu.memory_space<semaphore_mem>>)
    %c5_i32_65 = arith.constant 5 : i32
    %c1_i32_66 = arith.constant 1 : i32
    %c5_i32_67 = arith.constant 5 : i32
    %c0_i32_68 = arith.constant 0 : i32
    %98 = tpu.memref_slice %arg4[%11, %c0_i32_68] : memref<16x128xf32, #tpu.memory_space<any>> -> memref<1x128xf32, #tpu.memory_space<any>>
    %99 = tpu.memref_squeeze %98 : memref<1x128xf32, #tpu.memory_space<any>> -> memref<128xf32, #tpu.memory_space<any>>
    %c0_i32_69 = arith.constant 0 : i32
    %100 = tpu.memref_slice %arg9[%c5_i32_65, %c0_i32_69] : memref<16x128xf32, #tpu.memory_space<vmem>> -> memref<1x128xf32, #tpu.memory_space<vmem>>
    %101 = tpu.memref_squeeze %100 : memref<1x128xf32, #tpu.memory_space<vmem>> -> memref<128xf32, #tpu.memory_space<vmem>>
    %102 = tpu.memref_slice %arg10[%c1_i32_66, %c5_i32_67] : memref<2x16x!tpu.dma_semaphore, #tpu.memory_space<semaphore_mem>> -> memref<1x1x!tpu.dma_semaphore, #tpu.memory_space<semaphore_mem>>
    %103 = tpu.memref_squeeze %102 : memref<1x1x!tpu.dma_semaphore, #tpu.memory_space<semaphore_mem>> -> memref<!tpu.dma_semaphore, #tpu.memory_space<semaphore_mem>>
    tpu.enqueue_dma source(%99 : memref<128xf32, #tpu.memory_space<any>>) target(%101 : memref<128xf32, #tpu.memory_space<vmem>>) target_semaphore(%103 : memref<!tpu.dma_semaphore, #tpu.memory_space<semaphore_mem>>)
    %c6_i32 = arith.constant 6 : i32
    %c0_i32_70 = arith.constant 0 : i32
    %c6_i32_71 = arith.constant 6 : i32
    %c0_i32_72 = arith.constant 0 : i32
    %104 = tpu.memref_slice %arg3[%12, %c0_i32_72] : memref<3072x128xf32, #tpu.memory_space<any>> -> memref<1x128xf32, #tpu.memory_space<any>>
    %105 = tpu.memref_squeeze %104 : memref<1x128xf32, #tpu.memory_space<any>> -> memref<128xf32, #tpu.memory_space<any>>
    %c0_i32_73 = arith.constant 0 : i32
    %106 = tpu.memref_slice %arg8[%c6_i32, %c0_i32_73] : memref<16x128xf32, #tpu.memory_space<vmem>> -> memref<1x128xf32, #tpu.memory_space<vmem>>
    %107 = tpu.memref_squeeze %106 : memref<1x128xf32, #tpu.memory_space<vmem>> -> memref<128xf32, #tpu.memory_space<vmem>>
    %108 = tpu.memref_slice %arg10[%c0_i32_70, %c6_i32_71] : memref<2x16x!tpu.dma_semaphore, #tpu.memory_space<semaphore_mem>> -> memref<1x1x!tpu.dma_semaphore, #tpu.memory_space<semaphore_mem>>
    %109 = tpu.memref_squeeze %108 : memref<1x1x!tpu.dma_semaphore, #tpu.memory_space<semaphore_mem>> -> memref<!tpu.dma_semaphore, #tpu.memory_space<semaphore_mem>>
    tpu.enqueue_dma source(%105 : memref<128xf32, #tpu.memory_space<any>>) target(%107 : memref<128xf32, #tpu.memory_space<vmem>>) target_semaphore(%109 : memref<!tpu.dma_semaphore, #tpu.memory_space<semaphore_mem>>)
    %c6_i32_74 = arith.constant 6 : i32
    %c1_i32_75 = arith.constant 1 : i32
    %c6_i32_76 = arith.constant 6 : i32
    %c0_i32_77 = arith.constant 0 : i32
    %110 = tpu.memref_slice %arg4[%13, %c0_i32_77] : memref<16x128xf32, #tpu.memory_space<any>> -> memref<1x128xf32, #tpu.memory_space<any>>
    %111 = tpu.memref_squeeze %110 : memref<1x128xf32, #tpu.memory_space<any>> -> memref<128xf32, #tpu.memory_space<any>>
    %c0_i32_78 = arith.constant 0 : i32
    %112 = tpu.memref_slice %arg9[%c6_i32_74, %c0_i32_78] : memref<16x128xf32, #tpu.memory_space<vmem>> -> memref<1x128xf32, #tpu.memory_space<vmem>>
    %113 = tpu.memref_squeeze %112 : memref<1x128xf32, #tpu.memory_space<vmem>> -> memref<128xf32, #tpu.memory_space<vmem>>
    %114 = tpu.memref_slice %arg10[%c1_i32_75, %c6_i32_76] : memref<2x16x!tpu.dma_semaphore, #tpu.memory_space<semaphore_mem>> -> memref<1x1x!tpu.dma_semaphore, #tpu.memory_space<semaphore_mem>>
    %115 = tpu.memref_squeeze %114 : memref<1x1x!tpu.dma_semaphore, #tpu.memory_space<semaphore_mem>> -> memref<!tpu.dma_semaphore, #tpu.memory_space<semaphore_mem>>
    tpu.enqueue_dma source(%111 : memref<128xf32, #tpu.memory_space<any>>) target(%113 : memref<128xf32, #tpu.memory_space<vmem>>) target_semaphore(%115 : memref<!tpu.dma_semaphore, #tpu.memory_space<semaphore_mem>>)
    %c7_i32 = arith.constant 7 : i32
    %c0_i32_79 = arith.constant 0 : i32
    %c7_i32_80 = arith.constant 7 : i32
    %c0_i32_81 = arith.constant 0 : i32
    %116 = tpu.memref_slice %arg3[%14, %c0_i32_81] : memref<3072x128xf32, #tpu.memory_space<any>> -> memref<1x128xf32, #tpu.memory_space<any>>
    %117 = tpu.memref_squeeze %116 : memref<1x128xf32, #tpu.memory_space<any>> -> memref<128xf32, #tpu.memory_space<any>>
    %c0_i32_82 = arith.constant 0 : i32
    %118 = tpu.memref_slice %arg8[%c7_i32, %c0_i32_82] : memref<16x128xf32, #tpu.memory_space<vmem>> -> memref<1x128xf32, #tpu.memory_space<vmem>>
    %119 = tpu.memref_squeeze %118 : memref<1x128xf32, #tpu.memory_space<vmem>> -> memref<128xf32, #tpu.memory_space<vmem>>
    %120 = tpu.memref_slice %arg10[%c0_i32_79, %c7_i32_80] : memref<2x16x!tpu.dma_semaphore, #tpu.memory_space<semaphore_mem>> -> memref<1x1x!tpu.dma_semaphore, #tpu.memory_space<semaphore_mem>>
    %121 = tpu.memref_squeeze %120 : memref<1x1x!tpu.dma_semaphore, #tpu.memory_space<semaphore_mem>> -> memref<!tpu.dma_semaphore, #tpu.memory_space<semaphore_mem>>
    tpu.enqueue_dma source(%117 : memref<128xf32, #tpu.memory_space<any>>) target(%119 : memref<128xf32, #tpu.memory_space<vmem>>) target_semaphore(%121 : memref<!tpu.dma_semaphore, #tpu.memory_space<semaphore_mem>>)
    %c7_i32_83 = arith.constant 7 : i32
    %c1_i32_84 = arith.constant 1 : i32
    %c7_i32_85 = arith.constant 7 : i32
    %c0_i32_86 = arith.constant 0 : i32
    %122 = tpu.memref_slice %arg4[%15, %c0_i32_86] : memref<16x128xf32, #tpu.memory_space<any>> -> memref<1x128xf32, #tpu.memory_space<any>>
    %123 = tpu.memref_squeeze %122 : memref<1x128xf32, #tpu.memory_space<any>> -> memref<128xf32, #tpu.memory_space<any>>
    %c0_i32_87 = arith.constant 0 : i32
    %124 = tpu.memref_slice %arg9[%c7_i32_83, %c0_i32_87] : memref<16x128xf32, #tpu.memory_space<vmem>> -> memref<1x128xf32, #tpu.memory_space<vmem>>
    %125 = tpu.memref_squeeze %124 : memref<1x128xf32, #tpu.memory_space<vmem>> -> memref<128xf32, #tpu.memory_space<vmem>>
    %126 = tpu.memref_slice %arg10[%c1_i32_84, %c7_i32_85] : memref<2x16x!tpu.dma_semaphore, #tpu.memory_space<semaphore_mem>> -> memref<1x1x!tpu.dma_semaphore, #tpu.memory_space<semaphore_mem>>
    %127 = tpu.memref_squeeze %126 : memref<1x1x!tpu.dma_semaphore, #tpu.memory_space<semaphore_mem>> -> memref<!tpu.dma_semaphore, #tpu.memory_space<semaphore_mem>>
    tpu.enqueue_dma source(%123 : memref<128xf32, #tpu.memory_space<any>>) target(%125 : memref<128xf32, #tpu.memory_space<vmem>>) target_semaphore(%127 : memref<!tpu.dma_semaphore, #tpu.memory_space<semaphore_mem>>)
    %c8_i32 = arith.constant 8 : i32
    %c0_i32_88 = arith.constant 0 : i32
    %c8_i32_89 = arith.constant 8 : i32
    %c0_i32_90 = arith.constant 0 : i32
    %128 = tpu.memref_slice %arg3[%16, %c0_i32_90] : memref<3072x128xf32, #tpu.memory_space<any>> -> memref<1x128xf32, #tpu.memory_space<any>>
    %129 = tpu.memref_squeeze %128 : memref<1x128xf32, #tpu.memory_space<any>> -> memref<128xf32, #tpu.memory_space<any>>
    %c0_i32_91 = arith.constant 0 : i32
    %130 = tpu.memref_slice %arg8[%c8_i32, %c0_i32_91] : memref<16x128xf32, #tpu.memory_space<vmem>> -> memref<1x128xf32, #tpu.memory_space<vmem>>
    %131 = tpu.memref_squeeze %130 : memref<1x128xf32, #tpu.memory_space<vmem>> -> memref<128xf32, #tpu.memory_space<vmem>>
    %132 = tpu.memref_slice %arg10[%c0_i32_88, %c8_i32_89] : memref<2x16x!tpu.dma_semaphore, #tpu.memory_space<semaphore_mem>> -> memref<1x1x!tpu.dma_semaphore, #tpu.memory_space<semaphore_mem>>
    %133 = tpu.memref_squeeze %132 : memref<1x1x!tpu.dma_semaphore, #tpu.memory_space<semaphore_mem>> -> memref<!tpu.dma_semaphore, #tpu.memory_space<semaphore_mem>>
    tpu.enqueue_dma source(%129 : memref<128xf32, #tpu.memory_space<any>>) target(%131 : memref<128xf32, #tpu.memory_space<vmem>>) target_semaphore(%133 : memref<!tpu.dma_semaphore, #tpu.memory_space<semaphore_mem>>)
    %c8_i32_92 = arith.constant 8 : i32
    %c1_i32_93 = arith.constant 1 : i32
    %c8_i32_94 = arith.constant 8 : i32
    %c0_i32_95 = arith.constant 0 : i32
    %134 = tpu.memref_slice %arg4[%17, %c0_i32_95] : memref<16x128xf32, #tpu.memory_space<any>> -> memref<1x128xf32, #tpu.memory_space<any>>
    %135 = tpu.memref_squeeze %134 : memref<1x128xf32, #tpu.memory_space<any>> -> memref<128xf32, #tpu.memory_space<any>>
    %c0_i32_96 = arith.constant 0 : i32
    %136 = tpu.memref_slice %arg9[%c8_i32_92, %c0_i32_96] : memref<16x128xf32, #tpu.memory_space<vmem>> -> memref<1x128xf32, #tpu.memory_space<vmem>>
    %137 = tpu.memref_squeeze %136 : memref<1x128xf32, #tpu.memory_space<vmem>> -> memref<128xf32, #tpu.memory_space<vmem>>
    %138 = tpu.memref_slice %arg10[%c1_i32_93, %c8_i32_94] : memref<2x16x!tpu.dma_semaphore, #tpu.memory_space<semaphore_mem>> -> memref<1x1x!tpu.dma_semaphore, #tpu.memory_space<semaphore_mem>>
    %139 = tpu.memref_squeeze %138 : memref<1x1x!tpu.dma_semaphore, #tpu.memory_space<semaphore_mem>> -> memref<!tpu.dma_semaphore, #tpu.memory_space<semaphore_mem>>
    tpu.enqueue_dma source(%135 : memref<128xf32, #tpu.memory_space<any>>) target(%137 : memref<128xf32, #tpu.memory_space<vmem>>) target_semaphore(%139 : memref<!tpu.dma_semaphore, #tpu.memory_space<semaphore_mem>>)
    %c9_i32 = arith.constant 9 : i32
    %c0_i32_97 = arith.constant 0 : i32
    %c9_i32_98 = arith.constant 9 : i32
    %c0_i32_99 = arith.constant 0 : i32
    %140 = tpu.memref_slice %arg3[%18, %c0_i32_99] : memref<3072x128xf32, #tpu.memory_space<any>> -> memref<1x128xf32, #tpu.memory_space<any>>
    %141 = tpu.memref_squeeze %140 : memref<1x128xf32, #tpu.memory_space<any>> -> memref<128xf32, #tpu.memory_space<any>>
    %c0_i32_100 = arith.constant 0 : i32
    %142 = tpu.memref_slice %arg8[%c9_i32, %c0_i32_100] : memref<16x128xf32, #tpu.memory_space<vmem>> -> memref<1x128xf32, #tpu.memory_space<vmem>>
    %143 = tpu.memref_squeeze %142 : memref<1x128xf32, #tpu.memory_space<vmem>> -> memref<128xf32, #tpu.memory_space<vmem>>
    %144 = tpu.memref_slice %arg10[%c0_i32_97, %c9_i32_98] : memref<2x16x!tpu.dma_semaphore, #tpu.memory_space<semaphore_mem>> -> memref<1x1x!tpu.dma_semaphore, #tpu.memory_space<semaphore_mem>>
    %145 = tpu.memref_squeeze %144 : memref<1x1x!tpu.dma_semaphore, #tpu.memory_space<semaphore_mem>> -> memref<!tpu.dma_semaphore, #tpu.memory_space<semaphore_mem>>
    tpu.enqueue_dma source(%141 : memref<128xf32, #tpu.memory_space<any>>) target(%143 : memref<128xf32, #tpu.memory_space<vmem>>) target_semaphore(%145 : memref<!tpu.dma_semaphore, #tpu.memory_space<semaphore_mem>>)
    %c9_i32_101 = arith.constant 9 : i32
    %c1_i32_102 = arith.constant 1 : i32
    %c9_i32_103 = arith.constant 9 : i32
    %c0_i32_104 = arith.constant 0 : i32
    %146 = tpu.memref_slice %arg4[%19, %c0_i32_104] : memref<16x128xf32, #tpu.memory_space<any>> -> memref<1x128xf32, #tpu.memory_space<any>>
    %147 = tpu.memref_squeeze %146 : memref<1x128xf32, #tpu.memory_space<any>> -> memref<128xf32, #tpu.memory_space<any>>
    %c0_i32_105 = arith.constant 0 : i32
    %148 = tpu.memref_slice %arg9[%c9_i32_101, %c0_i32_105] : memref<16x128xf32, #tpu.memory_space<vmem>> -> memref<1x128xf32, #tpu.memory_space<vmem>>
    %149 = tpu.memref_squeeze %148 : memref<1x128xf32, #tpu.memory_space<vmem>> -> memref<128xf32, #tpu.memory_space<vmem>>
    %150 = tpu.memref_slice %arg10[%c1_i32_102, %c9_i32_103] : memref<2x16x!tpu.dma_semaphore, #tpu.memory_space<semaphore_mem>> -> memref<1x1x!tpu.dma_semaphore, #tpu.memory_space<semaphore_mem>>
    %151 = tpu.memref_squeeze %150 : memref<1x1x!tpu.dma_semaphore, #tpu.memory_space<semaphore_mem>> -> memref<!tpu.dma_semaphore, #tpu.memory_space<semaphore_mem>>
    tpu.enqueue_dma source(%147 : memref<128xf32, #tpu.memory_space<any>>) target(%149 : memref<128xf32, #tpu.memory_space<vmem>>) target_semaphore(%151 : memref<!tpu.dma_semaphore, #tpu.memory_space<semaphore_mem>>)
    %c10_i32 = arith.constant 10 : i32
    %c0_i32_106 = arith.constant 0 : i32
    %c10_i32_107 = arith.constant 10 : i32
    %c0_i32_108 = arith.constant 0 : i32
    %152 = tpu.memref_slice %arg3[%20, %c0_i32_108] : memref<3072x128xf32, #tpu.memory_space<any>> -> memref<1x128xf32, #tpu.memory_space<any>>
    %153 = tpu.memref_squeeze %152 : memref<1x128xf32, #tpu.memory_space<any>> -> memref<128xf32, #tpu.memory_space<any>>
    %c0_i32_109 = arith.constant 0 : i32
    %154 = tpu.memref_slice %arg8[%c10_i32, %c0_i32_109] : memref<16x128xf32, #tpu.memory_space<vmem>> -> memref<1x128xf32, #tpu.memory_space<vmem>>
    %155 = tpu.memref_squeeze %154 : memref<1x128xf32, #tpu.memory_space<vmem>> -> memref<128xf32, #tpu.memory_space<vmem>>
    %156 = tpu.memref_slice %arg10[%c0_i32_106, %c10_i32_107] : memref<2x16x!tpu.dma_semaphore, #tpu.memory_space<semaphore_mem>> -> memref<1x1x!tpu.dma_semaphore, #tpu.memory_space<semaphore_mem>>
    %157 = tpu.memref_squeeze %156 : memref<1x1x!tpu.dma_semaphore, #tpu.memory_space<semaphore_mem>> -> memref<!tpu.dma_semaphore, #tpu.memory_space<semaphore_mem>>
    tpu.enqueue_dma source(%153 : memref<128xf32, #tpu.memory_space<any>>) target(%155 : memref<128xf32, #tpu.memory_space<vmem>>) target_semaphore(%157 : memref<!tpu.dma_semaphore, #tpu.memory_space<semaphore_mem>>)
    %c10_i32_110 = arith.constant 10 : i32
    %c1_i32_111 = arith.constant 1 : i32
    %c10_i32_112 = arith.constant 10 : i32
    %c0_i32_113 = arith.constant 0 : i32
    %158 = tpu.memref_slice %arg4[%21, %c0_i32_113] : memref<16x128xf32, #tpu.memory_space<any>> -> memref<1x128xf32, #tpu.memory_space<any>>
    %159 = tpu.memref_squeeze %158 : memref<1x128xf32, #tpu.memory_space<any>> -> memref<128xf32, #tpu.memory_space<any>>
    %c0_i32_114 = arith.constant 0 : i32
    %160 = tpu.memref_slice %arg9[%c10_i32_110, %c0_i32_114] : memref<16x128xf32, #tpu.memory_space<vmem>> -> memref<1x128xf32, #tpu.memory_space<vmem>>
    %161 = tpu.memref_squeeze %160 : memref<1x128xf32, #tpu.memory_space<vmem>> -> memref<128xf32, #tpu.memory_space<vmem>>
    %162 = tpu.memref_slice %arg10[%c1_i32_111, %c10_i32_112] : memref<2x16x!tpu.dma_semaphore, #tpu.memory_space<semaphore_mem>> -> memref<1x1x!tpu.dma_semaphore, #tpu.memory_space<semaphore_mem>>
    %163 = tpu.memref_squeeze %162 : memref<1x1x!tpu.dma_semaphore, #tpu.memory_space<semaphore_mem>> -> memref<!tpu.dma_semaphore, #tpu.memory_space<semaphore_mem>>
    tpu.enqueue_dma source(%159 : memref<128xf32, #tpu.memory_space<any>>) target(%161 : memref<128xf32, #tpu.memory_space<vmem>>) target_semaphore(%163 : memref<!tpu.dma_semaphore, #tpu.memory_space<semaphore_mem>>)
    %c11_i32 = arith.constant 11 : i32
    %c0_i32_115 = arith.constant 0 : i32
    %c11_i32_116 = arith.constant 11 : i32
    %c0_i32_117 = arith.constant 0 : i32
    %164 = tpu.memref_slice %arg3[%22, %c0_i32_117] : memref<3072x128xf32, #tpu.memory_space<any>> -> memref<1x128xf32, #tpu.memory_space<any>>
    %165 = tpu.memref_squeeze %164 : memref<1x128xf32, #tpu.memory_space<any>> -> memref<128xf32, #tpu.memory_space<any>>
    %c0_i32_118 = arith.constant 0 : i32
    %166 = tpu.memref_slice %arg8[%c11_i32, %c0_i32_118] : memref<16x128xf32, #tpu.memory_space<vmem>> -> memref<1x128xf32, #tpu.memory_space<vmem>>
    %167 = tpu.memref_squeeze %166 : memref<1x128xf32, #tpu.memory_space<vmem>> -> memref<128xf32, #tpu.memory_space<vmem>>
    %168 = tpu.memref_slice %arg10[%c0_i32_115, %c11_i32_116] : memref<2x16x!tpu.dma_semaphore, #tpu.memory_space<semaphore_mem>> -> memref<1x1x!tpu.dma_semaphore, #tpu.memory_space<semaphore_mem>>
    %169 = tpu.memref_squeeze %168 : memref<1x1x!tpu.dma_semaphore, #tpu.memory_space<semaphore_mem>> -> memref<!tpu.dma_semaphore, #tpu.memory_space<semaphore_mem>>
    tpu.enqueue_dma source(%165 : memref<128xf32, #tpu.memory_space<any>>) target(%167 : memref<128xf32, #tpu.memory_space<vmem>>) target_semaphore(%169 : memref<!tpu.dma_semaphore, #tpu.memory_space<semaphore_mem>>)
    %c11_i32_119 = arith.constant 11 : i32
    %c1_i32_120 = arith.constant 1 : i32
    %c11_i32_121 = arith.constant 11 : i32
    %c0_i32_122 = arith.constant 0 : i32
    %170 = tpu.memref_slice %arg4[%23, %c0_i32_122] : memref<16x128xf32, #tpu.memory_space<any>> -> memref<1x128xf32, #tpu.memory_space<any>>
    %171 = tpu.memref_squeeze %170 : memref<1x128xf32, #tpu.memory_space<any>> -> memref<128xf32, #tpu.memory_space<any>>
    %c0_i32_123 = arith.constant 0 : i32
    %172 = tpu.memref_slice %arg9[%c11_i32_119, %c0_i32_123] : memref<16x128xf32, #tpu.memory_space<vmem>> -> memref<1x128xf32, #tpu.memory_space<vmem>>
    %173 = tpu.memref_squeeze %172 : memref<1x128xf32, #tpu.memory_space<vmem>> -> memref<128xf32, #tpu.memory_space<vmem>>
    %174 = tpu.memref_slice %arg10[%c1_i32_120, %c11_i32_121] : memref<2x16x!tpu.dma_semaphore, #tpu.memory_space<semaphore_mem>> -> memref<1x1x!tpu.dma_semaphore, #tpu.memory_space<semaphore_mem>>
    %175 = tpu.memref_squeeze %174 : memref<1x1x!tpu.dma_semaphore, #tpu.memory_space<semaphore_mem>> -> memref<!tpu.dma_semaphore, #tpu.memory_space<semaphore_mem>>
    tpu.enqueue_dma source(%171 : memref<128xf32, #tpu.memory_space<any>>) target(%173 : memref<128xf32, #tpu.memory_space<vmem>>) target_semaphore(%175 : memref<!tpu.dma_semaphore, #tpu.memory_space<semaphore_mem>>)
    %c12_i32 = arith.constant 12 : i32
    %c0_i32_124 = arith.constant 0 : i32
    %c12_i32_125 = arith.constant 12 : i32
    %c0_i32_126 = arith.constant 0 : i32
    %176 = tpu.memref_slice %arg3[%24, %c0_i32_126] : memref<3072x128xf32, #tpu.memory_space<any>> -> memref<1x128xf32, #tpu.memory_space<any>>
    %177 = tpu.memref_squeeze %176 : memref<1x128xf32, #tpu.memory_space<any>> -> memref<128xf32, #tpu.memory_space<any>>
    %c0_i32_127 = arith.constant 0 : i32
    %178 = tpu.memref_slice %arg8[%c12_i32, %c0_i32_127] : memref<16x128xf32, #tpu.memory_space<vmem>> -> memref<1x128xf32, #tpu.memory_space<vmem>>
    %179 = tpu.memref_squeeze %178 : memref<1x128xf32, #tpu.memory_space<vmem>> -> memref<128xf32, #tpu.memory_space<vmem>>
    %180 = tpu.memref_slice %arg10[%c0_i32_124, %c12_i32_125] : memref<2x16x!tpu.dma_semaphore, #tpu.memory_space<semaphore_mem>> -> memref<1x1x!tpu.dma_semaphore, #tpu.memory_space<semaphore_mem>>
    %181 = tpu.memref_squeeze %180 : memref<1x1x!tpu.dma_semaphore, #tpu.memory_space<semaphore_mem>> -> memref<!tpu.dma_semaphore, #tpu.memory_space<semaphore_mem>>
    tpu.enqueue_dma source(%177 : memref<128xf32, #tpu.memory_space<any>>) target(%179 : memref<128xf32, #tpu.memory_space<vmem>>) target_semaphore(%181 : memref<!tpu.dma_semaphore, #tpu.memory_space<semaphore_mem>>)
    %c12_i32_128 = arith.constant 12 : i32
    %c1_i32_129 = arith.constant 1 : i32
    %c12_i32_130 = arith.constant 12 : i32
    %c0_i32_131 = arith.constant 0 : i32
    %182 = tpu.memref_slice %arg4[%25, %c0_i32_131] : memref<16x128xf32, #tpu.memory_space<any>> -> memref<1x128xf32, #tpu.memory_space<any>>
    %183 = tpu.memref_squeeze %182 : memref<1x128xf32, #tpu.memory_space<any>> -> memref<128xf32, #tpu.memory_space<any>>
    %c0_i32_132 = arith.constant 0 : i32
    %184 = tpu.memref_slice %arg9[%c12_i32_128, %c0_i32_132] : memref<16x128xf32, #tpu.memory_space<vmem>> -> memref<1x128xf32, #tpu.memory_space<vmem>>
    %185 = tpu.memref_squeeze %184 : memref<1x128xf32, #tpu.memory_space<vmem>> -> memref<128xf32, #tpu.memory_space<vmem>>
    %186 = tpu.memref_slice %arg10[%c1_i32_129, %c12_i32_130] : memref<2x16x!tpu.dma_semaphore, #tpu.memory_space<semaphore_mem>> -> memref<1x1x!tpu.dma_semaphore, #tpu.memory_space<semaphore_mem>>
    %187 = tpu.memref_squeeze %186 : memref<1x1x!tpu.dma_semaphore, #tpu.memory_space<semaphore_mem>> -> memref<!tpu.dma_semaphore, #tpu.memory_space<semaphore_mem>>
    tpu.enqueue_dma source(%183 : memref<128xf32, #tpu.memory_space<any>>) target(%185 : memref<128xf32, #tpu.memory_space<vmem>>) target_semaphore(%187 : memref<!tpu.dma_semaphore, #tpu.memory_space<semaphore_mem>>)
    %c13_i32 = arith.constant 13 : i32
    %c0_i32_133 = arith.constant 0 : i32
    %c13_i32_134 = arith.constant 13 : i32
    %c0_i32_135 = arith.constant 0 : i32
    %188 = tpu.memref_slice %arg3[%26, %c0_i32_135] : memref<3072x128xf32, #tpu.memory_space<any>> -> memref<1x128xf32, #tpu.memory_space<any>>
    %189 = tpu.memref_squeeze %188 : memref<1x128xf32, #tpu.memory_space<any>> -> memref<128xf32, #tpu.memory_space<any>>
    %c0_i32_136 = arith.constant 0 : i32
    %190 = tpu.memref_slice %arg8[%c13_i32, %c0_i32_136] : memref<16x128xf32, #tpu.memory_space<vmem>> -> memref<1x128xf32, #tpu.memory_space<vmem>>
    %191 = tpu.memref_squeeze %190 : memref<1x128xf32, #tpu.memory_space<vmem>> -> memref<128xf32, #tpu.memory_space<vmem>>
    %192 = tpu.memref_slice %arg10[%c0_i32_133, %c13_i32_134] : memref<2x16x!tpu.dma_semaphore, #tpu.memory_space<semaphore_mem>> -> memref<1x1x!tpu.dma_semaphore, #tpu.memory_space<semaphore_mem>>
    %193 = tpu.memref_squeeze %192 : memref<1x1x!tpu.dma_semaphore, #tpu.memory_space<semaphore_mem>> -> memref<!tpu.dma_semaphore, #tpu.memory_space<semaphore_mem>>
    tpu.enqueue_dma source(%189 : memref<128xf32, #tpu.memory_space<any>>) target(%191 : memref<128xf32, #tpu.memory_space<vmem>>) target_semaphore(%193 : memref<!tpu.dma_semaphore, #tpu.memory_space<semaphore_mem>>)
    %c13_i32_137 = arith.constant 13 : i32
    %c1_i32_138 = arith.constant 1 : i32
    %c13_i32_139 = arith.constant 13 : i32
    %c0_i32_140 = arith.constant 0 : i32
    %194 = tpu.memref_slice %arg4[%27, %c0_i32_140] : memref<16x128xf32, #tpu.memory_space<any>> -> memref<1x128xf32, #tpu.memory_space<any>>
    %195 = tpu.memref_squeeze %194 : memref<1x128xf32, #tpu.memory_space<any>> -> memref<128xf32, #tpu.memory_space<any>>
    %c0_i32_141 = arith.constant 0 : i32
    %196 = tpu.memref_slice %arg9[%c13_i32_137, %c0_i32_141] : memref<16x128xf32, #tpu.memory_space<vmem>> -> memref<1x128xf32, #tpu.memory_space<vmem>>
    %197 = tpu.memref_squeeze %196 : memref<1x128xf32, #tpu.memory_space<vmem>> -> memref<128xf32, #tpu.memory_space<vmem>>
    %198 = tpu.memref_slice %arg10[%c1_i32_138, %c13_i32_139] : memref<2x16x!tpu.dma_semaphore, #tpu.memory_space<semaphore_mem>> -> memref<1x1x!tpu.dma_semaphore, #tpu.memory_space<semaphore_mem>>
    %199 = tpu.memref_squeeze %198 : memref<1x1x!tpu.dma_semaphore, #tpu.memory_space<semaphore_mem>> -> memref<!tpu.dma_semaphore, #tpu.memory_space<semaphore_mem>>
    tpu.enqueue_dma source(%195 : memref<128xf32, #tpu.memory_space<any>>) target(%197 : memref<128xf32, #tpu.memory_space<vmem>>) target_semaphore(%199 : memref<!tpu.dma_semaphore, #tpu.memory_space<semaphore_mem>>)
    %c14_i32 = arith.constant 14 : i32
    %c0_i32_142 = arith.constant 0 : i32
    %c14_i32_143 = arith.constant 14 : i32
    %c0_i32_144 = arith.constant 0 : i32
    %200 = tpu.memref_slice %arg3[%28, %c0_i32_144] : memref<3072x128xf32, #tpu.memory_space<any>> -> memref<1x128xf32, #tpu.memory_space<any>>
    %201 = tpu.memref_squeeze %200 : memref<1x128xf32, #tpu.memory_space<any>> -> memref<128xf32, #tpu.memory_space<any>>
    %c0_i32_145 = arith.constant 0 : i32
    %202 = tpu.memref_slice %arg8[%c14_i32, %c0_i32_145] : memref<16x128xf32, #tpu.memory_space<vmem>> -> memref<1x128xf32, #tpu.memory_space<vmem>>
    %203 = tpu.memref_squeeze %202 : memref<1x128xf32, #tpu.memory_space<vmem>> -> memref<128xf32, #tpu.memory_space<vmem>>
    %204 = tpu.memref_slice %arg10[%c0_i32_142, %c14_i32_143] : memref<2x16x!tpu.dma_semaphore, #tpu.memory_space<semaphore_mem>> -> memref<1x1x!tpu.dma_semaphore, #tpu.memory_space<semaphore_mem>>
    %205 = tpu.memref_squeeze %204 : memref<1x1x!tpu.dma_semaphore, #tpu.memory_space<semaphore_mem>> -> memref<!tpu.dma_semaphore, #tpu.memory_space<semaphore_mem>>
    tpu.enqueue_dma source(%201 : memref<128xf32, #tpu.memory_space<any>>) target(%203 : memref<128xf32, #tpu.memory_space<vmem>>) target_semaphore(%205 : memref<!tpu.dma_semaphore, #tpu.memory_space<semaphore_mem>>)
    %c14_i32_146 = arith.constant 14 : i32
    %c1_i32_147 = arith.constant 1 : i32
    %c14_i32_148 = arith.constant 14 : i32
    %c0_i32_149 = arith.constant 0 : i32
    %206 = tpu.memref_slice %arg4[%29, %c0_i32_149] : memref<16x128xf32, #tpu.memory_space<any>> -> memref<1x128xf32, #tpu.memory_space<any>>
    %207 = tpu.memref_squeeze %206 : memref<1x128xf32, #tpu.memory_space<any>> -> memref<128xf32, #tpu.memory_space<any>>
    %c0_i32_150 = arith.constant 0 : i32
    %208 = tpu.memref_slice %arg9[%c14_i32_146, %c0_i32_150] : memref<16x128xf32, #tpu.memory_space<vmem>> -> memref<1x128xf32, #tpu.memory_space<vmem>>
    %209 = tpu.memref_squeeze %208 : memref<1x128xf32, #tpu.memory_space<vmem>> -> memref<128xf32, #tpu.memory_space<vmem>>
    %210 = tpu.memref_slice %arg10[%c1_i32_147, %c14_i32_148] : memref<2x16x!tpu.dma_semaphore, #tpu.memory_space<semaphore_mem>> -> memref<1x1x!tpu.dma_semaphore, #tpu.memory_space<semaphore_mem>>
    %211 = tpu.memref_squeeze %210 : memref<1x1x!tpu.dma_semaphore, #tpu.memory_space<semaphore_mem>> -> memref<!tpu.dma_semaphore, #tpu.memory_space<semaphore_mem>>
    tpu.enqueue_dma source(%207 : memref<128xf32, #tpu.memory_space<any>>) target(%209 : memref<128xf32, #tpu.memory_space<vmem>>) target_semaphore(%211 : memref<!tpu.dma_semaphore, #tpu.memory_space<semaphore_mem>>)
    %c15_i32 = arith.constant 15 : i32
    %c0_i32_151 = arith.constant 0 : i32
    %c15_i32_152 = arith.constant 15 : i32
    %c0_i32_153 = arith.constant 0 : i32
    %212 = tpu.memref_slice %arg3[%30, %c0_i32_153] : memref<3072x128xf32, #tpu.memory_space<any>> -> memref<1x128xf32, #tpu.memory_space<any>>
    %213 = tpu.memref_squeeze %212 : memref<1x128xf32, #tpu.memory_space<any>> -> memref<128xf32, #tpu.memory_space<any>>
    %c0_i32_154 = arith.constant 0 : i32
    %214 = tpu.memref_slice %arg8[%c15_i32, %c0_i32_154] : memref<16x128xf32, #tpu.memory_space<vmem>> -> memref<1x128xf32, #tpu.memory_space<vmem>>
    %215 = tpu.memref_squeeze %214 : memref<1x128xf32, #tpu.memory_space<vmem>> -> memref<128xf32, #tpu.memory_space<vmem>>
    %216 = tpu.memref_slice %arg10[%c0_i32_151, %c15_i32_152] : memref<2x16x!tpu.dma_semaphore, #tpu.memory_space<semaphore_mem>> -> memref<1x1x!tpu.dma_semaphore, #tpu.memory_space<semaphore_mem>>
    %217 = tpu.memref_squeeze %216 : memref<1x1x!tpu.dma_semaphore, #tpu.memory_space<semaphore_mem>> -> memref<!tpu.dma_semaphore, #tpu.memory_space<semaphore_mem>>
    tpu.enqueue_dma source(%213 : memref<128xf32, #tpu.memory_space<any>>) target(%215 : memref<128xf32, #tpu.memory_space<vmem>>) target_semaphore(%217 : memref<!tpu.dma_semaphore, #tpu.memory_space<semaphore_mem>>)
    %c15_i32_155 = arith.constant 15 : i32
    %c1_i32_156 = arith.constant 1 : i32
    %c15_i32_157 = arith.constant 15 : i32
    %c0_i32_158 = arith.constant 0 : i32
    %218 = tpu.memref_slice %arg4[%31, %c0_i32_158] : memref<16x128xf32, #tpu.memory_space<any>> -> memref<1x128xf32, #tpu.memory_space<any>>
    %219 = tpu.memref_squeeze %218 : memref<1x128xf32, #tpu.memory_space<any>> -> memref<128xf32, #tpu.memory_space<any>>
    %c0_i32_159 = arith.constant 0 : i32
    %220 = tpu.memref_slice %arg9[%c15_i32_155, %c0_i32_159] : memref<16x128xf32, #tpu.memory_space<vmem>> -> memref<1x128xf32, #tpu.memory_space<vmem>>
    %221 = tpu.memref_squeeze %220 : memref<1x128xf32, #tpu.memory_space<vmem>> -> memref<128xf32, #tpu.memory_space<vmem>>
    %222 = tpu.memref_slice %arg10[%c1_i32_156, %c15_i32_157] : memref<2x16x!tpu.dma_semaphore, #tpu.memory_space<semaphore_mem>> -> memref<1x1x!tpu.dma_semaphore, #tpu.memory_space<semaphore_mem>>
    %223 = tpu.memref_squeeze %222 : memref<1x1x!tpu.dma_semaphore, #tpu.memory_space<semaphore_mem>> -> memref<!tpu.dma_semaphore, #tpu.memory_space<semaphore_mem>>
    tpu.enqueue_dma source(%219 : memref<128xf32, #tpu.memory_space<any>>) target(%221 : memref<128xf32, #tpu.memory_space<vmem>>) target_semaphore(%223 : memref<!tpu.dma_semaphore, #tpu.memory_space<semaphore_mem>>)
    %c0_i32_160 = arith.constant 0 : i32
    %c0_i32_161 = arith.constant 0 : i32
    %c0_i32_162 = arith.constant 0 : i32
    %c0_i32_163 = arith.constant 0 : i32
    %224 = tpu.memref_slice %arg3[%0, %c0_i32_163] : memref<3072x128xf32, #tpu.memory_space<any>> -> memref<1x128xf32, #tpu.memory_space<any>>
    %225 = tpu.memref_squeeze %224 : memref<1x128xf32, #tpu.memory_space<any>> -> memref<128xf32, #tpu.memory_space<any>>
    %c0_i32_164 = arith.constant 0 : i32
    %226 = tpu.memref_slice %arg8[%c0_i32_160, %c0_i32_164] : memref<16x128xf32, #tpu.memory_space<vmem>> -> memref<1x128xf32, #tpu.memory_space<vmem>>
    %227 = tpu.memref_squeeze %226 : memref<1x128xf32, #tpu.memory_space<vmem>> -> memref<128xf32, #tpu.memory_space<vmem>>
    %228 = tpu.memref_slice %arg10[%c0_i32_161, %c0_i32_162] : memref<2x16x!tpu.dma_semaphore, #tpu.memory_space<semaphore_mem>> -> memref<1x1x!tpu.dma_semaphore, #tpu.memory_space<semaphore_mem>>
    %229 = tpu.memref_squeeze %228 : memref<1x1x!tpu.dma_semaphore, #tpu.memory_space<semaphore_mem>> -> memref<!tpu.dma_semaphore, #tpu.memory_space<semaphore_mem>>
    tpu.wait_dma2 semaphore(%229 : memref<!tpu.dma_semaphore, #tpu.memory_space<semaphore_mem>>) src(%225 : memref<128xf32, #tpu.memory_space<any>>) dst(%227 : memref<128xf32, #tpu.memory_space<vmem>>)
    %c0_i32_165 = arith.constant 0 : i32
    %c1_i32_166 = arith.constant 1 : i32
    %c0_i32_167 = arith.constant 0 : i32
    %c0_i32_168 = arith.constant 0 : i32
    %230 = tpu.memref_slice %arg4[%1, %c0_i32_168] : memref<16x128xf32, #tpu.memory_space<any>> -> memref<1x128xf32, #tpu.memory_space<any>>
    %231 = tpu.memref_squeeze %230 : memref<1x128xf32, #tpu.memory_space<any>> -> memref<128xf32, #tpu.memory_space<any>>
    %c0_i32_169 = arith.constant 0 : i32
    %232 = tpu.memref_slice %arg9[%c0_i32_165, %c0_i32_169] : memref<16x128xf32, #tpu.memory_space<vmem>> -> memref<1x128xf32, #tpu.memory_space<vmem>>
    %233 = tpu.memref_squeeze %232 : memref<1x128xf32, #tpu.memory_space<vmem>> -> memref<128xf32, #tpu.memory_space<vmem>>
    %234 = tpu.memref_slice %arg10[%c1_i32_166, %c0_i32_167] : memref<2x16x!tpu.dma_semaphore, #tpu.memory_space<semaphore_mem>> -> memref<1x1x!tpu.dma_semaphore, #tpu.memory_space<semaphore_mem>>
    %235 = tpu.memref_squeeze %234 : memref<1x1x!tpu.dma_semaphore, #tpu.memory_space<semaphore_mem>> -> memref<!tpu.dma_semaphore, #tpu.memory_space<semaphore_mem>>
    tpu.wait_dma2 semaphore(%235 : memref<!tpu.dma_semaphore, #tpu.memory_space<semaphore_mem>>) src(%231 : memref<128xf32, #tpu.memory_space<any>>) dst(%233 : memref<128xf32, #tpu.memory_space<vmem>>)
    %c1_i32_170 = arith.constant 1 : i32
    %c0_i32_171 = arith.constant 0 : i32
    %c1_i32_172 = arith.constant 1 : i32
    %c0_i32_173 = arith.constant 0 : i32
    %236 = tpu.memref_slice %arg3[%2, %c0_i32_173] : memref<3072x128xf32, #tpu.memory_space<any>> -> memref<1x128xf32, #tpu.memory_space<any>>
    %237 = tpu.memref_squeeze %236 : memref<1x128xf32, #tpu.memory_space<any>> -> memref<128xf32, #tpu.memory_space<any>>
    %c0_i32_174 = arith.constant 0 : i32
    %238 = tpu.memref_slice %arg8[%c1_i32_170, %c0_i32_174] : memref<16x128xf32, #tpu.memory_space<vmem>> -> memref<1x128xf32, #tpu.memory_space<vmem>>
    %239 = tpu.memref_squeeze %238 : memref<1x128xf32, #tpu.memory_space<vmem>> -> memref<128xf32, #tpu.memory_space<vmem>>
    %240 = tpu.memref_slice %arg10[%c0_i32_171, %c1_i32_172] : memref<2x16x!tpu.dma_semaphore, #tpu.memory_space<semaphore_mem>> -> memref<1x1x!tpu.dma_semaphore, #tpu.memory_space<semaphore_mem>>
    %241 = tpu.memref_squeeze %240 : memref<1x1x!tpu.dma_semaphore, #tpu.memory_space<semaphore_mem>> -> memref<!tpu.dma_semaphore, #tpu.memory_space<semaphore_mem>>
    tpu.wait_dma2 semaphore(%241 : memref<!tpu.dma_semaphore, #tpu.memory_space<semaphore_mem>>) src(%237 : memref<128xf32, #tpu.memory_space<any>>) dst(%239 : memref<128xf32, #tpu.memory_space<vmem>>)
    %c1_i32_175 = arith.constant 1 : i32
    %c1_i32_176 = arith.constant 1 : i32
    %c1_i32_177 = arith.constant 1 : i32
    %c0_i32_178 = arith.constant 0 : i32
    %242 = tpu.memref_slice %arg4[%3, %c0_i32_178] : memref<16x128xf32, #tpu.memory_space<any>> -> memref<1x128xf32, #tpu.memory_space<any>>
    %243 = tpu.memref_squeeze %242 : memref<1x128xf32, #tpu.memory_space<any>> -> memref<128xf32, #tpu.memory_space<any>>
    %c0_i32_179 = arith.constant 0 : i32
    %244 = tpu.memref_slice %arg9[%c1_i32_175, %c0_i32_179] : memref<16x128xf32, #tpu.memory_space<vmem>> -> memref<1x128xf32, #tpu.memory_space<vmem>>
    %245 = tpu.memref_squeeze %244 : memref<1x128xf32, #tpu.memory_space<vmem>> -> memref<128xf32, #tpu.memory_space<vmem>>
    %246 = tpu.memref_slice %arg10[%c1_i32_176, %c1_i32_177] : memref<2x16x!tpu.dma_semaphore, #tpu.memory_space<semaphore_mem>> -> memref<1x1x!tpu.dma_semaphore, #tpu.memory_space<semaphore_mem>>
    %247 = tpu.memref_squeeze %246 : memref<1x1x!tpu.dma_semaphore, #tpu.memory_space<semaphore_mem>> -> memref<!tpu.dma_semaphore, #tpu.memory_space<semaphore_mem>>
    tpu.wait_dma2 semaphore(%247 : memref<!tpu.dma_semaphore, #tpu.memory_space<semaphore_mem>>) src(%243 : memref<128xf32, #tpu.memory_space<any>>) dst(%245 : memref<128xf32, #tpu.memory_space<vmem>>)
    %c2_i32_180 = arith.constant 2 : i32
    %c0_i32_181 = arith.constant 0 : i32
    %c2_i32_182 = arith.constant 2 : i32
    %c0_i32_183 = arith.constant 0 : i32
    %248 = tpu.memref_slice %arg3[%4, %c0_i32_183] : memref<3072x128xf32, #tpu.memory_space<any>> -> memref<1x128xf32, #tpu.memory_space<any>>
    %249 = tpu.memref_squeeze %248 : memref<1x128xf32, #tpu.memory_space<any>> -> memref<128xf32, #tpu.memory_space<any>>
    %c0_i32_184 = arith.constant 0 : i32
    %250 = tpu.memref_slice %arg8[%c2_i32_180, %c0_i32_184] : memref<16x128xf32, #tpu.memory_space<vmem>> -> memref<1x128xf32, #tpu.memory_space<vmem>>
    %251 = tpu.memref_squeeze %250 : memref<1x128xf32, #tpu.memory_space<vmem>> -> memref<128xf32, #tpu.memory_space<vmem>>
    %252 = tpu.memref_slice %arg10[%c0_i32_181, %c2_i32_182] : memref<2x16x!tpu.dma_semaphore, #tpu.memory_space<semaphore_mem>> -> memref<1x1x!tpu.dma_semaphore, #tpu.memory_space<semaphore_mem>>
    %253 = tpu.memref_squeeze %252 : memref<1x1x!tpu.dma_semaphore, #tpu.memory_space<semaphore_mem>> -> memref<!tpu.dma_semaphore, #tpu.memory_space<semaphore_mem>>
    tpu.wait_dma2 semaphore(%253 : memref<!tpu.dma_semaphore, #tpu.memory_space<semaphore_mem>>) src(%249 : memref<128xf32, #tpu.memory_space<any>>) dst(%251 : memref<128xf32, #tpu.memory_space<vmem>>)
    %c2_i32_185 = arith.constant 2 : i32
    %c1_i32_186 = arith.constant 1 : i32
    %c2_i32_187 = arith.constant 2 : i32
    %c0_i32_188 = arith.constant 0 : i32
    %254 = tpu.memref_slice %arg4[%5, %c0_i32_188] : memref<16x128xf32, #tpu.memory_space<any>> -> memref<1x128xf32, #tpu.memory_space<any>>
    %255 = tpu.memref_squeeze %254 : memref<1x128xf32, #tpu.memory_space<any>> -> memref<128xf32, #tpu.memory_space<any>>
    %c0_i32_189 = arith.constant 0 : i32
    %256 = tpu.memref_slice %arg9[%c2_i32_185, %c0_i32_189] : memref<16x128xf32, #tpu.memory_space<vmem>> -> memref<1x128xf32, #tpu.memory_space<vmem>>
    %257 = tpu.memref_squeeze %256 : memref<1x128xf32, #tpu.memory_space<vmem>> -> memref<128xf32, #tpu.memory_space<vmem>>
    %258 = tpu.memref_slice %arg10[%c1_i32_186, %c2_i32_187] : memref<2x16x!tpu.dma_semaphore, #tpu.memory_space<semaphore_mem>> -> memref<1x1x!tpu.dma_semaphore, #tpu.memory_space<semaphore_mem>>
    %259 = tpu.memref_squeeze %258 : memref<1x1x!tpu.dma_semaphore, #tpu.memory_space<semaphore_mem>> -> memref<!tpu.dma_semaphore, #tpu.memory_space<semaphore_mem>>
    tpu.wait_dma2 semaphore(%259 : memref<!tpu.dma_semaphore, #tpu.memory_space<semaphore_mem>>) src(%255 : memref<128xf32, #tpu.memory_space<any>>) dst(%257 : memref<128xf32, #tpu.memory_space<vmem>>)
    %c3_i32_190 = arith.constant 3 : i32
    %c0_i32_191 = arith.constant 0 : i32
    %c3_i32_192 = arith.constant 3 : i32
    %c0_i32_193 = arith.constant 0 : i32
    %260 = tpu.memref_slice %arg3[%6, %c0_i32_193] : memref<3072x128xf32, #tpu.memory_space<any>> -> memref<1x128xf32, #tpu.memory_space<any>>
    %261 = tpu.memref_squeeze %260 : memref<1x128xf32, #tpu.memory_space<any>> -> memref<128xf32, #tpu.memory_space<any>>
    %c0_i32_194 = arith.constant 0 : i32
    %262 = tpu.memref_slice %arg8[%c3_i32_190, %c0_i32_194] : memref<16x128xf32, #tpu.memory_space<vmem>> -> memref<1x128xf32, #tpu.memory_space<vmem>>
    %263 = tpu.memref_squeeze %262 : memref<1x128xf32, #tpu.memory_space<vmem>> -> memref<128xf32, #tpu.memory_space<vmem>>
    %264 = tpu.memref_slice %arg10[%c0_i32_191, %c3_i32_192] : memref<2x16x!tpu.dma_semaphore, #tpu.memory_space<semaphore_mem>> -> memref<1x1x!tpu.dma_semaphore, #tpu.memory_space<semaphore_mem>>
    %265 = tpu.memref_squeeze %264 : memref<1x1x!tpu.dma_semaphore, #tpu.memory_space<semaphore_mem>> -> memref<!tpu.dma_semaphore, #tpu.memory_space<semaphore_mem>>
    tpu.wait_dma2 semaphore(%265 : memref<!tpu.dma_semaphore, #tpu.memory_space<semaphore_mem>>) src(%261 : memref<128xf32, #tpu.memory_space<any>>) dst(%263 : memref<128xf32, #tpu.memory_space<vmem>>)
    %c3_i32_195 = arith.constant 3 : i32
    %c1_i32_196 = arith.constant 1 : i32
    %c3_i32_197 = arith.constant 3 : i32
    %c0_i32_198 = arith.constant 0 : i32
    %266 = tpu.memref_slice %arg4[%7, %c0_i32_198] : memref<16x128xf32, #tpu.memory_space<any>> -> memref<1x128xf32, #tpu.memory_space<any>>
    %267 = tpu.memref_squeeze %266 : memref<1x128xf32, #tpu.memory_space<any>> -> memref<128xf32, #tpu.memory_space<any>>
    %c0_i32_199 = arith.constant 0 : i32
    %268 = tpu.memref_slice %arg9[%c3_i32_195, %c0_i32_199] : memref<16x128xf32, #tpu.memory_space<vmem>> -> memref<1x128xf32, #tpu.memory_space<vmem>>
    %269 = tpu.memref_squeeze %268 : memref<1x128xf32, #tpu.memory_space<vmem>> -> memref<128xf32, #tpu.memory_space<vmem>>
    %270 = tpu.memref_slice %arg10[%c1_i32_196, %c3_i32_197] : memref<2x16x!tpu.dma_semaphore, #tpu.memory_space<semaphore_mem>> -> memref<1x1x!tpu.dma_semaphore, #tpu.memory_space<semaphore_mem>>
    %271 = tpu.memref_squeeze %270 : memref<1x1x!tpu.dma_semaphore, #tpu.memory_space<semaphore_mem>> -> memref<!tpu.dma_semaphore, #tpu.memory_space<semaphore_mem>>
    tpu.wait_dma2 semaphore(%271 : memref<!tpu.dma_semaphore, #tpu.memory_space<semaphore_mem>>) src(%267 : memref<128xf32, #tpu.memory_space<any>>) dst(%269 : memref<128xf32, #tpu.memory_space<vmem>>)
    %c4_i32_200 = arith.constant 4 : i32
    %c0_i32_201 = arith.constant 0 : i32
    %c4_i32_202 = arith.constant 4 : i32
    %c0_i32_203 = arith.constant 0 : i32
    %272 = tpu.memref_slice %arg3[%8, %c0_i32_203] : memref<3072x128xf32, #tpu.memory_space<any>> -> memref<1x128xf32, #tpu.memory_space<any>>
    %273 = tpu.memref_squeeze %272 : memref<1x128xf32, #tpu.memory_space<any>> -> memref<128xf32, #tpu.memory_space<any>>
    %c0_i32_204 = arith.constant 0 : i32
    %274 = tpu.memref_slice %arg8[%c4_i32_200, %c0_i32_204] : memref<16x128xf32, #tpu.memory_space<vmem>> -> memref<1x128xf32, #tpu.memory_space<vmem>>
    %275 = tpu.memref_squeeze %274 : memref<1x128xf32, #tpu.memory_space<vmem>> -> memref<128xf32, #tpu.memory_space<vmem>>
    %276 = tpu.memref_slice %arg10[%c0_i32_201, %c4_i32_202] : memref<2x16x!tpu.dma_semaphore, #tpu.memory_space<semaphore_mem>> -> memref<1x1x!tpu.dma_semaphore, #tpu.memory_space<semaphore_mem>>
    %277 = tpu.memref_squeeze %276 : memref<1x1x!tpu.dma_semaphore, #tpu.memory_space<semaphore_mem>> -> memref<!tpu.dma_semaphore, #tpu.memory_space<semaphore_mem>>
    tpu.wait_dma2 semaphore(%277 : memref<!tpu.dma_semaphore, #tpu.memory_space<semaphore_mem>>) src(%273 : memref<128xf32, #tpu.memory_space<any>>) dst(%275 : memref<128xf32, #tpu.memory_space<vmem>>)
    %c4_i32_205 = arith.constant 4 : i32
    %c1_i32_206 = arith.constant 1 : i32
    %c4_i32_207 = arith.constant 4 : i32
    %c0_i32_208 = arith.constant 0 : i32
    %278 = tpu.memref_slice %arg4[%9, %c0_i32_208] : memref<16x128xf32, #tpu.memory_space<any>> -> memref<1x128xf32, #tpu.memory_space<any>>
    %279 = tpu.memref_squeeze %278 : memref<1x128xf32, #tpu.memory_space<any>> -> memref<128xf32, #tpu.memory_space<any>>
    %c0_i32_209 = arith.constant 0 : i32
    %280 = tpu.memref_slice %arg9[%c4_i32_205, %c0_i32_209] : memref<16x128xf32, #tpu.memory_space<vmem>> -> memref<1x128xf32, #tpu.memory_space<vmem>>
    %281 = tpu.memref_squeeze %280 : memref<1x128xf32, #tpu.memory_space<vmem>> -> memref<128xf32, #tpu.memory_space<vmem>>
    %282 = tpu.memref_slice %arg10[%c1_i32_206, %c4_i32_207] : memref<2x16x!tpu.dma_semaphore, #tpu.memory_space<semaphore_mem>> -> memref<1x1x!tpu.dma_semaphore, #tpu.memory_space<semaphore_mem>>
    %283 = tpu.memref_squeeze %282 : memref<1x1x!tpu.dma_semaphore, #tpu.memory_space<semaphore_mem>> -> memref<!tpu.dma_semaphore, #tpu.memory_space<semaphore_mem>>
    tpu.wait_dma2 semaphore(%283 : memref<!tpu.dma_semaphore, #tpu.memory_space<semaphore_mem>>) src(%279 : memref<128xf32, #tpu.memory_space<any>>) dst(%281 : memref<128xf32, #tpu.memory_space<vmem>>)
    %c5_i32_210 = arith.constant 5 : i32
    %c0_i32_211 = arith.constant 0 : i32
    %c5_i32_212 = arith.constant 5 : i32
    %c0_i32_213 = arith.constant 0 : i32
    %284 = tpu.memref_slice %arg3[%10, %c0_i32_213] : memref<3072x128xf32, #tpu.memory_space<any>> -> memref<1x128xf32, #tpu.memory_space<any>>
    %285 = tpu.memref_squeeze %284 : memref<1x128xf32, #tpu.memory_space<any>> -> memref<128xf32, #tpu.memory_space<any>>
    %c0_i32_214 = arith.constant 0 : i32
    %286 = tpu.memref_slice %arg8[%c5_i32_210, %c0_i32_214] : memref<16x128xf32, #tpu.memory_space<vmem>> -> memref<1x128xf32, #tpu.memory_space<vmem>>
    %287 = tpu.memref_squeeze %286 : memref<1x128xf32, #tpu.memory_space<vmem>> -> memref<128xf32, #tpu.memory_space<vmem>>
    %288 = tpu.memref_slice %arg10[%c0_i32_211, %c5_i32_212] : memref<2x16x!tpu.dma_semaphore, #tpu.memory_space<semaphore_mem>> -> memref<1x1x!tpu.dma_semaphore, #tpu.memory_space<semaphore_mem>>
    %289 = tpu.memref_squeeze %288 : memref<1x1x!tpu.dma_semaphore, #tpu.memory_space<semaphore_mem>> -> memref<!tpu.dma_semaphore, #tpu.memory_space<semaphore_mem>>
    tpu.wait_dma2 semaphore(%289 : memref<!tpu.dma_semaphore, #tpu.memory_space<semaphore_mem>>) src(%285 : memref<128xf32, #tpu.memory_space<any>>) dst(%287 : memref<128xf32, #tpu.memory_space<vmem>>)
    %c5_i32_215 = arith.constant 5 : i32
    %c1_i32_216 = arith.constant 1 : i32
    %c5_i32_217 = arith.constant 5 : i32
    %c0_i32_218 = arith.constant 0 : i32
    %290 = tpu.memref_slice %arg4[%11, %c0_i32_218] : memref<16x128xf32, #tpu.memory_space<any>> -> memref<1x128xf32, #tpu.memory_space<any>>
    %291 = tpu.memref_squeeze %290 : memref<1x128xf32, #tpu.memory_space<any>> -> memref<128xf32, #tpu.memory_space<any>>
    %c0_i32_219 = arith.constant 0 : i32
    %292 = tpu.memref_slice %arg9[%c5_i32_215, %c0_i32_219] : memref<16x128xf32, #tpu.memory_space<vmem>> -> memref<1x128xf32, #tpu.memory_space<vmem>>
    %293 = tpu.memref_squeeze %292 : memref<1x128xf32, #tpu.memory_space<vmem>> -> memref<128xf32, #tpu.memory_space<vmem>>
    %294 = tpu.memref_slice %arg10[%c1_i32_216, %c5_i32_217] : memref<2x16x!tpu.dma_semaphore, #tpu.memory_space<semaphore_mem>> -> memref<1x1x!tpu.dma_semaphore, #tpu.memory_space<semaphore_mem>>
    %295 = tpu.memref_squeeze %294 : memref<1x1x!tpu.dma_semaphore, #tpu.memory_space<semaphore_mem>> -> memref<!tpu.dma_semaphore, #tpu.memory_space<semaphore_mem>>
    tpu.wait_dma2 semaphore(%295 : memref<!tpu.dma_semaphore, #tpu.memory_space<semaphore_mem>>) src(%291 : memref<128xf32, #tpu.memory_space<any>>) dst(%293 : memref<128xf32, #tpu.memory_space<vmem>>)
    %c6_i32_220 = arith.constant 6 : i32
    %c0_i32_221 = arith.constant 0 : i32
    %c6_i32_222 = arith.constant 6 : i32
    %c0_i32_223 = arith.constant 0 : i32
    %296 = tpu.memref_slice %arg3[%12, %c0_i32_223] : memref<3072x128xf32, #tpu.memory_space<any>> -> memref<1x128xf32, #tpu.memory_space<any>>
    %297 = tpu.memref_squeeze %296 : memref<1x128xf32, #tpu.memory_space<any>> -> memref<128xf32, #tpu.memory_space<any>>
    %c0_i32_224 = arith.constant 0 : i32
    %298 = tpu.memref_slice %arg8[%c6_i32_220, %c0_i32_224] : memref<16x128xf32, #tpu.memory_space<vmem>> -> memref<1x128xf32, #tpu.memory_space<vmem>>
    %299 = tpu.memref_squeeze %298 : memref<1x128xf32, #tpu.memory_space<vmem>> -> memref<128xf32, #tpu.memory_space<vmem>>
    %300 = tpu.memref_slice %arg10[%c0_i32_221, %c6_i32_222] : memref<2x16x!tpu.dma_semaphore, #tpu.memory_space<semaphore_mem>> -> memref<1x1x!tpu.dma_semaphore, #tpu.memory_space<semaphore_mem>>
    %301 = tpu.memref_squeeze %300 : memref<1x1x!tpu.dma_semaphore, #tpu.memory_space<semaphore_mem>> -> memref<!tpu.dma_semaphore, #tpu.memory_space<semaphore_mem>>
    tpu.wait_dma2 semaphore(%301 : memref<!tpu.dma_semaphore, #tpu.memory_space<semaphore_mem>>) src(%297 : memref<128xf32, #tpu.memory_space<any>>) dst(%299 : memref<128xf32, #tpu.memory_space<vmem>>)
    %c6_i32_225 = arith.constant 6 : i32
    %c1_i32_226 = arith.constant 1 : i32
    %c6_i32_227 = arith.constant 6 : i32
    %c0_i32_228 = arith.constant 0 : i32
    %302 = tpu.memref_slice %arg4[%13, %c0_i32_228] : memref<16x128xf32, #tpu.memory_space<any>> -> memref<1x128xf32, #tpu.memory_space<any>>
    %303 = tpu.memref_squeeze %302 : memref<1x128xf32, #tpu.memory_space<any>> -> memref<128xf32, #tpu.memory_space<any>>
    %c0_i32_229 = arith.constant 0 : i32
    %304 = tpu.memref_slice %arg9[%c6_i32_225, %c0_i32_229] : memref<16x128xf32, #tpu.memory_space<vmem>> -> memref<1x128xf32, #tpu.memory_space<vmem>>
    %305 = tpu.memref_squeeze %304 : memref<1x128xf32, #tpu.memory_space<vmem>> -> memref<128xf32, #tpu.memory_space<vmem>>
    %306 = tpu.memref_slice %arg10[%c1_i32_226, %c6_i32_227] : memref<2x16x!tpu.dma_semaphore, #tpu.memory_space<semaphore_mem>> -> memref<1x1x!tpu.dma_semaphore, #tpu.memory_space<semaphore_mem>>
    %307 = tpu.memref_squeeze %306 : memref<1x1x!tpu.dma_semaphore, #tpu.memory_space<semaphore_mem>> -> memref<!tpu.dma_semaphore, #tpu.memory_space<semaphore_mem>>
    tpu.wait_dma2 semaphore(%307 : memref<!tpu.dma_semaphore, #tpu.memory_space<semaphore_mem>>) src(%303 : memref<128xf32, #tpu.memory_space<any>>) dst(%305 : memref<128xf32, #tpu.memory_space<vmem>>)
    %c7_i32_230 = arith.constant 7 : i32
    %c0_i32_231 = arith.constant 0 : i32
    %c7_i32_232 = arith.constant 7 : i32
    %c0_i32_233 = arith.constant 0 : i32
    %308 = tpu.memref_slice %arg3[%14, %c0_i32_233] : memref<3072x128xf32, #tpu.memory_space<any>> -> memref<1x128xf32, #tpu.memory_space<any>>
    %309 = tpu.memref_squeeze %308 : memref<1x128xf32, #tpu.memory_space<any>> -> memref<128xf32, #tpu.memory_space<any>>
    %c0_i32_234 = arith.constant 0 : i32
    %310 = tpu.memref_slice %arg8[%c7_i32_230, %c0_i32_234] : memref<16x128xf32, #tpu.memory_space<vmem>> -> memref<1x128xf32, #tpu.memory_space<vmem>>
    %311 = tpu.memref_squeeze %310 : memref<1x128xf32, #tpu.memory_space<vmem>> -> memref<128xf32, #tpu.memory_space<vmem>>
    %312 = tpu.memref_slice %arg10[%c0_i32_231, %c7_i32_232] : memref<2x16x!tpu.dma_semaphore, #tpu.memory_space<semaphore_mem>> -> memref<1x1x!tpu.dma_semaphore, #tpu.memory_space<semaphore_mem>>
    %313 = tpu.memref_squeeze %312 : memref<1x1x!tpu.dma_semaphore, #tpu.memory_space<semaphore_mem>> -> memref<!tpu.dma_semaphore, #tpu.memory_space<semaphore_mem>>
    tpu.wait_dma2 semaphore(%313 : memref<!tpu.dma_semaphore, #tpu.memory_space<semaphore_mem>>) src(%309 : memref<128xf32, #tpu.memory_space<any>>) dst(%311 : memref<128xf32, #tpu.memory_space<vmem>>)
    %c7_i32_235 = arith.constant 7 : i32
    %c1_i32_236 = arith.constant 1 : i32
    %c7_i32_237 = arith.constant 7 : i32
    %c0_i32_238 = arith.constant 0 : i32
    %314 = tpu.memref_slice %arg4[%15, %c0_i32_238] : memref<16x128xf32, #tpu.memory_space<any>> -> memref<1x128xf32, #tpu.memory_space<any>>
    %315 = tpu.memref_squeeze %314 : memref<1x128xf32, #tpu.memory_space<any>> -> memref<128xf32, #tpu.memory_space<any>>
    %c0_i32_239 = arith.constant 0 : i32
    %316 = tpu.memref_slice %arg9[%c7_i32_235, %c0_i32_239] : memref<16x128xf32, #tpu.memory_space<vmem>> -> memref<1x128xf32, #tpu.memory_space<vmem>>
    %317 = tpu.memref_squeeze %316 : memref<1x128xf32, #tpu.memory_space<vmem>> -> memref<128xf32, #tpu.memory_space<vmem>>
    %318 = tpu.memref_slice %arg10[%c1_i32_236, %c7_i32_237] : memref<2x16x!tpu.dma_semaphore, #tpu.memory_space<semaphore_mem>> -> memref<1x1x!tpu.dma_semaphore, #tpu.memory_space<semaphore_mem>>
    %319 = tpu.memref_squeeze %318 : memref<1x1x!tpu.dma_semaphore, #tpu.memory_space<semaphore_mem>> -> memref<!tpu.dma_semaphore, #tpu.memory_space<semaphore_mem>>
    tpu.wait_dma2 semaphore(%319 : memref<!tpu.dma_semaphore, #tpu.memory_space<semaphore_mem>>) src(%315 : memref<128xf32, #tpu.memory_space<any>>) dst(%317 : memref<128xf32, #tpu.memory_space<vmem>>)
    %c8_i32_240 = arith.constant 8 : i32
    %c0_i32_241 = arith.constant 0 : i32
    %c8_i32_242 = arith.constant 8 : i32
    %c0_i32_243 = arith.constant 0 : i32
    %320 = tpu.memref_slice %arg3[%16, %c0_i32_243] : memref<3072x128xf32, #tpu.memory_space<any>> -> memref<1x128xf32, #tpu.memory_space<any>>
    %321 = tpu.memref_squeeze %320 : memref<1x128xf32, #tpu.memory_space<any>> -> memref<128xf32, #tpu.memory_space<any>>
    %c0_i32_244 = arith.constant 0 : i32
    %322 = tpu.memref_slice %arg8[%c8_i32_240, %c0_i32_244] : memref<16x128xf32, #tpu.memory_space<vmem>> -> memref<1x128xf32, #tpu.memory_space<vmem>>
    %323 = tpu.memref_squeeze %322 : memref<1x128xf32, #tpu.memory_space<vmem>> -> memref<128xf32, #tpu.memory_space<vmem>>
    %324 = tpu.memref_slice %arg10[%c0_i32_241, %c8_i32_242] : memref<2x16x!tpu.dma_semaphore, #tpu.memory_space<semaphore_mem>> -> memref<1x1x!tpu.dma_semaphore, #tpu.memory_space<semaphore_mem>>
    %325 = tpu.memref_squeeze %324 : memref<1x1x!tpu.dma_semaphore, #tpu.memory_space<semaphore_mem>> -> memref<!tpu.dma_semaphore, #tpu.memory_space<semaphore_mem>>
    tpu.wait_dma2 semaphore(%325 : memref<!tpu.dma_semaphore, #tpu.memory_space<semaphore_mem>>) src(%321 : memref<128xf32, #tpu.memory_space<any>>) dst(%323 : memref<128xf32, #tpu.memory_space<vmem>>)
    %c8_i32_245 = arith.constant 8 : i32
    %c1_i32_246 = arith.constant 1 : i32
    %c8_i32_247 = arith.constant 8 : i32
    %c0_i32_248 = arith.constant 0 : i32
    %326 = tpu.memref_slice %arg4[%17, %c0_i32_248] : memref<16x128xf32, #tpu.memory_space<any>> -> memref<1x128xf32, #tpu.memory_space<any>>
    %327 = tpu.memref_squeeze %326 : memref<1x128xf32, #tpu.memory_space<any>> -> memref<128xf32, #tpu.memory_space<any>>
    %c0_i32_249 = arith.constant 0 : i32
    %328 = tpu.memref_slice %arg9[%c8_i32_245, %c0_i32_249] : memref<16x128xf32, #tpu.memory_space<vmem>> -> memref<1x128xf32, #tpu.memory_space<vmem>>
    %329 = tpu.memref_squeeze %328 : memref<1x128xf32, #tpu.memory_space<vmem>> -> memref<128xf32, #tpu.memory_space<vmem>>
    %330 = tpu.memref_slice %arg10[%c1_i32_246, %c8_i32_247] : memref<2x16x!tpu.dma_semaphore, #tpu.memory_space<semaphore_mem>> -> memref<1x1x!tpu.dma_semaphore, #tpu.memory_space<semaphore_mem>>
    %331 = tpu.memref_squeeze %330 : memref<1x1x!tpu.dma_semaphore, #tpu.memory_space<semaphore_mem>> -> memref<!tpu.dma_semaphore, #tpu.memory_space<semaphore_mem>>
    tpu.wait_dma2 semaphore(%331 : memref<!tpu.dma_semaphore, #tpu.memory_space<semaphore_mem>>) src(%327 : memref<128xf32, #tpu.memory_space<any>>) dst(%329 : memref<128xf32, #tpu.memory_space<vmem>>)
    %c9_i32_250 = arith.constant 9 : i32
    %c0_i32_251 = arith.constant 0 : i32
    %c9_i32_252 = arith.constant 9 : i32
    %c0_i32_253 = arith.constant 0 : i32
    %332 = tpu.memref_slice %arg3[%18, %c0_i32_253] : memref<3072x128xf32, #tpu.memory_space<any>> -> memref<1x128xf32, #tpu.memory_space<any>>
    %333 = tpu.memref_squeeze %332 : memref<1x128xf32, #tpu.memory_space<any>> -> memref<128xf32, #tpu.memory_space<any>>
    %c0_i32_254 = arith.constant 0 : i32
    %334 = tpu.memref_slice %arg8[%c9_i32_250, %c0_i32_254] : memref<16x128xf32, #tpu.memory_space<vmem>> -> memref<1x128xf32, #tpu.memory_space<vmem>>
    %335 = tpu.memref_squeeze %334 : memref<1x128xf32, #tpu.memory_space<vmem>> -> memref<128xf32, #tpu.memory_space<vmem>>
    %336 = tpu.memref_slice %arg10[%c0_i32_251, %c9_i32_252] : memref<2x16x!tpu.dma_semaphore, #tpu.memory_space<semaphore_mem>> -> memref<1x1x!tpu.dma_semaphore, #tpu.memory_space<semaphore_mem>>
    %337 = tpu.memref_squeeze %336 : memref<1x1x!tpu.dma_semaphore, #tpu.memory_space<semaphore_mem>> -> memref<!tpu.dma_semaphore, #tpu.memory_space<semaphore_mem>>
    tpu.wait_dma2 semaphore(%337 : memref<!tpu.dma_semaphore, #tpu.memory_space<semaphore_mem>>) src(%333 : memref<128xf32, #tpu.memory_space<any>>) dst(%335 : memref<128xf32, #tpu.memory_space<vmem>>)
    %c9_i32_255 = arith.constant 9 : i32
    %c1_i32_256 = arith.constant 1 : i32
    %c9_i32_257 = arith.constant 9 : i32
    %c0_i32_258 = arith.constant 0 : i32
    %338 = tpu.memref_slice %arg4[%19, %c0_i32_258] : memref<16x128xf32, #tpu.memory_space<any>> -> memref<1x128xf32, #tpu.memory_space<any>>
    %339 = tpu.memref_squeeze %338 : memref<1x128xf32, #tpu.memory_space<any>> -> memref<128xf32, #tpu.memory_space<any>>
    %c0_i32_259 = arith.constant 0 : i32
    %340 = tpu.memref_slice %arg9[%c9_i32_255, %c0_i32_259] : memref<16x128xf32, #tpu.memory_space<vmem>> -> memref<1x128xf32, #tpu.memory_space<vmem>>
    %341 = tpu.memref_squeeze %340 : memref<1x128xf32, #tpu.memory_space<vmem>> -> memref<128xf32, #tpu.memory_space<vmem>>
    %342 = tpu.memref_slice %arg10[%c1_i32_256, %c9_i32_257] : memref<2x16x!tpu.dma_semaphore, #tpu.memory_space<semaphore_mem>> -> memref<1x1x!tpu.dma_semaphore, #tpu.memory_space<semaphore_mem>>
    %343 = tpu.memref_squeeze %342 : memref<1x1x!tpu.dma_semaphore, #tpu.memory_space<semaphore_mem>> -> memref<!tpu.dma_semaphore, #tpu.memory_space<semaphore_mem>>
    tpu.wait_dma2 semaphore(%343 : memref<!tpu.dma_semaphore, #tpu.memory_space<semaphore_mem>>) src(%339 : memref<128xf32, #tpu.memory_space<any>>) dst(%341 : memref<128xf32, #tpu.memory_space<vmem>>)
    %c10_i32_260 = arith.constant 10 : i32
    %c0_i32_261 = arith.constant 0 : i32
    %c10_i32_262 = arith.constant 10 : i32
    %c0_i32_263 = arith.constant 0 : i32
    %344 = tpu.memref_slice %arg3[%20, %c0_i32_263] : memref<3072x128xf32, #tpu.memory_space<any>> -> memref<1x128xf32, #tpu.memory_space<any>>
    %345 = tpu.memref_squeeze %344 : memref<1x128xf32, #tpu.memory_space<any>> -> memref<128xf32, #tpu.memory_space<any>>
    %c0_i32_264 = arith.constant 0 : i32
    %346 = tpu.memref_slice %arg8[%c10_i32_260, %c0_i32_264] : memref<16x128xf32, #tpu.memory_space<vmem>> -> memref<1x128xf32, #tpu.memory_space<vmem>>
    %347 = tpu.memref_squeeze %346 : memref<1x128xf32, #tpu.memory_space<vmem>> -> memref<128xf32, #tpu.memory_space<vmem>>
    %348 = tpu.memref_slice %arg10[%c0_i32_261, %c10_i32_262] : memref<2x16x!tpu.dma_semaphore, #tpu.memory_space<semaphore_mem>> -> memref<1x1x!tpu.dma_semaphore, #tpu.memory_space<semaphore_mem>>
    %349 = tpu.memref_squeeze %348 : memref<1x1x!tpu.dma_semaphore, #tpu.memory_space<semaphore_mem>> -> memref<!tpu.dma_semaphore, #tpu.memory_space<semaphore_mem>>
    tpu.wait_dma2 semaphore(%349 : memref<!tpu.dma_semaphore, #tpu.memory_space<semaphore_mem>>) src(%345 : memref<128xf32, #tpu.memory_space<any>>) dst(%347 : memref<128xf32, #tpu.memory_space<vmem>>)
    %c10_i32_265 = arith.constant 10 : i32
    %c1_i32_266 = arith.constant 1 : i32
    %c10_i32_267 = arith.constant 10 : i32
    %c0_i32_268 = arith.constant 0 : i32
    %350 = tpu.memref_slice %arg4[%21, %c0_i32_268] : memref<16x128xf32, #tpu.memory_space<any>> -> memref<1x128xf32, #tpu.memory_space<any>>
    %351 = tpu.memref_squeeze %350 : memref<1x128xf32, #tpu.memory_space<any>> -> memref<128xf32, #tpu.memory_space<any>>
    %c0_i32_269 = arith.constant 0 : i32
    %352 = tpu.memref_slice %arg9[%c10_i32_265, %c0_i32_269] : memref<16x128xf32, #tpu.memory_space<vmem>> -> memref<1x128xf32, #tpu.memory_space<vmem>>
    %353 = tpu.memref_squeeze %352 : memref<1x128xf32, #tpu.memory_space<vmem>> -> memref<128xf32, #tpu.memory_space<vmem>>
    %354 = tpu.memref_slice %arg10[%c1_i32_266, %c10_i32_267] : memref<2x16x!tpu.dma_semaphore, #tpu.memory_space<semaphore_mem>> -> memref<1x1x!tpu.dma_semaphore, #tpu.memory_space<semaphore_mem>>
    %355 = tpu.memref_squeeze %354 : memref<1x1x!tpu.dma_semaphore, #tpu.memory_space<semaphore_mem>> -> memref<!tpu.dma_semaphore, #tpu.memory_space<semaphore_mem>>
    tpu.wait_dma2 semaphore(%355 : memref<!tpu.dma_semaphore, #tpu.memory_space<semaphore_mem>>) src(%351 : memref<128xf32, #tpu.memory_space<any>>) dst(%353 : memref<128xf32, #tpu.memory_space<vmem>>)
    %c11_i32_270 = arith.constant 11 : i32
    %c0_i32_271 = arith.constant 0 : i32
    %c11_i32_272 = arith.constant 11 : i32
    %c0_i32_273 = arith.constant 0 : i32
    %356 = tpu.memref_slice %arg3[%22, %c0_i32_273] : memref<3072x128xf32, #tpu.memory_space<any>> -> memref<1x128xf32, #tpu.memory_space<any>>
    %357 = tpu.memref_squeeze %356 : memref<1x128xf32, #tpu.memory_space<any>> -> memref<128xf32, #tpu.memory_space<any>>
    %c0_i32_274 = arith.constant 0 : i32
    %358 = tpu.memref_slice %arg8[%c11_i32_270, %c0_i32_274] : memref<16x128xf32, #tpu.memory_space<vmem>> -> memref<1x128xf32, #tpu.memory_space<vmem>>
    %359 = tpu.memref_squeeze %358 : memref<1x128xf32, #tpu.memory_space<vmem>> -> memref<128xf32, #tpu.memory_space<vmem>>
    %360 = tpu.memref_slice %arg10[%c0_i32_271, %c11_i32_272] : memref<2x16x!tpu.dma_semaphore, #tpu.memory_space<semaphore_mem>> -> memref<1x1x!tpu.dma_semaphore, #tpu.memory_space<semaphore_mem>>
    %361 = tpu.memref_squeeze %360 : memref<1x1x!tpu.dma_semaphore, #tpu.memory_space<semaphore_mem>> -> memref<!tpu.dma_semaphore, #tpu.memory_space<semaphore_mem>>
    tpu.wait_dma2 semaphore(%361 : memref<!tpu.dma_semaphore, #tpu.memory_space<semaphore_mem>>) src(%357 : memref<128xf32, #tpu.memory_space<any>>) dst(%359 : memref<128xf32, #tpu.memory_space<vmem>>)
    %c11_i32_275 = arith.constant 11 : i32
    %c1_i32_276 = arith.constant 1 : i32
    %c11_i32_277 = arith.constant 11 : i32
    %c0_i32_278 = arith.constant 0 : i32
    %362 = tpu.memref_slice %arg4[%23, %c0_i32_278] : memref<16x128xf32, #tpu.memory_space<any>> -> memref<1x128xf32, #tpu.memory_space<any>>
    %363 = tpu.memref_squeeze %362 : memref<1x128xf32, #tpu.memory_space<any>> -> memref<128xf32, #tpu.memory_space<any>>
    %c0_i32_279 = arith.constant 0 : i32
    %364 = tpu.memref_slice %arg9[%c11_i32_275, %c0_i32_279] : memref<16x128xf32, #tpu.memory_space<vmem>> -> memref<1x128xf32, #tpu.memory_space<vmem>>
    %365 = tpu.memref_squeeze %364 : memref<1x128xf32, #tpu.memory_space<vmem>> -> memref<128xf32, #tpu.memory_space<vmem>>
    %366 = tpu.memref_slice %arg10[%c1_i32_276, %c11_i32_277] : memref<2x16x!tpu.dma_semaphore, #tpu.memory_space<semaphore_mem>> -> memref<1x1x!tpu.dma_semaphore, #tpu.memory_space<semaphore_mem>>
    %367 = tpu.memref_squeeze %366 : memref<1x1x!tpu.dma_semaphore, #tpu.memory_space<semaphore_mem>> -> memref<!tpu.dma_semaphore, #tpu.memory_space<semaphore_mem>>
    tpu.wait_dma2 semaphore(%367 : memref<!tpu.dma_semaphore, #tpu.memory_space<semaphore_mem>>) src(%363 : memref<128xf32, #tpu.memory_space<any>>) dst(%365 : memref<128xf32, #tpu.memory_space<vmem>>)
    %c12_i32_280 = arith.constant 12 : i32
    %c0_i32_281 = arith.constant 0 : i32
    %c12_i32_282 = arith.constant 12 : i32
    %c0_i32_283 = arith.constant 0 : i32
    %368 = tpu.memref_slice %arg3[%24, %c0_i32_283] : memref<3072x128xf32, #tpu.memory_space<any>> -> memref<1x128xf32, #tpu.memory_space<any>>
    %369 = tpu.memref_squeeze %368 : memref<1x128xf32, #tpu.memory_space<any>> -> memref<128xf32, #tpu.memory_space<any>>
    %c0_i32_284 = arith.constant 0 : i32
    %370 = tpu.memref_slice %arg8[%c12_i32_280, %c0_i32_284] : memref<16x128xf32, #tpu.memory_space<vmem>> -> memref<1x128xf32, #tpu.memory_space<vmem>>
    %371 = tpu.memref_squeeze %370 : memref<1x128xf32, #tpu.memory_space<vmem>> -> memref<128xf32, #tpu.memory_space<vmem>>
    %372 = tpu.memref_slice %arg10[%c0_i32_281, %c12_i32_282] : memref<2x16x!tpu.dma_semaphore, #tpu.memory_space<semaphore_mem>> -> memref<1x1x!tpu.dma_semaphore, #tpu.memory_space<semaphore_mem>>
    %373 = tpu.memref_squeeze %372 : memref<1x1x!tpu.dma_semaphore, #tpu.memory_space<semaphore_mem>> -> memref<!tpu.dma_semaphore, #tpu.memory_space<semaphore_mem>>
    tpu.wait_dma2 semaphore(%373 : memref<!tpu.dma_semaphore, #tpu.memory_space<semaphore_mem>>) src(%369 : memref<128xf32, #tpu.memory_space<any>>) dst(%371 : memref<128xf32, #tpu.memory_space<vmem>>)
    %c12_i32_285 = arith.constant 12 : i32
    %c1_i32_286 = arith.constant 1 : i32
    %c12_i32_287 = arith.constant 12 : i32
    %c0_i32_288 = arith.constant 0 : i32
    %374 = tpu.memref_slice %arg4[%25, %c0_i32_288] : memref<16x128xf32, #tpu.memory_space<any>> -> memref<1x128xf32, #tpu.memory_space<any>>
    %375 = tpu.memref_squeeze %374 : memref<1x128xf32, #tpu.memory_space<any>> -> memref<128xf32, #tpu.memory_space<any>>
    %c0_i32_289 = arith.constant 0 : i32
    %376 = tpu.memref_slice %arg9[%c12_i32_285, %c0_i32_289] : memref<16x128xf32, #tpu.memory_space<vmem>> -> memref<1x128xf32, #tpu.memory_space<vmem>>
    %377 = tpu.memref_squeeze %376 : memref<1x128xf32, #tpu.memory_space<vmem>> -> memref<128xf32, #tpu.memory_space<vmem>>
    %378 = tpu.memref_slice %arg10[%c1_i32_286, %c12_i32_287] : memref<2x16x!tpu.dma_semaphore, #tpu.memory_space<semaphore_mem>> -> memref<1x1x!tpu.dma_semaphore, #tpu.memory_space<semaphore_mem>>
    %379 = tpu.memref_squeeze %378 : memref<1x1x!tpu.dma_semaphore, #tpu.memory_space<semaphore_mem>> -> memref<!tpu.dma_semaphore, #tpu.memory_space<semaphore_mem>>
    tpu.wait_dma2 semaphore(%379 : memref<!tpu.dma_semaphore, #tpu.memory_space<semaphore_mem>>) src(%375 : memref<128xf32, #tpu.memory_space<any>>) dst(%377 : memref<128xf32, #tpu.memory_space<vmem>>)
    %c13_i32_290 = arith.constant 13 : i32
    %c0_i32_291 = arith.constant 0 : i32
    %c13_i32_292 = arith.constant 13 : i32
    %c0_i32_293 = arith.constant 0 : i32
    %380 = tpu.memref_slice %arg3[%26, %c0_i32_293] : memref<3072x128xf32, #tpu.memory_space<any>> -> memref<1x128xf32, #tpu.memory_space<any>>
    %381 = tpu.memref_squeeze %380 : memref<1x128xf32, #tpu.memory_space<any>> -> memref<128xf32, #tpu.memory_space<any>>
    %c0_i32_294 = arith.constant 0 : i32
    %382 = tpu.memref_slice %arg8[%c13_i32_290, %c0_i32_294] : memref<16x128xf32, #tpu.memory_space<vmem>> -> memref<1x128xf32, #tpu.memory_space<vmem>>
    %383 = tpu.memref_squeeze %382 : memref<1x128xf32, #tpu.memory_space<vmem>> -> memref<128xf32, #tpu.memory_space<vmem>>
    %384 = tpu.memref_slice %arg10[%c0_i32_291, %c13_i32_292] : memref<2x16x!tpu.dma_semaphore, #tpu.memory_space<semaphore_mem>> -> memref<1x1x!tpu.dma_semaphore, #tpu.memory_space<semaphore_mem>>
    %385 = tpu.memref_squeeze %384 : memref<1x1x!tpu.dma_semaphore, #tpu.memory_space<semaphore_mem>> -> memref<!tpu.dma_semaphore, #tpu.memory_space<semaphore_mem>>
    tpu.wait_dma2 semaphore(%385 : memref<!tpu.dma_semaphore, #tpu.memory_space<semaphore_mem>>) src(%381 : memref<128xf32, #tpu.memory_space<any>>) dst(%383 : memref<128xf32, #tpu.memory_space<vmem>>)
    %c13_i32_295 = arith.constant 13 : i32
    %c1_i32_296 = arith.constant 1 : i32
    %c13_i32_297 = arith.constant 13 : i32
    %c0_i32_298 = arith.constant 0 : i32
    %386 = tpu.memref_slice %arg4[%27, %c0_i32_298] : memref<16x128xf32, #tpu.memory_space<any>> -> memref<1x128xf32, #tpu.memory_space<any>>
    %387 = tpu.memref_squeeze %386 : memref<1x128xf32, #tpu.memory_space<any>> -> memref<128xf32, #tpu.memory_space<any>>
    %c0_i32_299 = arith.constant 0 : i32
    %388 = tpu.memref_slice %arg9[%c13_i32_295, %c0_i32_299] : memref<16x128xf32, #tpu.memory_space<vmem>> -> memref<1x128xf32, #tpu.memory_space<vmem>>
    %389 = tpu.memref_squeeze %388 : memref<1x128xf32, #tpu.memory_space<vmem>> -> memref<128xf32, #tpu.memory_space<vmem>>
    %390 = tpu.memref_slice %arg10[%c1_i32_296, %c13_i32_297] : memref<2x16x!tpu.dma_semaphore, #tpu.memory_space<semaphore_mem>> -> memref<1x1x!tpu.dma_semaphore, #tpu.memory_space<semaphore_mem>>
    %391 = tpu.memref_squeeze %390 : memref<1x1x!tpu.dma_semaphore, #tpu.memory_space<semaphore_mem>> -> memref<!tpu.dma_semaphore, #tpu.memory_space<semaphore_mem>>
    tpu.wait_dma2 semaphore(%391 : memref<!tpu.dma_semaphore, #tpu.memory_space<semaphore_mem>>) src(%387 : memref<128xf32, #tpu.memory_space<any>>) dst(%389 : memref<128xf32, #tpu.memory_space<vmem>>)
    %c14_i32_300 = arith.constant 14 : i32
    %c0_i32_301 = arith.constant 0 : i32
    %c14_i32_302 = arith.constant 14 : i32
    %c0_i32_303 = arith.constant 0 : i32
    %392 = tpu.memref_slice %arg3[%28, %c0_i32_303] : memref<3072x128xf32, #tpu.memory_space<any>> -> memref<1x128xf32, #tpu.memory_space<any>>
    %393 = tpu.memref_squeeze %392 : memref<1x128xf32, #tpu.memory_space<any>> -> memref<128xf32, #tpu.memory_space<any>>
    %c0_i32_304 = arith.constant 0 : i32
    %394 = tpu.memref_slice %arg8[%c14_i32_300, %c0_i32_304] : memref<16x128xf32, #tpu.memory_space<vmem>> -> memref<1x128xf32, #tpu.memory_space<vmem>>
    %395 = tpu.memref_squeeze %394 : memref<1x128xf32, #tpu.memory_space<vmem>> -> memref<128xf32, #tpu.memory_space<vmem>>
    %396 = tpu.memref_slice %arg10[%c0_i32_301, %c14_i32_302] : memref<2x16x!tpu.dma_semaphore, #tpu.memory_space<semaphore_mem>> -> memref<1x1x!tpu.dma_semaphore, #tpu.memory_space<semaphore_mem>>
    %397 = tpu.memref_squeeze %396 : memref<1x1x!tpu.dma_semaphore, #tpu.memory_space<semaphore_mem>> -> memref<!tpu.dma_semaphore, #tpu.memory_space<semaphore_mem>>
    tpu.wait_dma2 semaphore(%397 : memref<!tpu.dma_semaphore, #tpu.memory_space<semaphore_mem>>) src(%393 : memref<128xf32, #tpu.memory_space<any>>) dst(%395 : memref<128xf32, #tpu.memory_space<vmem>>)
    %c14_i32_305 = arith.constant 14 : i32
    %c1_i32_306 = arith.constant 1 : i32
    %c14_i32_307 = arith.constant 14 : i32
    %c0_i32_308 = arith.constant 0 : i32
    %398 = tpu.memref_slice %arg4[%29, %c0_i32_308] : memref<16x128xf32, #tpu.memory_space<any>> -> memref<1x128xf32, #tpu.memory_space<any>>
    %399 = tpu.memref_squeeze %398 : memref<1x128xf32, #tpu.memory_space<any>> -> memref<128xf32, #tpu.memory_space<any>>
    %c0_i32_309 = arith.constant 0 : i32
    %400 = tpu.memref_slice %arg9[%c14_i32_305, %c0_i32_309] : memref<16x128xf32, #tpu.memory_space<vmem>> -> memref<1x128xf32, #tpu.memory_space<vmem>>
    %401 = tpu.memref_squeeze %400 : memref<1x128xf32, #tpu.memory_space<vmem>> -> memref<128xf32, #tpu.memory_space<vmem>>
    %402 = tpu.memref_slice %arg10[%c1_i32_306, %c14_i32_307] : memref<2x16x!tpu.dma_semaphore, #tpu.memory_space<semaphore_mem>> -> memref<1x1x!tpu.dma_semaphore, #tpu.memory_space<semaphore_mem>>
    %403 = tpu.memref_squeeze %402 : memref<1x1x!tpu.dma_semaphore, #tpu.memory_space<semaphore_mem>> -> memref<!tpu.dma_semaphore, #tpu.memory_space<semaphore_mem>>
    tpu.wait_dma2 semaphore(%403 : memref<!tpu.dma_semaphore, #tpu.memory_space<semaphore_mem>>) src(%399 : memref<128xf32, #tpu.memory_space<any>>) dst(%401 : memref<128xf32, #tpu.memory_space<vmem>>)
    %c15_i32_310 = arith.constant 15 : i32
    %c0_i32_311 = arith.constant 0 : i32
    %c15_i32_312 = arith.constant 15 : i32
    %c0_i32_313 = arith.constant 0 : i32
    %404 = tpu.memref_slice %arg3[%30, %c0_i32_313] : memref<3072x128xf32, #tpu.memory_space<any>> -> memref<1x128xf32, #tpu.memory_space<any>>
    %405 = tpu.memref_squeeze %404 : memref<1x128xf32, #tpu.memory_space<any>> -> memref<128xf32, #tpu.memory_space<any>>
    %c0_i32_314 = arith.constant 0 : i32
    %406 = tpu.memref_slice %arg8[%c15_i32_310, %c0_i32_314] : memref<16x128xf32, #tpu.memory_space<vmem>> -> memref<1x128xf32, #tpu.memory_space<vmem>>
    %407 = tpu.memref_squeeze %406 : memref<1x128xf32, #tpu.memory_space<vmem>> -> memref<128xf32, #tpu.memory_space<vmem>>
    %408 = tpu.memref_slice %arg10[%c0_i32_311, %c15_i32_312] : memref<2x16x!tpu.dma_semaphore, #tpu.memory_space<semaphore_mem>> -> memref<1x1x!tpu.dma_semaphore, #tpu.memory_space<semaphore_mem>>
    %409 = tpu.memref_squeeze %408 : memref<1x1x!tpu.dma_semaphore, #tpu.memory_space<semaphore_mem>> -> memref<!tpu.dma_semaphore, #tpu.memory_space<semaphore_mem>>
    tpu.wait_dma2 semaphore(%409 : memref<!tpu.dma_semaphore, #tpu.memory_space<semaphore_mem>>) src(%405 : memref<128xf32, #tpu.memory_space<any>>) dst(%407 : memref<128xf32, #tpu.memory_space<vmem>>)
    %c15_i32_315 = arith.constant 15 : i32
    %c1_i32_316 = arith.constant 1 : i32
    %c15_i32_317 = arith.constant 15 : i32
    %c0_i32_318 = arith.constant 0 : i32
    %410 = tpu.memref_slice %arg4[%31, %c0_i32_318] : memref<16x128xf32, #tpu.memory_space<any>> -> memref<1x128xf32, #tpu.memory_space<any>>
    %411 = tpu.memref_squeeze %410 : memref<1x128xf32, #tpu.memory_space<any>> -> memref<128xf32, #tpu.memory_space<any>>
    %c0_i32_319 = arith.constant 0 : i32
    %412 = tpu.memref_slice %arg9[%c15_i32_315, %c0_i32_319] : memref<16x128xf32, #tpu.memory_space<vmem>> -> memref<1x128xf32, #tpu.memory_space<vmem>>
    %413 = tpu.memref_squeeze %412 : memref<1x128xf32, #tpu.memory_space<vmem>> -> memref<128xf32, #tpu.memory_space<vmem>>
    %414 = tpu.memref_slice %arg10[%c1_i32_316, %c15_i32_317] : memref<2x16x!tpu.dma_semaphore, #tpu.memory_space<semaphore_mem>> -> memref<1x1x!tpu.dma_semaphore, #tpu.memory_space<semaphore_mem>>
    %415 = tpu.memref_squeeze %414 : memref<1x1x!tpu.dma_semaphore, #tpu.memory_space<semaphore_mem>> -> memref<!tpu.dma_semaphore, #tpu.memory_space<semaphore_mem>>
    tpu.wait_dma2 semaphore(%415 : memref<!tpu.dma_semaphore, #tpu.memory_space<semaphore_mem>>) src(%411 : memref<128xf32, #tpu.memory_space<any>>) dst(%413 : memref<128xf32, #tpu.memory_space<vmem>>)
    %c0_320 = arith.constant 0 : index
    %c0_321 = arith.constant 0 : index
    %416 = vector.load %arg8[%c0_320, %c0_321] : memref<16x128xf32, #tpu.memory_space<vmem>>, vector<16x128xf32>
    %c0_322 = arith.constant 0 : index
    %c0_323 = arith.constant 0 : index
    %417 = vector.load %arg9[%c0_322, %c0_323] : memref<16x128xf32, #tpu.memory_space<vmem>>, vector<16x128xf32>
    %418 = arith.addf %416, %417 : vector<16x128xf32>
    %419 = arith.truncf %418 : vector<16x128xf32> to vector<16x128xbf16>
    %c0_324 = arith.constant 0 : index
    %c0_325 = arith.constant 0 : index
    %420 = vector.load %arg5[%c0_324, %c0_325] : memref<128x128xbf16, #tpu.memory_space<vmem>>, vector<128x128xbf16>
    %cst = arith.constant dense<0.000000e+00> : vector<16x128xf32>
    %421 = tpu.matmul %419, %420, %cst {dimension_numbers = #tpu.dot_dimension_numbers<[1], [0], [0], [1], [0, 0, 1, 1], [], []>} : vector<16x128xbf16>, vector<128x128xbf16>, vector<16x128xf32> -> vector<16x128xf32>
    %c0_326 = arith.constant 0 : index
    %c0_327 = arith.constant 0 : index
    %422 = vector.load %arg6[%c0_326, %c0_327] : memref<1x128xf32, #tpu.memory_space<vmem>>, vector<1x128xf32>
    %423 = vector.broadcast %422 : vector<1x128xf32> to vector<16x128xf32>
    %424 = arith.addf %421, %423 : vector<16x128xf32>
    %425 = vector.extract_strided_slice %424 {offsets = [0, 0], sizes = [8, 128], strides = [1, 1]} : vector<16x128xf32> to vector<8x128xf32>
    %426 = vector.extract_strided_slice %424 {offsets = [8, 0], sizes = [8, 128], strides = [1, 1]} : vector<16x128xf32> to vector<8x128xf32>
    %cst_328 = arith.constant 0.000000e+00 : f32
    %427 = vector.broadcast %cst_328 : f32 to vector<8x128xf32>
    %428 = arith.subf %427, %426 : vector<8x128xf32>
    %429 = arith.addf %425, %428 : vector<8x128xf32>
    %cst_329 = arith.constant 5.000000e-01 : f32
    %430 = vector.broadcast %cst_329 : f32 to vector<8x128xf32>
    %431 = arith.mulf %429, %430 : vector<8x128xf32>
    %c0_330 = arith.constant 0 : index
    %c0_331 = arith.constant 0 : index
    %432 = vector.load %arg7[%c0_330, %c0_331] : memref<8x128xf32, #tpu.memory_space<vmem>>, vector<8x128xf32>
    tpu.vector_store %arg7[%c0_330, %c0_331], %431 {strides = array<i32>} : memref<8x128xf32, #tpu.memory_space<vmem>>, vector<8x128xf32>,
    return
  }
  func.func @transform_2(%arg0: i32, %arg1: memref<16xi32, #tpu.memory_space<smem>>, %arg2: memref<16xi32, #tpu.memory_space<smem>>) -> (i32, i32) {
    %c0_i32 = arith.constant 0 : i32
    %c0_i32_0 = arith.constant 0 : i32
    %c0_i32_1 = arith.constant 0 : i32
    return %c0_i32, %c0_i32_0 : i32, i32
  }
  func.func @transform_3(%arg0: i32, %arg1: memref<16xi32, #tpu.memory_space<smem>>, %arg2: memref<16xi32, #tpu.memory_space<smem>>) -> (i32, i32) {
    %c0_i32 = arith.constant 0 : i32
    %c0_i32_0 = arith.constant 0 : i32
    %c0_i32_1 = arith.constant 0 : i32
    return %c0_i32, %c0_i32_0 : i32, i32
  }
  func.func @transform_4(%arg0: i32, %arg1: memref<16xi32, #tpu.memory_space<smem>>, %arg2: memref<16xi32, #tpu.memory_space<smem>>) -> (i32, i32) {
    %c0_i32 = arith.constant 0 : i32
    %c0_i32_0 = arith.constant 0 : i32
    %c0_i32_1 = arith.constant 0 : i32
    return %c0_i32, %c0_i32_0 : i32, i32
  }
}

module attributes {stable_mosaic.version = 11 : i64} {
  func.func @_scoring_kernel(%arg0: i32, %arg1: memref<8x128xbf16, #tpu.memory_space<vmem>>, %arg2: memref<128x512xbf16, #tpu.memory_space<vmem>>, %arg3: memref<8x512xf32, #tpu.memory_space<vmem>>) attributes {dimension_semantics = [#tpu.dimension_semantics<parallel>], iteration_bounds = array<i64: 6>, scalar_prefetch = 0 : i64, scratch_operands = 0 : i64, tpu.core_type = #tpu.core_type<tc>, window_params = [{pipeline_mode = #tpu.pipeline_mode<synchronous>, transform_indices = @transform_0, window_bounds = array<i64: 8, 128>}, {transform_indices = @transform_1, window_bounds = array<i64: 128, 512>}, {transform_indices = @transform_2, window_bounds = array<i64: 8, 512>}]} {
    %c0 = arith.constant 0 : index
    %c0_0 = arith.constant 0 : index
    %0 = vector.load %arg1[%c0, %c0_0] : memref<8x128xbf16, #tpu.memory_space<vmem>>, vector<8x128xbf16>
    %c0_1 = arith.constant 0 : index
    %c0_2 = arith.constant 0 : index
    %1 = vector.load %arg2[%c0_1, %c0_2] : memref<128x512xbf16, #tpu.memory_space<vmem>>, vector<128x512xbf16>
    %cst = arith.constant dense<0.000000e+00> : vector<8x512xf32>
    %2 = tpu.matmul %0, %1, %cst {dimension_numbers = #tpu.dot_dimension_numbers<[1], [0], [0], [1], [0, 0, 1, 1], [], []>} : vector<8x128xbf16>, vector<128x512xbf16>, vector<8x512xf32> -> vector<8x512xf32>
    %c0_3 = arith.constant 0 : index
    %c0_4 = arith.constant 0 : index
    %3 = vector.load %arg3[%c0_3, %c0_4] : memref<8x512xf32, #tpu.memory_space<vmem>>, vector<8x512xf32>
    tpu.vector_store %arg3[%c0_3, %c0_4], %2 {strides = array<i32>} : memref<8x512xf32, #tpu.memory_space<vmem>>, vector<8x512xf32>,
    return
  }
  func.func @transform_0(%arg0: i32) -> (i32, i32) {
    %c0_i32 = arith.constant 0 : i32
    %c0_i32_0 = arith.constant 0 : i32
    %c0_i32_1 = arith.constant 0 : i32
    return %c0_i32, %c0_i32_0 : i32, i32
  }
  func.func @transform_1(%arg0: i32) -> (i32, i32) {
    %c0_i32 = arith.constant 0 : i32
    %c0_i32_0 = arith.constant 0 : i32
    return %c0_i32, %arg0 : i32, i32
  }
  func.func @transform_2(%arg0: i32) -> (i32, i32) {
    %c0_i32 = arith.constant 0 : i32
    %c0_i32_0 = arith.constant 0 : i32
    return %c0_i32, %arg0 : i32, i32
  }
}

</mosaic_0001>

<llo_original>
// kernel: run_query.3
$region0: #{run_query.3}
  #allocation0 [shape = 'u32[]', space=smem, size = 0x4, offset = 0x4, fixed_abs, tag = 'smem constant byte address 0x4 - core index']
  #allocation1 [shape = 'u32[144,128]{1,0:T(1,128)}', space=vmem, size = 0x12000, scoped, tag = 'internal scratch']
  %s0 = inlined_call_operand.vmem [shape: bf16[8,128], index: 0, kind: input, shape index: {}]
  %s1 = inlined_call_operand.vmem [shape: bf16[128,3072], index: 1, kind: input, shape index: {}]
  %s2 = inlined_call_operand.hbm [shape: f32[8,3072], index: 2, kind: output, shape index: {}]
  %s3 = sld [smem:[#allocation0]]
  $region64: #{run_query.3} parent=0
    _
  %s5 = ssub.s32 1, %s3
  %s6 = scalar_select 0, %s5, %s3
  $region1: #{run_query.3} parent=0
    #allocation2 [shape = 'u8[262144]{0}', space=vmem, size = 0x40000, scoped, tag = 'input window, operand 1']
    #allocation3 [shape = 'u8[32768]{0}', space=vmem, size = 0x8000, scoped, tag = 'output window, operand 0']
    #allocation4 [shape = 's32[2]{0}', space=sflag, size = 0x8, scoped, tag = 'scoped memory for run_query.3']
    %7 = vsyncpa [#allocation4], 0
    %s8 = scalar_lea.sflag [#allocation4], 1
    %9 = vsyncpa %s8, 0
    loop: start=0, step=1, limit=8
    $region2: #{run_query.3} parent=1 // loop_pre_header
      _
    $region3: #{run_query.3} parent=1 // loop_header
      %s11 = sphi 0, %s15
      %p12 = scmp.ge.s32.totalorder %s11, 8
      %s19 = sphi 0, %s19
      %s21 = sphi 0, %s19
      %s22 = sphi 0, %s21
      %s36 = sphi 0, %s22
      %s42 = sphi 0, %s44
      %s45 = sphi 0, %s42
      %s46 = sphi 0, %s45
      %s62 = sphi 0, %s46
      %s68 = sphi 0, %s70
      %s71 = sphi 0, %s68
      %s72 = sphi 0, %s71
      %s88 = sphi 0, %s72
    $region4: #{run_query.3} parent=1 // loop_header_branch
      %14 = sbr.rel (%p12) target = $region8
    $region5: #{run_query.3} parent=1 // loop_body
      %s16 = ssub.s32 %s11, 1
      %s17 = ssub.s32 %s11, 2
      %s18 = sadd.s32 %s11, 1
      %s20 = sadd.s32 %s19, 1
      %p23 = scmp.eq.s32.totalorder %s11, 5
      %p24 = scmp.ne.s32.totalorder %s19, %s21
      %p25 = scmp.eq.s32.totalorder %s11, 0
      %p26 = por %p24, %p25
      %p27 = scmp.ne.s32.totalorder %s19, %s21
      %p28 = scmp.eq.s32.totalorder %s16, 5
      %p29 = por %p27, %p28
      %p30 = scmp.ne.s32.totalorder %s21, %s22
      %p31 = scmp.eq.s32.totalorder %s16, 0
      %p32 = por %p30, %p31
      %p33 = scmp.ne.s32.totalorder %s21, %s22
      %p34 = scmp.eq.s32.totalorder %s17, 5
      %p35 = por %p33, %p34
      %p37 = scmp.ne.s32.totalorder %s22, %s36
      %p38 = scmp.eq.s32.totalorder %s17, 0
      %p39 = por %p37, %p38
      %s40 = ssub.s32 %s11, %s18
      %p41 = scmp.eq.s32.totalorder %s40, 0
      %s43 = sadd.s32 %s42, 1
      %s44 = scalar_select %p41, %s42, %s43
      %p47 = pneg %p41
      %p48 = scmp.eq.s32.totalorder %s11, 5
      %p49 = por %p47, %p48
      %p50 = scmp.ne.s32.totalorder %s42, %s45
      %p51 = scmp.eq.s32.totalorder %s11, 0
      %p52 = por %p50, %p51
      %p53 = scmp.ne.s32.totalorder %s42, %s45
      %p54 = scmp.eq.s32.totalorder %s16, 5
      %p55 = por %p53, %p54
      %p56 = scmp.ne.s32.totalorder %s45, %s46
      %p57 = scmp.eq.s32.totalorder %s16, 0
      %p58 = por %p56, %p57
      %p59 = scmp.ne.s32.totalorder %s45, %s46
      %p60 = scmp.eq.s32.totalorder %s17, 5
      %p61 = por %p59, %p60
      %p63 = scmp.ne.s32.totalorder %s46, %s62
      %p64 = scmp.eq.s32.totalorder %s17, 0
      %p65 = por %p63, %p64
      %s66 = ssub.s32 %s11, %s18
      %p67 = scmp.eq.s32.totalorder %s66, 0
      %s69 = sadd.s32 %s68, 1
      %s70 = scalar_select %p67, %s68, %s69
      %p73 = pneg %p67
      %p74 = scmp.eq.s32.totalorder %s11, 5
      %p75 = por %p73, %p74
      %p76 = scmp.ne.s32.totalorder %s68, %s71
      %p77 = scmp.eq.s32.totalorder %s11, 0
      %p78 = por %p76, %p77
      %p79 = scmp.ne.s32.totalorder %s68, %s71
      %p80 = scmp.eq.s32.totalorder %s16, 5
      %p81 = por %p79, %p80
      %p82 = scmp.ne.s32.totalorder %s71, %s72
      %p83 = scmp.eq.s32.totalorder %s16, 0
      %p84 = por %p82, %p83
      %p85 = scmp.ne.s32.totalorder %s71, %s72
      %p86 = scmp.eq.s32.totalorder %s17, 5
      %p87 = por %p85, %p86
      %p89 = scmp.ne.s32.totalorder %s72, %s88
      %p90 = scmp.eq.s32.totalorder %s17, 0
      %p91 = por %p89, %p90
      %p92 = scmp.le.s32.totalorder 1, %s11
      %p93 = scmp.lt.s32.totalorder %s11, 7
      %p94 = pnand %p92, %p93
      %p95 = pneg %p94
      // Predicated region
      $region9: #{run_query.3} parent=5 // pred_check
        _
      $region10: #{run_query.3} parent=5 // pred_check_branch
        %97 = sbr.rel (%p94) target = $region12
      $region11: #{run_query.3} parent=5 // pred_region
        %s98 = ssub.s32 %s11, 1
        // Predicated region
        $region13: #{run_query.3} parent=11 // pred_check
          %p99 = pneg %p32
        $region14: #{run_query.3} parent=11 // pred_check_branch
          %101 = sbr.rel (%p99) target = $region16
        $region15: #{run_query.3} parent=11 // pred_region
          _
        $region16: #{run_query.3} parent=11 // pred_fallthru
          _
      $region12: #{run_query.3} parent=5 // pred_fallthru
        _
      %p102 = scmp.lt.s32.totalorder %s11, 6
      // Predicated region
      $region17: #{run_query.3} parent=5 // pred_check
        %p103 = pneg %p102
      $region18: #{run_query.3} parent=5 // pred_check_branch
        %105 = sbr.rel (%p103) target = $region20
      $region19: #{run_query.3} parent=5 // pred_region
        // Predicated region
        $region21: #{run_query.3} parent=19 // pred_check
          %p106 = pneg %p52
        $region22: #{run_query.3} parent=19 // pred_check_branch
          %108 = sbr.rel (%p106) target = $region24
        $region23: #{run_query.3} parent=19 // pred_region
          %s109 = sand.u32 %s42, 1
          %s110 = sand.u32 %s42, 1
          %s111 = smul.addr %s110, 256
          %s112 = scalar_lea.vmem [#allocation2], %s111
          %s113 = smul.u32 4, %s11
          %s114 = smul.addr %s113, 4
          %s115 = scalar_lea.vmem %s1, %s114
          // Predicated region
          $region25: #{run_query.3} parent=23 // pred_check
            _
          $region26: #{run_query.3} parent=23 // pred_check_branch
            %117 = sbr.rel (0) target = $region28
          $region27: #{run_query.3} parent=23 // pred_region
            // Predicated region
            $region29: #{run_query.3} parent=27 // pred_check
              _
            $region30: #{run_query.3} parent=27 // pred_check_branch
              %119 = sbr.rel (0) target = $region32
            $region31: #{run_query.3} parent=27 // pred_region
              loop: start=0, step=1, limit=1
              $region33: #{run_query.3} parent=31 // loop_pre_header
                _
              $region34: #{run_query.3} parent=31 // loop_header
                %s121 = sphi 0, %s125
                %p122 = scmp.ge.s32.totalorder %s121, 1
                %s126 = sphi %s115, %s115
                %s127 = sphi %s112, %s112
              $region35: #{run_query.3} parent=31 // loop_header_branch
                %124 = sbr.rel (%p122) target = $region39
              $region36: #{run_query.3} parent=31 // loop_body
                %v128 = vld [vmem:[%s126] sm:$0xff]
                %129 = vst [vmem:[%s127] sm:$0xff] %v128
                %v130 = vld [vmem:[%s126 + $0x8] sm:$0xff]
                %131 = vst [vmem:[%s127 + $0x8] sm:$0xff] %v130
                %v132 = vld [vmem:[%s126 + $0x60] sm:$0xff]
                %133 = vst [vmem:[%s127 + $0x10] sm:$0xff] %v132
                %v134 = vld [vmem:[%s126 + $0x68] sm:$0xff]
                %135 = vst [vmem:[%s127 + $0x18] sm:$0xff] %v134
                %v136 = vld [vmem:[%s126 + $0xc0] sm:$0xff]
                %137 = vst [vmem:[%s127 + $0x20] sm:$0xff] %v136
                %v138 = vld [vmem:[%s126 + $0xc8] sm:$0xff]
                %139 = vst [vmem:[%s127 + $0x28] sm:$0xff] %v138
                %v140 = vld [vmem:[%s126 + $0x120] sm:$0xff]
                %141 = vst [vmem:[%s127 + $0x30] sm:$0xff] %v140
                %v142 = vld [vmem:[%s126 + $0x128] sm:$0xff]
                %143 = vst [vmem:[%s127 + $0x38] sm:$0xff] %v142
                %v144 = vld [vmem:[%s126 + $0x180] sm:$0xff]
                %145 = vst [vmem:[%s127 + $0x40] sm:$0xff] %v144
                %v146 = vld [vmem:[%s126 + $0x188] sm:$0xff]
                %147 = vst [vmem:[%s127 + $0x48] sm:$0xff] %v146
                %v148 = vld [vmem:[%s126 + $0x1e0] sm:$0xff]
                %149 = vst [vmem:[%s127 + $0x50] sm:$0xff] %v148
                %v150 = vld [vmem:[%s126 + $0x1e8] sm:$0xff]
                %151 = vst [vmem:[%s127 + $0x58] sm:$0xff] %v150
                %v152 = vld [vmem:[%s126 + $0x240] sm:$0xff]
                %153 = vst [vmem:[%s127 + $0x60] sm:$0xff] %v152
                %v154 = vld [vmem:[%s126 + $0x248] sm:$0xff]
                %155 = vst [vmem:[%s127 + $0x68] sm:$0xff] %v154
                %v156 = vld [vmem:[%s126 + $0x2a0] sm:$0xff]
                %157 = vst [vmem:[%s127 + $0x70] sm:$0xff] %v156
                %v158 = vld [vmem:[%s126 + $0x2a8] sm:$0xff]
                %159 = vst [vmem:[%s127 + $0x78] sm:$0xff] %v158
                %v160 = vld [vmem:[%s126 + $0x300] sm:$0xff]
                %161 = vst [vmem:[%s127 + $0x80] sm:$0xff] %v160
                %v162 = vld [vmem:[%s126 + $0x308] sm:$0xff]
                %163 = vst [vmem:[%s127 + $0x88] sm:$0xff] %v162
                %v164 = vld [vmem:[%s126 + $0x360] sm:$0xff]
                %165 = vst [vmem:[%s127 + $0x90] sm:$0xff] %v164
                %v166 = vld [vmem:[%s126 + $0x368] sm:$0xff]
                %167 = vst [vmem:[%s127 + $0x98] sm:$0xff] %v166
                %v168 = vld [vmem:[%s126 + $0x3c0] sm:$0xff]
                %169 = vst [vmem:[%s127 + $0xa0] sm:$0xff] %v168
                %v170 = vld [vmem:[%s126 + $0x3c8] sm:$0xff]
                %171 = vst [vmem:[%s127 + $0xa8] sm:$0xff] %v170
                %v172 = vld [vmem:[%s126 + $0x420] sm:$0xff]
                %173 = vst [vmem:[%s127 + $0xb0] sm:$0xff] %v172
                %v174 = vld [vmem:[%s126 + $0x428] sm:$0xff]
                %175 = vst [vmem:[%s127 + $0xb8] sm:$0xff] %v174
                %v176 = vld [vmem:[%s126 + $0x480] sm:$0xff]
                %177 = vst [vmem:[%s127 + $0xc0] sm:$0xff] %v176
                %v178 = vld [vmem:[%s126 + $0x488] sm:$0xff]
                %179 = vst [vmem:[%s127 + $0xc8] sm:$0xff] %v178
                %v180 = vld [vmem:[%s126 + $0x4e0] sm:$0xff]
                %181 = vst [vmem:[%s127 + $0xd0] sm:$0xff] %v180
                %v182 = vld [vmem:[%s126 + $0x4e8] sm:$0xff]
                %183 = vst [vmem:[%s127 + $0xd8] sm:$0xff] %v182
                %v184 = vld [vmem:[%s126 + $0x540] sm:$0xff]
                %185 = vst [vmem:[%s127 + $0xe0] sm:$0xff] %v184
                %v186 = vld [vmem:[%s126 + $0x548] sm:$0xff]
                %187 = vst [vmem:[%s127 + $0xe8] sm:$0xff] %v186
                %v188 = vld [vmem:[%s126 + $0x5a0] sm:$0xff]
                %189 = vst [vmem:[%s127 + $0xf0] sm:$0xff] %v188
                %v190 = vld [vmem:[%s126 + $0x5a8] sm:$0xff]
                %191 = vst [vmem:[%s127 + $0xf8] sm:$0xff] %v190
              $region37: #{run_query.3} parent=31 // loop_footer
                %s125 = sadd.s32 1, %s121
              $region38: #{run_query.3} parent=31 // loop_footer_branch
                %120 = sbr.rel target = $region34
              $region39: #{run_query.3} parent=31 // loop_exit
                _
            $region32: #{run_query.3} parent=27 // pred_fallthru
              _
            // Predicated region
            $region40: #{run_query.3} parent=27 // pred_check
              _
            $region41: #{run_query.3} parent=27 // pred_check_branch
              %193 = sbr.rel target = $region43
            $region42: #{run_query.3} parent=27 // pred_region
              _
            $region43: #{run_query.3} parent=27 // pred_fallthru
              _
          $region28: #{run_query.3} parent=23 // pred_fallthru
            _
          %194 = vnop
        $region24: #{run_query.3} parent=19 // pred_fallthru
          _
      $region20: #{run_query.3} parent=5 // pred_fallthru
        _
      %p195 = scmp.le.s32.totalorder 1, %s11
      %p196 = scmp.lt.s32.totalorder %s11, 7
      %p197 = pnand %p195, %p196
      %p198 = pneg %p197
      // Predicated region
      $region44: #{run_query.3} parent=5 // pred_check
        _
      $region45: #{run_query.3} parent=5 // pred_check_branch
        %200 = sbr.rel (%p197) target = $region47
      $region46: #{run_query.3} parent=5 // pred_region
        %s201 = ssub.s32 %s11, 1
        %s202 = sand.u32 %s45, 1
        %s203 = sand.u32 %s45, 1
        %s204 = smul.addr %s203, 256
        %s205 = scalar_lea.vmem [#allocation2], %s204
        // Predicated region
        $region48: #{run_query.3} parent=46 // pred_check
          %p206 = pneg %p58
        $region49: #{run_query.3} parent=46 // pred_check_branch
          %208 = sbr.rel (%p206) target = $region51
        $region50: #{run_query.3} parent=46 // pred_region
          _
        $region51: #{run_query.3} parent=46 // pred_fallthru
          _
        %p209 = pneg %p32
        %p210 = pneg %p29
        %s211 = sand.u32 %s45, 1
        %s212 = sand.u32 %s45, 1
        %s213 = smul.addr %s212, 256
        %s214 = scalar_lea.vmem [#allocation2], %s213
        %p215 = pneg %p58
        %p216 = pneg %p55
        %p217 = pneg %p84
        %p218 = pneg %p81
        %s219 = sand.u32 %s71, 1
        %s220 = scalar_lea.sflag [#allocation4], %s219
        %s221 = sand.u32 %s71, 1
        %s222 = smul.addr %s221, 32
        %s223 = scalar_lea.vmem [#allocation3], %s222
        %s224 = smul.u32 4, %s16
        %s225 = smul.u32 4, %s16
        %v227 = vld [vmem:[%s0] sm:$0xf]
        %v228 = vld [vmem:[%s205] sm:$0xff]
        %v229 = vld [vmem:[%s205 + $0x8] sm:$0xff]
        %v230 = vld [vmem:[%s205 + $0x10] sm:$0xff]
        %v231 = vld [vmem:[%s205 + $0x18] sm:$0xff]
        %v232 = vld [vmem:[%s205 + $0x20] sm:$0xff]
        %v233 = vld [vmem:[%s205 + $0x28] sm:$0xff]
        %v234 = vld [vmem:[%s205 + $0x30] sm:$0xff]
        %v235 = vld [vmem:[%s205 + $0x38] sm:$0xff]
        %v236 = vld [vmem:[%s205 + $0x40] sm:$0xff]
        %v237 = vld [vmem:[%s205 + $0x48] sm:$0xff]
        %v238 = vld [vmem:[%s205 + $0x50] sm:$0xff]
        %v239 = vld [vmem:[%s205 + $0x58] sm:$0xff]
        %v240 = vld [vmem:[%s205 + $0x60] sm:$0xff]
        %v241 = vld [vmem:[%s205 + $0x68] sm:$0xff]
        %v242 = vld [vmem:[%s205 + $0x70] sm:$0xff]
        %v243 = vld [vmem:[%s205 + $0x78] sm:$0xff]
        %v244 = vld [vmem:[%s205 + $0x80] sm:$0xff]
        %v245 = vld [vmem:[%s205 + $0x88] sm:$0xff]
        %v246 = vld [vmem:[%s205 + $0x90] sm:$0xff]
        %v247 = vld [vmem:[%s205 + $0x98] sm:$0xff]
        %v248 = vld [vmem:[%s205 + $0xa0] sm:$0xff]
        %v249 = vld [vmem:[%s205 + $0xa8] sm:$0xff]
        %v250 = vld [vmem:[%s205 + $0xb0] sm:$0xff]
        %v251 = vld [vmem:[%s205 + $0xb8] sm:$0xff]
        %v252 = vld [vmem:[%s205 + $0xc0] sm:$0xff]
        %v253 = vld [vmem:[%s205 + $0xc8] sm:$0xff]
        %v254 = vld [vmem:[%s205 + $0xd0] sm:$0xff]
        %v255 = vld [vmem:[%s205 + $0xd8] sm:$0xff]
        %v256 = vld [vmem:[%s205 + $0xe0] sm:$0xff]
        %v257 = vld [vmem:[%s205 + $0xe8] sm:$0xff]
        %v258 = vld [vmem:[%s205 + $0xf0] sm:$0xff]
        %v259 = vld [vmem:[%s205 + $0xf8] sm:$0xff]
        %v292 = vunpack.c.l.b16 %v228
        %v293 = vunpack.c.h.b16 %v228
        %v294 = vunpack.c.l.b16 %v229
        %v295 = vunpack.c.h.b16 %v229
        %v296 = vunpack.c.l.b16 %v230
        %v297 = vunpack.c.h.b16 %v230
        %v298 = vunpack.c.l.b16 %v231
        %v299 = vunpack.c.h.b16 %v231
        %v300 = vunpack.c.l.b16 %v232
        %v301 = vunpack.c.h.b16 %v232
        %v302 = vunpack.c.l.b16 %v233
        %v303 = vunpack.c.h.b16 %v233
        %v304 = vunpack.c.l.b16 %v234
        %v305 = vunpack.c.h.b16 %v234
        %v306 = vunpack.c.l.b16 %v235
        %v307 = vunpack.c.h.b16 %v235
        %v308 = vunpack.c.l.b16 %v236
        %v309 = vunpack.c.h.b16 %v236
        %v310 = vunpack.c.l.b16 %v237
        %v311 = vunpack.c.h.b16 %v237
        %v312 = vunpack.c.l.b16 %v238
        %v313 = vunpack.c.h.b16 %v238
        %v314 = vunpack.c.l.b16 %v239
        %v315 = vunpack.c.h.b16 %v239
        %v316 = vunpack.c.l.b16 %v240
        %v317 = vunpack.c.h.b16 %v240
        %v318 = vunpack.c.l.b16 %v241
        %v319 = vunpack.c.h.b16 %v241
        %v320 = vunpack.c.l.b16 %v242
        %v321 = vunpack.c.h.b16 %v242
        %v322 = vunpack.c.l.b16 %v243
        %v323 = vunpack.c.h.b16 %v243
        %v324 = vunpack.c.l.b16 %v244
        %v325 = vunpack.c.h.b16 %v244
        %v326 = vunpack.c.l.b16 %v245
        %v327 = vunpack.c.h.b16 %v245
        %v328 = vunpack.c.l.b16 %v246
        %v329 = vunpack.c.h.b16 %v246
        %v330 = vunpack.c.l.b16 %v247
        %v331 = vunpack.c.h.b16 %v247
        %v332 = vunpack.c.l.b16 %v248
        %v333 = vunpack.c.h.b16 %v248
        %v334 = vunpack.c.l.b16 %v249
        %v335 = vunpack.c.h.b16 %v249
        %v336 = vunpack.c.l.b16 %v250
        %v337 = vunpack.c.h.b16 %v250
        %v338 = vunpack.c.l.b16 %v251
        %v339 = vunpack.c.h.b16 %v251
        %v340 = vunpack.c.l.b16 %v252
        %v341 = vunpack.c.h.b16 %v252
        %v342 = vunpack.c.l.b16 %v253
        %v343 = vunpack.c.h.b16 %v253
        %v344 = vunpack.c.l.b16 %v254
        %v345 = vunpack.c.h.b16 %v254
        %v346 = vunpack.c.l.b16 %v255
        %v347 = vunpack.c.h.b16 %v255
        %v348 = vunpack.c.l.b16 %v256
        %v349 = vunpack.c.h.b16 %v256
        %v350 = vunpack.c.l.b16 %v257
        %v351 = vunpack.c.h.b16 %v257
        %v352 = vunpack.c.l.b16 %v258
        %v353 = vunpack.c.h.b16 %v258
        %v354 = vunpack.c.l.b16 %v259
        %v355 = vunpack.c.h.b16 %v259
        %v356 = vpack.c.b16 %v296, %v292
        %v357 = vpack.c.b16 %v297, %v293
        %v358 = vpack.c.b16 %v298, %v294
        %v359 = vpack.c.b16 %v299, %v295
        %v360 = vpack.c.b16 %v304, %v300
        %v361 = vpack.c.b16 %v305, %v301
        %v362 = vpack.c.b16 %v306, %v302
        %v363 = vpack.c.b16 %v307, %v303
        %v364 = vpack.c.b16 %v312, %v308
        %v365 = vpack.c.b16 %v313, %v309
        %v366 = vpack.c.b16 %v314, %v310
        %v367 = vpack.c.b16 %v315, %v311
        %v368 = vpack.c.b16 %v320, %v316
        %v369 = vpack.c.b16 %v321, %v317
        %v370 = vpack.c.b16 %v322, %v318
        %v371 = vpack.c.b16 %v323, %v319
        %v372 = vpack.c.b16 %v328, %v324
        %v373 = vpack.c.b16 %v329, %v325
        %v374 = vpack.c.b16 %v330, %v326
        %v375 = vpack.c.b16 %v331, %v327
        %v376 = vpack.c.b16 %v336, %v332
        %v377 = vpack.c.b16 %v337, %v333
        %v378 = vpack.c.b16 %v338, %v334
        %v379 = vpack.c.b16 %v339, %v335
        %v380 = vpack.c.b16 %v344, %v340
        %v381 = vpack.c.b16 %v345, %v341
        %v382 = vpack.c.b16 %v346, %v342
        %v383 = vpack.c.b16 %v347, %v343
        %v384 = vpack.c.b16 %v352, %v348
        %v385 = vpack.c.b16 %v353, %v349
        %v386 = vpack.c.b16 %v354, %v350
        %v387 = vpack.c.b16 %v355, %v351
        %420 = vmatprep.subr.bf16.mxu0 %v357
        %421 = vmatpush1.bf16.msra.mxu0 %v356
        %422 = vmatprep.subr.bf16.mxu0 %v361
        %423 = vmatpush1.bf16.msra.mxu0 %v360
        %424 = vmatprep.subr.bf16.mxu0 %v365
        %425 = vmatpush1.bf16.msra.mxu0 %v364
        %426 = vmatprep.subr.bf16.mxu0 %v369
        %427 = vmatpush1.bf16.msra.mxu0 %v368
        %428 = vmatprep.subr.bf16.mxu0 %v373
        %429 = vmatpush1.bf16.msra.mxu0 %v372
        %430 = vmatprep.subr.bf16.mxu0 %v377
        %431 = vmatpush1.bf16.msra.mxu0 %v376
        %432 = vmatprep.subr.bf16.mxu0 %v381
        %433 = vmatpush1.bf16.msra.mxu0 %v380
        %434 = vmatprep.subr.bf16.mxu0 %v385
        %435 = vmatpush1.bf16.msra.mxu0 %v384
        %436 = vmatprep.subr.bf16.mxu0 0
        %437 = vmatpush1.bf16.msra.mxu0 0
        %438 = vmatprep.subr.bf16.mxu0 0
        %439 = vmatpush1.bf16.msra.mxu0 0
        %440 = vmatprep.subr.bf16.mxu0 0
        %441 = vmatpush1.bf16.msra.mxu0 0
        %442 = vmatprep.subr.bf16.mxu0 0
        %443 = vmatpush1.bf16.msra.mxu0 0
        %444 = vmatprep.subr.bf16.mxu0 0
        %445 = vmatpush1.bf16.msra.mxu0 0
        %446 = vmatprep.subr.bf16.mxu0 0
        %447 = vmatpush1.bf16.msra.mxu0 0
        %448 = vmatprep.subr.bf16.mxu0 0
        %449 = vmatpush1.bf16.msra.mxu0 0
        %450 = vmatprep.subr.bf16.mxu0 0
        %451 = vmatpush1.bf16.msra.mxu0 0
        %452 = vmatprep.mubr.bf16.mxu0 0
        %453 = vmatmul.mubr.bf16.gmra.mrb[0].mxu0 %v227
        %v454 = vpop.f32.mrb[0].mxu0
        %v455 = vadd.f32 0.0, %v454
        %v456 = vpop.f32.mrb[0].mxu0
        %v457 = vadd.f32 0.0, %v456
        %v458 = vpop.f32.mrb[0].mxu0
        %v459 = vpop.f32.mrb[0].mxu0
        %460 = vdwg.mxu0
        %461 = vmatprep.subr.bf16.mxu0 %v359
        %462 = vmatpush1.bf16.msra.mxu0 %v358
        %463 = vmatprep.subr.bf16.mxu0 %v363
        %464 = vmatpush1.bf16.msra.mxu0 %v362
        %465 = vmatprep.subr.bf16.mxu0 %v367
        %466 = vmatpush1.bf16.msra.mxu0 %v366
        %467 = vmatprep.subr.bf16.mxu0 %v371
        %468 = vmatpush1.bf16.msra.mxu0 %v370
        %469 = vmatprep.subr.bf16.mxu0 %v375
        %470 = vmatpush1.bf16.msra.mxu0 %v374
        %471 = vmatprep.subr.bf16.mxu0 %v379
        %472 = vmatpush1.bf16.msra.mxu0 %v378
        %473 = vmatprep.subr.bf16.mxu0 %v383
        %474 = vmatpush1.bf16.msra.mxu0 %v382
        %475 = vmatprep.subr.bf16.mxu0 %v387
        %476 = vmatpush1.bf16.msra.mxu0 %v386
        %477 = vmatprep.subr.bf16.mxu0 0
        %478 = vmatpush1.bf16.msra.mxu0 0
        %479 = vmatprep.subr.bf16.mxu0 0
        %480 = vmatpush1.bf16.msra.mxu0 0
        %481 = vmatprep.subr.bf16.mxu0 0
        %482 = vmatpush1.bf16.msra.mxu0 0
        %483 = vmatprep.subr.bf16.mxu0 0
        %484 = vmatpush1.bf16.msra.mxu0 0
        %485 = vmatprep.subr.bf16.mxu0 0
        %486 = vmatpush1.bf16.msra.mxu0 0
        %487 = vmatprep.subr.bf16.mxu0 0
        %488 = vmatpush1.bf16.msra.mxu0 0
        %489 = vmatprep.subr.bf16.mxu0 0
        %490 = vmatpush1.bf16.msra.mxu0 0
        %491 = vmatprep.subr.bf16.mxu0 0
        %492 = vmatpush1.bf16.msra.mxu0 0
        %493 = vmatprep.mubr.bf16.mxu0 0
        %494 = vmatmul.mubr.bf16.gmra.mrb[0].mxu0 %v227
        %v495 = vpop.f32.mrb[0].mxu0
        %v496 = vadd.f32 0.0, %v495
        %v497 = vpop.f32.mrb[0].mxu0
        %v498 = vadd.f32 0.0, %v497
        %v499 = vpop.f32.mrb[0].mxu0
        %v500 = vpop.f32.mrb[0].mxu0
        %501 = vdwg.mxu0
        %502 = vst [vmem:[%s223] sm:$0xff] %v455
        %503 = vst [vmem:[%s223 + $0x8] sm:$0xff] %v457
        %504 = vst [vmem:[%s223 + $0x10] sm:$0xff] %v496
        %505 = vst [vmem:[%s223 + $0x18] sm:$0xff] %v498
        %s506 = sand.u32 %s71, 1
        %s507 = scalar_lea.sflag [#allocation4], %s506
        %s508 = sand.u32 %s71, 1
        %s509 = smul.addr %s508, 32
        %s510 = scalar_lea.vmem [#allocation3], %s509
        // Predicated region
        $region52: #{run_query.3} parent=46 // pred_check
          %p511 = pneg %p81
        $region53: #{run_query.3} parent=46 // pred_check_branch
          %513 = sbr.rel (%p511) target = $region55
        $region54: #{run_query.3} parent=46 // pred_region
          %s514 = smul.u32 4, %s16
          %s516 = ssub.s32 512, 512
          %517 = vsyncadd %s507, %s516
          %s518 = smul.addr %s514, 128
          %s519 = scalar_lea.hbm %s2, %s518
          %s521 = sshll.u32 %s510, 4
          %s522 = int_to_ptr.vmem [resolvable:$true] %s521
          %524 = dma.vmem_to_hbm [thread:$0]  %s522, 512, %s519, %s507
        $region55: #{run_query.3} parent=46 // pred_fallthru
          _
      $region47: #{run_query.3} parent=5 // pred_fallthru
        _
      %p525 = scmp.le.s32.totalorder 2, %s11
      // Predicated region
      $region56: #{run_query.3} parent=5 // pred_check
        %p526 = pneg %p525
      $region57: #{run_query.3} parent=5 // pred_check_branch
        %528 = sbr.rel (%p526) target = $region59
      $region58: #{run_query.3} parent=5 // pred_region
        %s529 = ssub.s32 %s11, 2
        // Predicated region
        $region60: #{run_query.3} parent=58 // pred_check
          %p530 = pneg %p87
        $region61: #{run_query.3} parent=58 // pred_check_branch
          %532 = sbr.rel (%p530) target = $region63
        $region62: #{run_query.3} parent=58 // pred_region
          %s533 = sand.u32 %s72, 1
          %s534 = scalar_lea.sflag [#allocation4], %s533
          %s535 = sand.u32 %s72, 1
          %s536 = smul.addr %s535, 32
          %s537 = scalar_lea.vmem [#allocation3], %s536
          %538 = dma.done %s534, 512
        $region63: #{run_query.3} parent=58 // pred_fallthru
          _
      $region59: #{run_query.3} parent=5 // pred_fallthru
        _
    $region6: #{run_query.3} parent=1 // loop_footer
      %s15 = sadd.s32 1, %s11
    $region7: #{run_query.3} parent=1 // loop_footer_branch
      %10 = sbr.rel target = $region3
    $region8: #{run_query.3} parent=1 // loop_exit
      _
    %539 = vsyncpa [#allocation4], 1
    %s540 = scalar_lea.sflag [#allocation4], 1
    %541 = vsyncpa %s540, 1

// kernel: run_query.2
$region0: #{run_query.2}
  #allocation0 [shape = 'u32[]', space=smem, size = 0x4, offset = 0x4, fixed_abs, tag = 'smem constant byte address 0x4 - core index']
  #allocation1 [shape = 'u32[144,128]{1,0:T(1,128)}', space=vmem, size = 0x12000, scoped, tag = 'internal scratch']
  #allocation2 [shape = 'f32[16,128]{1,0:T(8,128)}', space=vmem, size = 0x2000, scoped, tag = 'scratch operand']
  #allocation3 [shape = 'f32[16,128]{1,0:T(8,128)}', space=vmem, size = 0x2000, scoped, tag = 'scratch operand']
  #allocation4 [shape = 's32[32]{0}', space=sflag, size = 0x80, scoped, tag = 'scratch operand']
  #allocation5 [shape = 's32[1]{0}', space=sflag, size = 0x4, scoped, tag = 'scoped memory for run_query.2']
  #allocation6 [shape = 'u8[512]{0}', space=smem, size = 0x200, scoped, tag = 'prefetched SMEM operand 0']
  #allocation7 [shape = 'u8[512]{0}', space=smem, size = 0x200, scoped, tag = 'prefetched SMEM operand 1']
  #allocation12 [shape = 's32[]', space=sflag, size = 0x4, offset = 0, fixed_abs, tag = 'sflag constant byte address 0x0 - dummy sync flag']
  #allocation13 [shape = 's32[]', space=sflag, size = 0x4, offset = 0, fixed_abs, tag = 'sflag constant byte address 0x0 - dummy sync flag']
  #allocation14 [shape = 'u32[]', space=smem, size = 0x4, offset = 0x44, fixed_abs, tag = 'smem constant byte address 0x44 - assertion arg 0']
  #allocation15 [shape = 'u32[]', space=smem, size = 0x4, offset = 0x48, fixed_abs, tag = 'smem constant byte address 0x48 - assertion arg 1']
  #allocation16 [shape = 's32[]', space=sflag, size = 0x4, offset = 0, fixed_abs, tag = 'sflag constant byte address 0x0 - dummy sync flag']
  #allocation17 [shape = 's32[]', space=sflag, size = 0x4, offset = 0, fixed_abs, tag = 'sflag constant byte address 0x0 - dummy sync flag']
  #allocation18 [shape = 's32[]', space=sflag, size = 0x4, offset = 0, fixed_abs, tag = 'sflag constant byte address 0x0 - dummy sync flag']
  #allocation19 [shape = 's32[]', space=sflag, size = 0x4, offset = 0, fixed_abs, tag = 'sflag constant byte address 0x0 - dummy sync flag']
  #allocation20 [shape = 's32[]', space=sflag, size = 0x4, offset = 0, fixed_abs, tag = 'sflag constant byte address 0x0 - dummy sync flag']
  #allocation21 [shape = 's32[]', space=sflag, size = 0x4, offset = 0, fixed_abs, tag = 'sflag constant byte address 0x0 - dummy sync flag']
  #allocation22 [shape = 's32[]', space=sflag, size = 0x4, offset = 0, fixed_abs, tag = 'sflag constant byte address 0x0 - dummy sync flag']
  #allocation23 [shape = 's32[]', space=sflag, size = 0x4, offset = 0, fixed_abs, tag = 'sflag constant byte address 0x0 - dummy sync flag']
  #allocation24 [shape = 's32[]', space=sflag, size = 0x4, offset = 0, fixed_abs, tag = 'sflag constant byte address 0x0 - dummy sync flag']
  #allocation25 [shape = 's32[]', space=sflag, size = 0x4, offset = 0, fixed_abs, tag = 'sflag constant byte address 0x0 - dummy sync flag']
  #allocation26 [shape = 's32[]', space=sflag, size = 0x4, offset = 0, fixed_abs, tag = 'sflag constant byte address 0x0 - dummy sync flag']
  #allocation27 [shape = 's32[]', space=sflag, size = 0x4, offset = 0, fixed_abs, tag = 'sflag constant byte address 0x0 - dummy sync flag']
  #allocation28 [shape = 's32[]', space=sflag, size = 0x4, offset = 0, fixed_abs, tag = 'sflag constant byte address 0x0 - dummy sync flag']
  #allocation29 [shape = 's32[]', space=sflag, size = 0x4, offset = 0, fixed_abs, tag = 'sflag constant byte address 0x0 - dummy sync flag']
  #allocation30 [shape = 's32[]', space=sflag, size = 0x4, offset = 0, fixed_abs, tag = 'sflag constant byte address 0x0 - dummy sync flag']
  #allocation31 [shape = 's32[]', space=sflag, size = 0x4, offset = 0, fixed_abs, tag = 'sflag constant byte address 0x0 - dummy sync flag']
  #allocation32 [shape = 's32[]', space=sflag, size = 0x4, offset = 0, fixed_abs, tag = 'sflag constant byte address 0x0 - dummy sync flag']
  #allocation33 [shape = 's32[]', space=sflag, size = 0x4, offset = 0, fixed_abs, tag = 'sflag constant byte address 0x0 - dummy sync flag']
  #allocation34 [shape = 's32[]', space=sflag, size = 0x4, offset = 0, fixed_abs, tag = 'sflag constant byte address 0x0 - dummy sync flag']
  #allocation35 [shape = 's32[]', space=sflag, size = 0x4, offset = 0, fixed_abs, tag = 'sflag constant byte address 0x0 - dummy sync flag']
  #allocation36 [shape = 's32[]', space=sflag, size = 0x4, offset = 0, fixed_abs, tag = 'sflag constant byte address 0x0 - dummy sync flag']
  #allocation37 [shape = 's32[]', space=sflag, size = 0x4, offset = 0, fixed_abs, tag = 'sflag constant byte address 0x0 - dummy sync flag']
  #allocation38 [shape = 's32[]', space=sflag, size = 0x4, offset = 0, fixed_abs, tag = 'sflag constant byte address 0x0 - dummy sync flag']
  #allocation39 [shape = 's32[]', space=sflag, size = 0x4, offset = 0, fixed_abs, tag = 'sflag constant byte address 0x0 - dummy sync flag']
  #allocation40 [shape = 's32[]', space=sflag, size = 0x4, offset = 0, fixed_abs, tag = 'sflag constant byte address 0x0 - dummy sync flag']
  #allocation41 [shape = 's32[]', space=sflag, size = 0x4, offset = 0, fixed_abs, tag = 'sflag constant byte address 0x0 - dummy sync flag']
  #allocation42 [shape = 's32[]', space=sflag, size = 0x4, offset = 0, fixed_abs, tag = 'sflag constant byte address 0x0 - dummy sync flag']
  #allocation43 [shape = 's32[]', space=sflag, size = 0x4, offset = 0, fixed_abs, tag = 'sflag constant byte address 0x0 - dummy sync flag']
  #allocation44 [shape = 's32[]', space=sflag, size = 0x4, offset = 0, fixed_abs, tag = 'sflag constant byte address 0x0 - dummy sync flag']
  #allocation45 [shape = 's32[]', space=sflag, size = 0x4, offset = 0, fixed_abs, tag = 'sflag constant byte address 0x0 - dummy sync flag']
  #allocation46 [shape = 's32[]', space=sflag, size = 0x4, offset = 0, fixed_abs, tag = 'sflag constant byte address 0x0 - dummy sync flag']
  #allocation47 [shape = 's32[]', space=sflag, size = 0x4, offset = 0, fixed_abs, tag = 'sflag constant byte address 0x0 - dummy sync flag']
  #allocation48 [shape = 's32[]', space=sflag, size = 0x4, offset = 0, fixed_abs, tag = 'sflag constant byte address 0x0 - dummy sync flag']
  #allocation49 [shape = 's32[]', space=sflag, size = 0x4, offset = 0, fixed_abs, tag = 'sflag constant byte address 0x0 - dummy sync flag']
  #allocation50 [shape = 's32[]', space=sflag, size = 0x4, offset = 0, fixed_abs, tag = 'sflag constant byte address 0x0 - dummy sync flag']
  #allocation51 [shape = 's32[]', space=sflag, size = 0x4, offset = 0, fixed_abs, tag = 'sflag constant byte address 0x0 - dummy sync flag']
  #allocation52 [shape = 's32[]', space=sflag, size = 0x4, offset = 0, fixed_abs, tag = 'sflag constant byte address 0x0 - dummy sync flag']
  #allocation53 [shape = 's32[]', space=sflag, size = 0x4, offset = 0, fixed_abs, tag = 'sflag constant byte address 0x0 - dummy sync flag']
  #allocation54 [shape = 's32[]', space=sflag, size = 0x4, offset = 0, fixed_abs, tag = 'sflag constant byte address 0x0 - dummy sync flag']
  #allocation55 [shape = 's32[]', space=sflag, size = 0x4, offset = 0, fixed_abs, tag = 'sflag constant byte address 0x0 - dummy sync flag']
  #allocation56 [shape = 's32[]', space=sflag, size = 0x4, offset = 0, fixed_abs, tag = 'sflag constant byte address 0x0 - dummy sync flag']
  #allocation57 [shape = 's32[]', space=sflag, size = 0x4, offset = 0, fixed_abs, tag = 'sflag constant byte address 0x0 - dummy sync flag']
  #allocation58 [shape = 's32[]', space=sflag, size = 0x4, offset = 0, fixed_abs, tag = 'sflag constant byte address 0x0 - dummy sync flag']
  #allocation59 [shape = 's32[]', space=sflag, size = 0x4, offset = 0, fixed_abs, tag = 'sflag constant byte address 0x0 - dummy sync flag']
  #allocation60 [shape = 's32[]', space=sflag, size = 0x4, offset = 0, fixed_abs, tag = 'sflag constant byte address 0x0 - dummy sync flag']
  #allocation61 [shape = 's32[]', space=sflag, size = 0x4, offset = 0, fixed_abs, tag = 'sflag constant byte address 0x0 - dummy sync flag']
  #allocation62 [shape = 's32[]', space=sflag, size = 0x4, offset = 0, fixed_abs, tag = 'sflag constant byte address 0x0 - dummy sync flag']
  #allocation63 [shape = 's32[]', space=sflag, size = 0x4, offset = 0, fixed_abs, tag = 'sflag constant byte address 0x0 - dummy sync flag']
  #allocation64 [shape = 's32[]', space=sflag, size = 0x4, offset = 0, fixed_abs, tag = 'sflag constant byte address 0x0 - dummy sync flag']
  #allocation65 [shape = 's32[]', space=sflag, size = 0x4, offset = 0, fixed_abs, tag = 'sflag constant byte address 0x0 - dummy sync flag']
  #allocation66 [shape = 's32[]', space=sflag, size = 0x4, offset = 0, fixed_abs, tag = 'sflag constant byte address 0x0 - dummy sync flag']
  #allocation67 [shape = 's32[]', space=sflag, size = 0x4, offset = 0, fixed_abs, tag = 'sflag constant byte address 0x0 - dummy sync flag']
  #allocation68 [shape = 's32[]', space=sflag, size = 0x4, offset = 0, fixed_abs, tag = 'sflag constant byte address 0x0 - dummy sync flag']
  #allocation69 [shape = 's32[]', space=sflag, size = 0x4, offset = 0, fixed_abs, tag = 'sflag constant byte address 0x0 - dummy sync flag']
  #allocation70 [shape = 's32[]', space=sflag, size = 0x4, offset = 0, fixed_abs, tag = 'sflag constant byte address 0x0 - dummy sync flag']
  #allocation71 [shape = 's32[]', space=sflag, size = 0x4, offset = 0, fixed_abs, tag = 'sflag constant byte address 0x0 - dummy sync flag']
  #allocation72 [shape = 's32[]', space=sflag, size = 0x4, offset = 0, fixed_abs, tag = 'sflag constant byte address 0x0 - dummy sync flag']
  #allocation73 [shape = 's32[]', space=sflag, size = 0x4, offset = 0, fixed_abs, tag = 'sflag constant byte address 0x0 - dummy sync flag']
  #allocation74 [shape = 's32[]', space=sflag, size = 0x4, offset = 0, fixed_abs, tag = 'sflag constant byte address 0x0 - dummy sync flag']
  #allocation75 [shape = 's32[]', space=sflag, size = 0x4, offset = 0, fixed_abs, tag = 'sflag constant byte address 0x0 - dummy sync flag']
  #allocation76 [shape = 's32[]', space=sflag, size = 0x4, offset = 0, fixed_abs, tag = 'sflag constant byte address 0x0 - dummy sync flag']
  #allocation77 [shape = 's32[]', space=sflag, size = 0x4, offset = 0, fixed_abs, tag = 'sflag constant byte address 0x0 - dummy sync flag']
  %s0 = inlined_call_operand.vmem [shape: s32[16], index: 0, kind: input, shape index: {}]
  %s1 = inlined_call_operand.vmem [shape: s32[16], index: 1, kind: input, shape index: {}]
  %s2 = inlined_call_operand.hbm [shape: f32[3072,128], index: 2, kind: input, shape index: {}]
  %s3 = inlined_call_operand.hbm [shape: f32[16,128], index: 3, kind: input, shape index: {}]
  %s4 = inlined_call_operand.hbm [shape: bf16[128,128], index: 4, kind: input, shape index: {}]
  %s5 = inlined_call_operand.hbm [shape: f32[1,128], index: 5, kind: input, shape index: {}]
  %s6 = inlined_call_operand.vmem [shape: f32[8,128], index: 6, kind: output, shape index: {}]
  %s7 = sld [smem:[#allocation0]]
  $region154: #{run_query.2} parent=0
    _
  %s9 = ssub.s32 1, %s7
  %s10 = scalar_select 0, %s9, %s7
  %s11 = sshll.u32 %s0, 4
  %s12 = int_to_ptr.vmem [resolvable:$true] %s11
  %14 = dma.vmem_to_smem %s12, 16, [#allocation6], [#allocation5]
  %s15 = sshll.u32 %s1, 4
  %s16 = int_to_ptr.vmem [resolvable:$true] %s15
  %18 = dma.vmem_to_smem %s16, 16, [#allocation7], [#allocation5]
  %19 = dma.done [#allocation5], 32
  %20 = sfence
  $region1: #{run_query.2} parent=0
    #allocation8 [shape = 'u8[32768]{0}', space=vmem, size = 0x8000, scoped, tag = 'input window, operand 4, single buffered']
    #allocation9 [shape = 's32[1]{0}', space=sflag, size = 0x4, scoped, tag = 'scoped memory for run_query.2']
    #allocation10 [shape = 'u8[512]{0}', space=vmem, size = 0x400, scoped, tag = 'input window, operand 5, single buffered']
    #allocation11 [shape = 's32[1]{0}', space=sflag, size = 0x4, scoped, tag = 'scoped memory for run_query.2']
    %21 = vsyncpa [#allocation9], 0
    %22 = vsyncpa [#allocation11], 0
    // Predicated region
    $region2: #{run_query.2} parent=1 // pred_check
      _
    $region3: #{run_query.2} parent=1 // pred_check_branch
      %24 = sbr.rel (0) target = $region5
    $region4: #{run_query.2} parent=1 // pred_region
      %s26 = ssub.s32 1024, 1024
      %27 = vsyncadd [#allocation9], %s26
      %s28 = sshll.u32 [#allocation8], 4
      %s29 = int_to_ptr.vmem [resolvable:$true] %s28
      %34 = dma.hbm_to_vmem [thread:$0]  %s4, 1024, %s29, [#allocation9], 64, 64, 4
    $region5: #{run_query.2} parent=1 // pred_fallthru
      _
    // Predicated region
    $region6: #{run_query.2} parent=1 // pred_check
      _
    $region7: #{run_query.2} parent=1 // pred_check_branch
      %36 = sbr.rel (0) target = $region9
    $region8: #{run_query.2} parent=1 // pred_region
      %s38 = ssub.s32 16, 16
      %39 = vsyncadd [#allocation11], %s38
      %s41 = sshll.u32 [#allocation10], 4
      %s42 = int_to_ptr.vmem [resolvable:$true] %s41
      %44 = dma.hbm_to_vmem [thread:$0]  %s5, 16, %s42, [#allocation11]
    $region9: #{run_query.2} parent=1 // pred_fallthru
      _
    // Predicated region
    $region10: #{run_query.2} parent=1 // pred_check
      _
    $region11: #{run_query.2} parent=1 // pred_check_branch
      %46 = sbr.rel (0) target = $region13
    $region12: #{run_query.2} parent=1 // pred_region
      %47 = dma.done [#allocation9], 1024
    $region13: #{run_query.2} parent=1 // pred_fallthru
      _
    // Predicated region
    $region14: #{run_query.2} parent=1 // pred_check
      _
    $region15: #{run_query.2} parent=1 // pred_check_branch
      %49 = sbr.rel (0) target = $region17
    $region16: #{run_query.2} parent=1 // pred_region
      %50 = dma.done [#allocation11], 16
    $region17: #{run_query.2} parent=1 // pred_fallthru
      _
    %s52 = sld [smem:[#allocation6]]
    %s53 = sld [smem:[#allocation7]]
    %s54 = sld [smem:[#allocation6 + $0x1]]
    %s55 = sld [smem:[#allocation7 + $0x1]]
    %s56 = sld [smem:[#allocation6 + $0x2]]
    %s57 = sld [smem:[#allocation7 + $0x2]]
    %s58 = sld [smem:[#allocation6 + $0x3]]
    %s59 = sld [smem:[#allocation7 + $0x3]]
    %s60 = sld [smem:[#allocation6 + $0x4]]
    %s61 = sld [smem:[#allocation7 + $0x4]]
    %s62 = sld [smem:[#allocation6 + $0x5]]
    %s63 = sld [smem:[#allocation7 + $0x5]]
    %s64 = sld [smem:[#allocation6 + $0x6]]
    %s65 = sld [smem:[#allocation7 + $0x6]]
    %s66 = sld [smem:[#allocation6 + $0x7]]
    %s67 = sld [smem:[#allocation7 + $0x7]]
    %s68 = sld [smem:[#allocation6 + $0x8]]
    %s69 = sld [smem:[#allocation7 + $0x8]]
    %s70 = sld [smem:[#allocation6 + $0x9]]
    %s71 = sld [smem:[#allocation7 + $0x9]]
    %s72 = sld [smem:[#allocation6 + $0xa]]
    %s73 = sld [smem:[#allocation7 + $0xa]]
    %s74 = sld [smem:[#allocation6 + $0xb]]
    %s75 = sld [smem:[#allocation7 + $0xb]]
    %s76 = sld [smem:[#allocation6 + $0xc]]
    %s77 = sld [smem:[#allocation7 + $0xc]]
    %s78 = sld [smem:[#allocation6 + $0xd]]
    %s79 = sld [smem:[#allocation7 + $0xd]]
    %s80 = sld [smem:[#allocation6 + $0xe]]
    %s81 = sld [smem:[#allocation7 + $0xe]]
    %s82 = sld [smem:[#allocation6 + $0xf]]
    %s83 = sld [smem:[#allocation7 + $0xf]]
    %s84 = smul.addr %s52, 16
    %s85 = scalar_lea.hbm %s2, %s84
    // Predicated region
    $region18: #{run_query.2} parent=1 // pred_check
      _
    $region19: #{run_query.2} parent=1 // pred_check_branch
      %87 = sbr.rel target = $region21
    $region20: #{run_query.2} parent=1 // pred_region
      %88 = sst [smem:[#allocation14]] [#allocation13]
      %89 = sst [smem:[#allocation15]] [#allocation12]
    $region21: #{run_query.2} parent=1 // pred_fallthru
      _
    %91 = shalt.err (0)
    %s93 = sshll.u32 [#allocation2], 4
    %s94 = int_to_ptr.vmem [resolvable:$true] %s93
    %96 = dma.hbm_to_vmem [thread:$0]  %s85, 16, %s94, [#allocation4]
    %s97 = smul.addr %s53, 16
    %s98 = scalar_lea.hbm %s3, %s97
    %s99 = scalar_lea.sflag [#allocation4], 16
    // Predicated region
    $region22: #{run_query.2} parent=1 // pred_check
      _
    $region23: #{run_query.2} parent=1 // pred_check_branch
      %101 = sbr.rel target = $region25
    $region24: #{run_query.2} parent=1 // pred_region
      %102 = sst [smem:[#allocation14]] [#allocation17]
      %103 = sst [smem:[#allocation15]] [#allocation16]
    $region25: #{run_query.2} parent=1 // pred_fallthru
      _
    %105 = shalt.err (0)
    %s107 = sshll.u32 [#allocation3], 4
    %s108 = int_to_ptr.vmem [resolvable:$true] %s107
    %110 = dma.hbm_to_vmem [thread:$0]  %s98, 16, %s108, %s99
    %s111 = smul.addr %s54, 16
    %s112 = scalar_lea.hbm %s2, %s111
    %s113 = scalar_lea.vmem [#allocation2], 1
    %s114 = scalar_lea.sflag [#allocation4], 1
    // Predicated region
    $region26: #{run_query.2} parent=1 // pred_check
      _
    $region27: #{run_query.2} parent=1 // pred_check_branch
      %116 = sbr.rel target = $region29
    $region28: #{run_query.2} parent=1 // pred_region
      %117 = sst [smem:[#allocation14]] [#allocation19]
      %118 = sst [smem:[#allocation15]] [#allocation18]
    $region29: #{run_query.2} parent=1 // pred_fallthru
      _
    %120 = shalt.err (0)
    %s122 = sshll.u32 %s113, 4
    %s123 = int_to_ptr.vmem [resolvable:$true] %s122
    %125 = dma.hbm_to_vmem [thread:$0]  %s112, 16, %s123, %s114
    %s126 = smul.addr %s55, 16
    %s127 = scalar_lea.hbm %s3, %s126
    %s128 = scalar_lea.vmem [#allocation3], 1
    %s129 = scalar_lea.sflag [#allocation4], 17
    // Predicated region
    $region30: #{run_query.2} parent=1 // pred_check
      _
    $region31: #{run_query.2} parent=1 // pred_check_branch
      %131 = sbr.rel target = $region33
    $region32: #{run_query.2} parent=1 // pred_region
      %132 = sst [smem:[#allocation14]] [#allocation21]
      %133 = sst [smem:[#allocation15]] [#allocation20]
    $region33: #{run_query.2} parent=1 // pred_fallthru
      _
    %135 = shalt.err (0)
    %s137 = sshll.u32 %s128, 4
    %s138 = int_to_ptr.vmem [resolvable:$true] %s137
    %140 = dma.hbm_to_vmem [thread:$0]  %s127, 16, %s138, %s129
    %s141 = smul.addr %s56, 16
    %s142 = scalar_lea.hbm %s2, %s141
    %s143 = scalar_lea.vmem [#allocation2], 2
    %s144 = scalar_lea.sflag [#allocation4], 2
    // Predicated region
    $region34: #{run_query.2} parent=1 // pred_check
      _
    $region35: #{run_query.2} parent=1 // pred_check_branch
      %146 = sbr.rel target = $region37
    $region36: #{run_query.2} parent=1 // pred_region
      %147 = sst [smem:[#allocation14]] [#allocation23]
      %148 = sst [smem:[#allocation15]] [#allocation22]
    $region37: #{run_query.2} parent=1 // pred_fallthru
      _
    %150 = shalt.err (0)
    %s152 = sshll.u32 %s143, 4
    %s153 = int_to_ptr.vmem [resolvable:$true] %s152
    %155 = dma.hbm_to_vmem [thread:$0]  %s142, 16, %s153, %s144
    %s156 = smul.addr %s57, 16
    %s157 = scalar_lea.hbm %s3, %s156
    %s158 = scalar_lea.vmem [#allocation3], 2
    %s159 = scalar_lea.sflag [#allocation4], 18
    // Predicated region
    $region38: #{run_query.2} parent=1 // pred_check
      _
    $region39: #{run_query.2} parent=1 // pred_check_branch
      %161 = sbr.rel target = $region41
    $region40: #{run_query.2} parent=1 // pred_region
      %162 = sst [smem:[#allocation14]] [#allocation25]
      %163 = sst [smem:[#allocation15]] [#allocation24]
    $region41: #{run_query.2} parent=1 // pred_fallthru
      _
    %165 = shalt.err (0)
    %s167 = sshll.u32 %s158, 4
    %s168 = int_to_ptr.vmem [resolvable:$true] %s167
    %170 = dma.hbm_to_vmem [thread:$0]  %s157, 16, %s168, %s159
    %s171 = smul.addr %s58, 16
    %s172 = scalar_lea.hbm %s2, %s171
    %s173 = scalar_lea.vmem [#allocation2], 3
    %s174 = scalar_lea.sflag [#allocation4], 3
    // Predicated region
    $region42: #{run_query.2} parent=1 // pred_check
      _
    $region43: #{run_query.2} parent=1 // pred_check_branch
      %176 = sbr.rel target = $region45
    $region44: #{run_query.2} parent=1 // pred_region
      %177 = sst [smem:[#allocation14]] [#allocation27]
      %178 = sst [smem:[#allocation15]] [#allocation26]
    $region45: #{run_query.2} parent=1 // pred_fallthru
      _
    %180 = shalt.err (0)
    %s182 = sshll.u32 %s173, 4
    %s183 = int_to_ptr.vmem [resolvable:$true] %s182
    %185 = dma.hbm_to_vmem [thread:$0]  %s172, 16, %s183, %s174
    %s186 = smul.addr %s59, 16
    %s187 = scalar_lea.hbm %s3, %s186
    %s188 = scalar_lea.vmem [#allocation3], 3
    %s189 = scalar_lea.sflag [#allocation4], 19
    // Predicated region
    $region46: #{run_query.2} parent=1 // pred_check
      _
    $region47: #{run_query.2} parent=1 // pred_check_branch
      %191 = sbr.rel target = $region49
    $region48: #{run_query.2} parent=1 // pred_region
      %192 = sst [smem:[#allocation14]] [#allocation29]
      %193 = sst [smem:[#allocation15]] [#allocation28]
    $region49: #{run_query.2} parent=1 // pred_fallthru
      _
    %195 = shalt.err (0)
    %s197 = sshll.u32 %s188, 4
    %s198 = int_to_ptr.vmem [resolvable:$true] %s197
    %200 = dma.hbm_to_vmem [thread:$0]  %s187, 16, %s198, %s189
    %s201 = smul.addr %s60, 16
    %s202 = scalar_lea.hbm %s2, %s201
    %s203 = scalar_lea.vmem [#allocation2], 4
    %s204 = scalar_lea.sflag [#allocation4], 4
    // Predicated region
    $region50: #{run_query.2} parent=1 // pred_check
      _
    $region51: #{run_query.2} parent=1 // pred_check_branch
      %206 = sbr.rel target = $region53
    $region52: #{run_query.2} parent=1 // pred_region
      %207 = sst [smem:[#allocation14]] [#allocation31]
      %208 = sst [smem:[#allocation15]] [#allocation30]
    $region53: #{run_query.2} parent=1 // pred_fallthru
      _
    %210 = shalt.err (0)
    %s212 = sshll.u32 %s203, 4
    %s213 = int_to_ptr.vmem [resolvable:$true] %s212
    %215 = dma.hbm_to_vmem [thread:$0]  %s202, 16, %s213, %s204
    %s216 = smul.addr %s61, 16
    %s217 = scalar_lea.hbm %s3, %s216
    %s218 = scalar_lea.vmem [#allocation3], 4
    %s219 = scalar_lea.sflag [#allocation4], 20
    // Predicated region
    $region54: #{run_query.2} parent=1 // pred_check
      _
    $region55: #{run_query.2} parent=1 // pred_check_branch
      %221 = sbr.rel target = $region57
    $region56: #{run_query.2} parent=1 // pred_region
      %222 = sst [smem:[#allocation14]] [#allocation33]
      %223 = sst [smem:[#allocation15]] [#allocation32]
    $region57: #{run_query.2} parent=1 // pred_fallthru
      _
    %225 = shalt.err (0)
    %s227 = sshll.u32 %s218, 4
    %s228 = int_to_ptr.vmem [resolvable:$true] %s227
    %230 = dma.hbm_to_vmem [thread:$0]  %s217, 16, %s228, %s219
    %s231 = smul.addr %s62, 16
    %s232 = scalar_lea.hbm %s2, %s231
    %s233 = scalar_lea.vmem [#allocation2], 5
    %s234 = scalar_lea.sflag [#allocation4], 5
    // Predicated region
    $region58: #{run_query.2} parent=1 // pred_check
      _
    $region59: #{run_query.2} parent=1 // pred_check_branch
      %236 = sbr.rel target = $region61
    $region60: #{run_query.2} parent=1 // pred_region
      %237 = sst [smem:[#allocation14]] [#allocation35]
      %238 = sst [smem:[#allocation15]] [#allocation34]
    $region61: #{run_query.2} parent=1 // pred_fallthru
      _
    %240 = shalt.err (0)
    %s242 = sshll.u32 %s233, 4
    %s243 = int_to_ptr.vmem [resolvable:$true] %s242
    %245 = dma.hbm_to_vmem [thread:$0]  %s232, 16, %s243, %s234
    %s246 = smul.addr %s63, 16
    %s247 = scalar_lea.hbm %s3, %s246
    %s248 = scalar_lea.vmem [#allocation3], 5
    %s249 = scalar_lea.sflag [#allocation4], 21
    // Predicated region
    $region62: #{run_query.2} parent=1 // pred_check
      _
    $region63: #{run_query.2} parent=1 // pred_check_branch
      %251 = sbr.rel target = $region65
    $region64: #{run_query.2} parent=1 // pred_region
      %252 = sst [smem:[#allocation14]] [#allocation37]
      %253 = sst [smem:[#allocation15]] [#allocation36]
    $region65: #{run_query.2} parent=1 // pred_fallthru
      _
    %255 = shalt.err (0)
    %s257 = sshll.u32 %s248, 4
    %s258 = int_to_ptr.vmem [resolvable:$true] %s257
    %260 = dma.hbm_to_vmem [thread:$0]  %s247, 16, %s258, %s249
    %s261 = smul.addr %s64, 16
    %s262 = scalar_lea.hbm %s2, %s261
    %s263 = scalar_lea.vmem [#allocation2], 6
    %s264 = scalar_lea.sflag [#allocation4], 6
    // Predicated region
    $region66: #{run_query.2} parent=1 // pred_check
      _
    $region67: #{run_query.2} parent=1 // pred_check_branch
      %266 = sbr.rel target = $region69
    $region68: #{run_query.2} parent=1 // pred_region
      %267 = sst [smem:[#allocation14]] [#allocation39]
      %268 = sst [smem:[#allocation15]] [#allocation38]
    $region69: #{run_query.2} parent=1 // pred_fallthru
      _
    %270 = shalt.err (0)
    %s272 = sshll.u32 %s263, 4
    %s273 = int_to_ptr.vmem [resolvable:$true] %s272
    %275 = dma.hbm_to_vmem [thread:$0]  %s262, 16, %s273, %s264
    %s276 = smul.addr %s65, 16
    %s277 = scalar_lea.hbm %s3, %s276
    %s278 = scalar_lea.vmem [#allocation3], 6
    %s279 = scalar_lea.sflag [#allocation4], 22
    // Predicated region
    $region70: #{run_query.2} parent=1 // pred_check
      _
    $region71: #{run_query.2} parent=1 // pred_check_branch
      %281 = sbr.rel target = $region73
    $region72: #{run_query.2} parent=1 // pred_region
      %282 = sst [smem:[#allocation14]] [#allocation41]
      %283 = sst [smem:[#allocation15]] [#allocation40]
    $region73: #{run_query.2} parent=1 // pred_fallthru
      _
    %285 = shalt.err (0)
    %s287 = sshll.u32 %s278, 4
    %s288 = int_to_ptr.vmem [resolvable:$true] %s287
    %290 = dma.hbm_to_vmem [thread:$0]  %s277, 16, %s288, %s279
    %s291 = smul.addr %s66, 16
    %s292 = scalar_lea.hbm %s2, %s291
    %s293 = scalar_lea.vmem [#allocation2], 7
    %s294 = scalar_lea.sflag [#allocation4], 7
    // Predicated region
    $region74: #{run_query.2} parent=1 // pred_check
      _
    $region75: #{run_query.2} parent=1 // pred_check_branch
      %296 = sbr.rel target = $region77
    $region76: #{run_query.2} parent=1 // pred_region
      %297 = sst [smem:[#allocation14]] [#allocation43]
      %298 = sst [smem:[#allocation15]] [#allocation42]
    $region77: #{run_query.2} parent=1 // pred_fallthru
      _
    %300 = shalt.err (0)
    %s302 = sshll.u32 %s293, 4
    %s303 = int_to_ptr.vmem [resolvable:$true] %s302
    %305 = dma.hbm_to_vmem [thread:$0]  %s292, 16, %s303, %s294
    %s306 = smul.addr %s67, 16
    %s307 = scalar_lea.hbm %s3, %s306
    %s308 = scalar_lea.vmem [#allocation3], 7
    %s309 = scalar_lea.sflag [#allocation4], 23
    // Predicated region
    $region78: #{run_query.2} parent=1 // pred_check
      _
    $region79: #{run_query.2} parent=1 // pred_check_branch
      %311 = sbr.rel target = $region81
    $region80: #{run_query.2} parent=1 // pred_region
      %312 = sst [smem:[#allocation14]] [#allocation45]
      %313 = sst [smem:[#allocation15]] [#allocation44]
    $region81: #{run_query.2} parent=1 // pred_fallthru
      _
    %315 = shalt.err (0)
    %s317 = sshll.u32 %s308, 4
    %s318 = int_to_ptr.vmem [resolvable:$true] %s317
    %320 = dma.hbm_to_vmem [thread:$0]  %s307, 16, %s318, %s309
    %s321 = smul.addr %s68, 16
    %s322 = scalar_lea.hbm %s2, %s321
    %s323 = scalar_lea.vmem [#allocation2], 8
    %s324 = scalar_lea.sflag [#allocation4], 8
    // Predicated region
    $region82: #{run_query.2} parent=1 // pred_check
      _
    $region83: #{run_query.2} parent=1 // pred_check_branch
      %326 = sbr.rel target = $region85
    $region84: #{run_query.2} parent=1 // pred_region
      %327 = sst [smem:[#allocation14]] [#allocation47]
      %328 = sst [smem:[#allocation15]] [#allocation46]
    $region85: #{run_query.2} parent=1 // pred_fallthru
      _
    %330 = shalt.err (0)
    %s332 = sshll.u32 %s323, 4
    %s333 = int_to_ptr.vmem [resolvable:$true] %s332
    %335 = dma.hbm_to_vmem [thread:$0]  %s322, 16, %s333, %s324
    %s336 = smul.addr %s69, 16
    %s337 = scalar_lea.hbm %s3, %s336
    %s338 = scalar_lea.vmem [#allocation3], 8
    %s339 = scalar_lea.sflag [#allocation4], 24
    // Predicated region
    $region86: #{run_query.2} parent=1 // pred_check
      _
    $region87: #{run_query.2} parent=1 // pred_check_branch
      %341 = sbr.rel target = $region89
    $region88: #{run_query.2} parent=1 // pred_region
      %342 = sst [smem:[#allocation14]] [#allocation49]
      %343 = sst [smem:[#allocation15]] [#allocation48]
    $region89: #{run_query.2} parent=1 // pred_fallthru
      _
    %345 = shalt.err (0)
    %s347 = sshll.u32 %s338, 4
    %s348 = int_to_ptr.vmem [resolvable:$true] %s347
    %350 = dma.hbm_to_vmem [thread:$0]  %s337, 16, %s348, %s339
    %s351 = smul.addr %s70, 16
    %s352 = scalar_lea.hbm %s2, %s351
    %s353 = scalar_lea.vmem [#allocation2], 9
    %s354 = scalar_lea.sflag [#allocation4], 9
    // Predicated region
    $region90: #{run_query.2} parent=1 // pred_check
      _
    $region91: #{run_query.2} parent=1 // pred_check_branch
      %356 = sbr.rel target = $region93
    $region92: #{run_query.2} parent=1 // pred_region
      %357 = sst [smem:[#allocation14]] [#allocation51]
      %358 = sst [smem:[#allocation15]] [#allocation50]
    $region93: #{run_query.2} parent=1 // pred_fallthru
      _
    %360 = shalt.err (0)
    %s362 = sshll.u32 %s353, 4
    %s363 = int_to_ptr.vmem [resolvable:$true] %s362
    %365 = dma.hbm_to_vmem [thread:$0]  %s352, 16, %s363, %s354
    %s366 = smul.addr %s71, 16
    %s367 = scalar_lea.hbm %s3, %s366
    %s368 = scalar_lea.vmem [#allocation3], 9
    %s369 = scalar_lea.sflag [#allocation4], 25
    // Predicated region
    $region94: #{run_query.2} parent=1 // pred_check
      _
    $region95: #{run_query.2} parent=1 // pred_check_branch
      %371 = sbr.rel target = $region97
    $region96: #{run_query.2} parent=1 // pred_region
      %372 = sst [smem:[#allocation14]] [#allocation53]
      %373 = sst [smem:[#allocation15]] [#allocation52]
    $region97: #{run_query.2} parent=1 // pred_fallthru
      _
    %375 = shalt.err (0)
    %s377 = sshll.u32 %s368, 4
    %s378 = int_to_ptr.vmem [resolvable:$true] %s377
    %380 = dma.hbm_to_vmem [thread:$0]  %s367, 16, %s378, %s369
    %s381 = smul.addr %s72, 16
    %s382 = scalar_lea.hbm %s2, %s381
    %s383 = scalar_lea.vmem [#allocation2], 10
    %s384 = scalar_lea.sflag [#allocation4], 10
    // Predicated region
    $region98: #{run_query.2} parent=1 // pred_check
      _
    $region99: #{run_query.2} parent=1 // pred_check_branch
      %386 = sbr.rel target = $region101
    $region100: #{run_query.2} parent=1 // pred_region
      %387 = sst [smem:[#allocation14]] [#allocation55]
      %388 = sst [smem:[#allocation15]] [#allocation54]
    $region101: #{run_query.2} parent=1 // pred_fallthru
      _
    %390 = shalt.err (0)
    %s392 = sshll.u32 %s383, 4
    %s393 = int_to_ptr.vmem [resolvable:$true] %s392
    %395 = dma.hbm_to_vmem [thread:$0]  %s382, 16, %s393, %s384
    %s396 = smul.addr %s73, 16
    %s397 = scalar_lea.hbm %s3, %s396
    %s398 = scalar_lea.vmem [#allocation3], 10
    %s399 = scalar_lea.sflag [#allocation4], 26
    // Predicated region
    $region102: #{run_query.2} parent=1 // pred_check
      _
    $region103: #{run_query.2} parent=1 // pred_check_branch
      %401 = sbr.rel target = $region105
    $region104: #{run_query.2} parent=1 // pred_region
      %402 = sst [smem:[#allocation14]] [#allocation57]
      %403 = sst [smem:[#allocation15]] [#allocation56]
    $region105: #{run_query.2} parent=1 // pred_fallthru
      _
    %405 = shalt.err (0)
    %s407 = sshll.u32 %s398, 4
    %s408 = int_to_ptr.vmem [resolvable:$true] %s407
    %410 = dma.hbm_to_vmem [thread:$0]  %s397, 16, %s408, %s399
    %s411 = smul.addr %s74, 16
    %s412 = scalar_lea.hbm %s2, %s411
    %s413 = scalar_lea.vmem [#allocation2], 11
    %s414 = scalar_lea.sflag [#allocation4], 11
    // Predicated region
    $region106: #{run_query.2} parent=1 // pred_check
      _
    $region107: #{run_query.2} parent=1 // pred_check_branch
      %416 = sbr.rel target = $region109
    $region108: #{run_query.2} parent=1 // pred_region
      %417 = sst [smem:[#allocation14]] [#allocation59]
      %418 = sst [smem:[#allocation15]] [#allocation58]
    $region109: #{run_query.2} parent=1 // pred_fallthru
      _
    %420 = shalt.err (0)
    %s422 = sshll.u32 %s413, 4
    %s423 = int_to_ptr.vmem [resolvable:$true] %s422
    %425 = dma.hbm_to_vmem [thread:$0]  %s412, 16, %s423, %s414
    %s426 = smul.addr %s75, 16
    %s427 = scalar_lea.hbm %s3, %s426
    %s428 = scalar_lea.vmem [#allocation3], 11
    %s429 = scalar_lea.sflag [#allocation4], 27
    // Predicated region
    $region110: #{run_query.2} parent=1 // pred_check
      _
    $region111: #{run_query.2} parent=1 // pred_check_branch
      %431 = sbr.rel target = $region113
    $region112: #{run_query.2} parent=1 // pred_region
      %432 = sst [smem:[#allocation14]] [#allocation61]
      %433 = sst [smem:[#allocation15]] [#allocation60]
    $region113: #{run_query.2} parent=1 // pred_fallthru
      _
    %435 = shalt.err (0)
    %s437 = sshll.u32 %s428, 4
    %s438 = int_to_ptr.vmem [resolvable:$true] %s437
    %440 = dma.hbm_to_vmem [thread:$0]  %s427, 16, %s438, %s429
    %s441 = smul.addr %s76, 16
    %s442 = scalar_lea.hbm %s2, %s441
    %s443 = scalar_lea.vmem [#allocation2], 12
    %s444 = scalar_lea.sflag [#allocation4], 12
    // Predicated region
    $region114: #{run_query.2} parent=1 // pred_check
      _
    $region115: #{run_query.2} parent=1 // pred_check_branch
      %446 = sbr.rel target = $region117
    $region116: #{run_query.2} parent=1 // pred_region
      %447 = sst [smem:[#allocation14]] [#allocation63]
      %448 = sst [smem:[#allocation15]] [#allocation62]
    $region117: #{run_query.2} parent=1 // pred_fallthru
      _
    %450 = shalt.err (0)
    %s452 = sshll.u32 %s443, 4
    %s453 = int_to_ptr.vmem [resolvable:$true] %s452
    %455 = dma.hbm_to_vmem [thread:$0]  %s442, 16, %s453, %s444
    %s456 = smul.addr %s77, 16
    %s457 = scalar_lea.hbm %s3, %s456
    %s458 = scalar_lea.vmem [#allocation3], 12
    %s459 = scalar_lea.sflag [#allocation4], 28
    // Predicated region
    $region118: #{run_query.2} parent=1 // pred_check
      _
    $region119: #{run_query.2} parent=1 // pred_check_branch
      %461 = sbr.rel target = $region121
    $region120: #{run_query.2} parent=1 // pred_region
      %462 = sst [smem:[#allocation14]] [#allocation65]
      %463 = sst [smem:[#allocation15]] [#allocation64]
    $region121: #{run_query.2} parent=1 // pred_fallthru
      _
    %465 = shalt.err (0)
    %s467 = sshll.u32 %s458, 4
    %s468 = int_to_ptr.vmem [resolvable:$true] %s467
    %470 = dma.hbm_to_vmem [thread:$0]  %s457, 16, %s468, %s459
    %s471 = smul.addr %s78, 16
    %s472 = scalar_lea.hbm %s2, %s471
    %s473 = scalar_lea.vmem [#allocation2], 13
    %s474 = scalar_lea.sflag [#allocation4], 13
    // Predicated region
    $region122: #{run_query.2} parent=1 // pred_check
      _
    $region123: #{run_query.2} parent=1 // pred_check_branch
      %476 = sbr.rel target = $region125
    $region124: #{run_query.2} parent=1 // pred_region
      %477 = sst [smem:[#allocation14]] [#allocation67]
      %478 = sst [smem:[#allocation15]] [#allocation66]
    $region125: #{run_query.2} parent=1 // pred_fallthru
      _
    %480 = shalt.err (0)
    %s482 = sshll.u32 %s473, 4
    %s483 = int_to_ptr.vmem [resolvable:$true] %s482
    %485 = dma.hbm_to_vmem [thread:$0]  %s472, 16, %s483, %s474
    %s486 = smul.addr %s79, 16
    %s487 = scalar_lea.hbm %s3, %s486
    %s488 = scalar_lea.vmem [#allocation3], 13
    %s489 = scalar_lea.sflag [#allocation4], 29
    // Predicated region
    $region126: #{run_query.2} parent=1 // pred_check
      _
    $region127: #{run_query.2} parent=1 // pred_check_branch
      %491 = sbr.rel target = $region129
    $region128: #{run_query.2} parent=1 // pred_region
      %492 = sst [smem:[#allocation14]] [#allocation69]
      %493 = sst [smem:[#allocation15]] [#allocation68]
    $region129: #{run_query.2} parent=1 // pred_fallthru
      _
    %495 = shalt.err (0)
    %s497 = sshll.u32 %s488, 4
    %s498 = int_to_ptr.vmem [resolvable:$true] %s497
    %500 = dma.hbm_to_vmem [thread:$0]  %s487, 16, %s498, %s489
    %s501 = smul.addr %s80, 16
    %s502 = scalar_lea.hbm %s2, %s501
    %s503 = scalar_lea.vmem [#allocation2], 14
    %s504 = scalar_lea.sflag [#allocation4], 14
    // Predicated region
    $region130: #{run_query.2} parent=1 // pred_check
      _
    $region131: #{run_query.2} parent=1 // pred_check_branch
      %506 = sbr.rel target = $region133
    $region132: #{run_query.2} parent=1 // pred_region
      %507 = sst [smem:[#allocation14]] [#allocation71]
      %508 = sst [smem:[#allocation15]] [#allocation70]
    $region133: #{run_query.2} parent=1 // pred_fallthru
      _
    %510 = shalt.err (0)
    %s512 = sshll.u32 %s503, 4
    %s513 = int_to_ptr.vmem [resolvable:$true] %s512
    %515 = dma.hbm_to_vmem [thread:$0]  %s502, 16, %s513, %s504
    %s516 = smul.addr %s81, 16
    %s517 = scalar_lea.hbm %s3, %s516
    %s518 = scalar_lea.vmem [#allocation3], 14
    %s519 = scalar_lea.sflag [#allocation4], 30
    // Predicated region
    $region134: #{run_query.2} parent=1 // pred_check
      _
    $region135: #{run_query.2} parent=1 // pred_check_branch
      %521 = sbr.rel target = $region137
    $region136: #{run_query.2} parent=1 // pred_region
      %522 = sst [smem:[#allocation14]] [#allocation73]
      %523 = sst [smem:[#allocation15]] [#allocation72]
    $region137: #{run_query.2} parent=1 // pred_fallthru
      _
    %525 = shalt.err (0)
    %s527 = sshll.u32 %s518, 4
    %s528 = int_to_ptr.vmem [resolvable:$true] %s527
    %530 = dma.hbm_to_vmem [thread:$0]  %s517, 16, %s528, %s519
    %s531 = smul.addr %s82, 16
    %s532 = scalar_lea.hbm %s2, %s531
    %s533 = scalar_lea.vmem [#allocation2], 15
    %s534 = scalar_lea.sflag [#allocation4], 15
    // Predicated region
    $region138: #{run_query.2} parent=1 // pred_check
      _
    $region139: #{run_query.2} parent=1 // pred_check_branch
      %536 = sbr.rel target = $region141
    $region140: #{run_query.2} parent=1 // pred_region
      %537 = sst [smem:[#allocation14]] [#allocation75]
      %538 = sst [smem:[#allocation15]] [#allocation74]
    $region141: #{run_query.2} parent=1 // pred_fallthru
      _
    %540 = shalt.err (0)
    %s542 = sshll.u32 %s533, 4
    %s543 = int_to_ptr.vmem [resolvable:$true] %s542
    %545 = dma.hbm_to_vmem [thread:$0]  %s532, 16, %s543, %s534
    %s546 = smul.addr %s83, 16
    %s547 = scalar_lea.hbm %s3, %s546
    %s548 = scalar_lea.vmem [#allocation3], 15
    %s549 = scalar_lea.sflag [#allocation4], 31
    // Predicated region
    $region142: #{run_query.2} parent=1 // pred_check
      _
    $region143: #{run_query.2} parent=1 // pred_check_branch
      %551 = sbr.rel target = $region145
    $region144: #{run_query.2} parent=1 // pred_region
      %552 = sst [smem:[#allocation14]] [#allocation77]
      %553 = sst [smem:[#allocation15]] [#allocation76]
    $region145: #{run_query.2} parent=1 // pred_fallthru
      _
    %555 = shalt.err (0)
    %s557 = sshll.u32 %s548, 4
    %s558 = int_to_ptr.vmem [resolvable:$true] %s557
    %560 = dma.hbm_to_vmem [thread:$0]  %s547, 16, %s558, %s549
    %562 = dma.done [#allocation4], 16
    %564 = dma.done %s99, 16
    %566 = dma.done %s114, 16
    %568 = dma.done %s129, 16
    %570 = dma.done %s144, 16
    %572 = dma.done %s159, 16
    %574 = dma.done %s174, 16
    %576 = dma.done %s189, 16
    %578 = dma.done %s204, 16
    %580 = dma.done %s219, 16
    %582 = dma.done %s234, 16
    %584 = dma.done %s249, 16
    %586 = dma.done %s264, 16
    %588 = dma.done %s279, 16
    %590 = dma.done %s294, 16
    %592 = dma.done %s309, 16
    %594 = dma.done %s324, 16
    %596 = dma.done %s339, 16
    %598 = dma.done %s354, 16
    %600 = dma.done %s369, 16
    %602 = dma.done %s384, 16
    %604 = dma.done %s399, 16
    %606 = dma.done %s414, 16
    %608 = dma.done %s429, 16
    %610 = dma.done %s444, 16
    %612 = dma.done %s459, 16
    %614 = dma.done %s474, 16
    %616 = dma.done %s489, 16
    %618 = dma.done %s504, 16
    %620 = dma.done %s519, 16
    %622 = dma.done %s534, 16
    %624 = dma.done %s549, 16
    %v625 = vld [vmem:[#allocation2] sm:$0xff]
    %v626 = vld [vmem:[#allocation2 + $0x8] sm:$0xff]
    %v627 = vld [vmem:[#allocation3] sm:$0xff]
    %v628 = vld [vmem:[#allocation3 + $0x8] sm:$0xff]
    %v629 = vadd.f32 %v625, %v627
    %v630 = vadd.f32 %v626, %v628
    %v631 = vpack.c.bf16 %v630, %v629
    %v632 = vld [vmem:[#allocation8] sm:$0xf]
    %v633 = vld [vmem:[#allocation8 + $0x4] sm:$0xf]
    %v634 = vld [vmem:[#allocation8 + $0x8] sm:$0xf]
    %v635 = vld [vmem:[#allocation8 + $0xc] sm:$0xf]
    %v636 = vld [vmem:[#allocation8 + $0x10] sm:$0xf]
    %v637 = vld [vmem:[#allocation8 + $0x14] sm:$0xf]
    %v638 = vld [vmem:[#allocation8 + $0x18] sm:$0xf]
    %v639 = vld [vmem:[#allocation8 + $0x1c] sm:$0xf]
    %v640 = vld [vmem:[#allocation8 + $0x20] sm:$0xf]
    %v641 = vld [vmem:[#allocation8 + $0x24] sm:$0xf]
    %v642 = vld [vmem:[#allocation8 + $0x28] sm:$0xf]
    %v643 = vld [vmem:[#allocation8 + $0x2c] sm:$0xf]
    %v644 = vld [vmem:[#allocation8 + $0x30] sm:$0xf]
    %v645 = vld [vmem:[#allocation8 + $0x34] sm:$0xf]
    %v646 = vld [vmem:[#allocation8 + $0x38] sm:$0xf]
    %v647 = vld [vmem:[#allocation8 + $0x3c] sm:$0xf]
    %v648 = vld [vmem:[#allocation10] sm:$0x1]
    %v650 = vlaneseq
    %v651 = vshrl.u32 %v650, 7
    %v652 = vsub.s32 0, %v651
    %v653 = vrot.slane %v648, %v652
    %v671 = vunpack.c.l.b16 %v632
    %v672 = vunpack.c.l.b16 %v633
    %v673 = vunpack.c.l.b16 %v634
    %v674 = vunpack.c.l.b16 %v635
    %v675 = vunpack.c.l.b16 %v636
    %v676 = vunpack.c.l.b16 %v637
    %v677 = vunpack.c.l.b16 %v638
    %v678 = vunpack.c.l.b16 %v639
    %v679 = vunpack.c.l.b16 %v640
    %v680 = vunpack.c.l.b16 %v641
    %v681 = vunpack.c.l.b16 %v642
    %v682 = vunpack.c.l.b16 %v643
    %v683 = vunpack.c.l.b16 %v644
    %v684 = vunpack.c.l.b16 %v645
    %v685 = vunpack.c.l.b16 %v646
    %v686 = vunpack.c.l.b16 %v647
    %v687 = vpack.c.b16 %v672, %v671
    %v688 = vpack.c.b16 %v674, %v673
    %v689 = vpack.c.b16 %v676, %v675
    %v690 = vpack.c.b16 %v678, %v677
    %v691 = vpack.c.b16 %v680, %v679
    %v692 = vpack.c.b16 %v682, %v681
    %v693 = vpack.c.b16 %v684, %v683
    %v694 = vpack.c.b16 %v686, %v685
    %703 = vmatprep.subr.bf16.mxu0 0
    %704 = vmatpush1.bf16.msra.mxu0 %v687
    %705 = vmatprep.subr.bf16.mxu0 0
    %706 = vmatpush1.bf16.msra.mxu0 %v688
    %707 = vmatprep.subr.bf16.mxu0 0
    %708 = vmatpush1.bf16.msra.mxu0 %v689
    %709 = vmatprep.subr.bf16.mxu0 0
    %710 = vmatpush1.bf16.msra.mxu0 %v690
    %711 = vmatprep.subr.bf16.mxu0 0
    %712 = vmatpush1.bf16.msra.mxu0 %v691
    %713 = vmatprep.subr.bf16.mxu0 0
    %714 = vmatpush1.bf16.msra.mxu0 %v692
    %715 = vmatprep.subr.bf16.mxu0 0
    %716 = vmatpush1.bf16.msra.mxu0 %v693
    %717 = vmatprep.subr.bf16.mxu0 0
    %718 = vmatpush1.bf16.msra.mxu0 %v694
    %719 = vmatprep.subr.bf16.mxu0 0
    %720 = vmatpush1.bf16.msra.mxu0 0
    %721 = vmatprep.subr.bf16.mxu0 0
    %722 = vmatpush1.bf16.msra.mxu0 0
    %723 = vmatprep.subr.bf16.mxu0 0
    %724 = vmatpush1.bf16.msra.mxu0 0
    %725 = vmatprep.subr.bf16.mxu0 0
    %726 = vmatpush1.bf16.msra.mxu0 0
    %727 = vmatprep.subr.bf16.mxu0 0
    %728 = vmatpush1.bf16.msra.mxu0 0
    %729 = vmatprep.subr.bf16.mxu0 0
    %730 = vmatpush1.bf16.msra.mxu0 0
    %731 = vmatprep.subr.bf16.mxu0 0
    %732 = vmatpush1.bf16.msra.mxu0 0
    %733 = vmatprep.subr.bf16.mxu0 0
    %734 = vmatpush1.bf16.msra.mxu0 0
    %735 = vmatprep.mubr.bf16.mxu0 0
    %736 = vmatmul.mubr.bf16.gmra.mrb[0].mxu0 %v631
    %v737 = vpop.f32.mrb[0].mxu0
    %v738 = vadd.f32 %v653, %v737
    %v739 = vpop.f32.mrb[0].mxu0
    %v740 = vpop.f32.mrb[0].mxu0
    %v741 = vadd.f32 %v653, %v740
    %v742 = vpop.f32.mrb[0].mxu0
    %743 = vdwg.mxu0
    %v744 = vsub.f32 0.0, %v741
    %v745 = vadd.f32 %v738, %v744
    %v746 = vmul.f32 %v745, 0.5
    %747 = vst [vmem:[%s6] sm:$0xff] %v746
    // Predicated region
    $region146: #{run_query.2} parent=1 // pred_check
      _
    $region147: #{run_query.2} parent=1 // pred_check_branch
      %749 = sbr.rel (0) target = $region149
    $region148: #{run_query.2} parent=1 // pred_region
      _
    $region149: #{run_query.2} parent=1 // pred_fallthru
      _
    // Predicated region
    $region150: #{run_query.2} parent=1 // pred_check
      _
    $region151: #{run_query.2} parent=1 // pred_check_branch
      %751 = sbr.rel (0) target = $region153
    $region152: #{run_query.2} parent=1 // pred_region
      _
    $region153: #{run_query.2} parent=1 // pred_fallthru
      _
    %752 = vsyncpa [#allocation9], 1
    %753 = vsyncpa [#allocation11], 1
  %754 = vsyncmov [#allocation4]
  %s755 = vpop.sfrf %754
  %p756 = scmp.eq.s32.totalorder %s755, 0
  %p757 = pneg %p756
  %759 = shalt.err (%p757)
  %s760 = scalar_lea.sflag [#allocation4], 1
  %761 = vsyncmov %s760
  %s762 = vpop.sfrf %761
  %p763 = scmp.eq.s32.totalorder %s762, 0
  %p764 = pneg %p763
  %766 = shalt.err (%p764)
  %s767 = scalar_lea.sflag [#allocation4], 2
  %768 = vsyncmov %s767
  %s769 = vpop.sfrf %768
  %p770 = scmp.eq.s32.totalorder %s769, 0
  %p771 = pneg %p770
  %773 = shalt.err (%p771)
  %s774 = scalar_lea.sflag [#allocation4], 3
  %775 = vsyncmov %s774
  %s776 = vpop.sfrf %775
  %p777 = scmp.eq.s32.totalorder %s776, 0
  %p778 = pneg %p777
  %780 = shalt.err (%p778)
  %s781 = scalar_lea.sflag [#allocation4], 4
  %782 = vsyncmov %s781
  %s783 = vpop.sfrf %782
  %p784 = scmp.eq.s32.totalorder %s783, 0
  %p785 = pneg %p784
  %787 = shalt.err (%p785)
  %s788 = scalar_lea.sflag [#allocation4], 5
  %789 = vsyncmov %s788
  %s790 = vpop.sfrf %789
  %p791 = scmp.eq.s32.totalorder %s790, 0
  %p792 = pneg %p791
  %794 = shalt.err (%p792)
  %s795 = scalar_lea.sflag [#allocation4], 6
  %796 = vsyncmov %s795
  %s797 = vpop.sfrf %796
  %p798 = scmp.eq.s32.totalorder %s797, 0
  %p799 = pneg %p798
  %801 = shalt.err (%p799)
  %s802 = scalar_lea.sflag [#allocation4], 7
  %803 = vsyncmov %s802
  %s804 = vpop.sfrf %803
  %p805 = scmp.eq.s32.totalorder %s804, 0
  %p806 = pneg %p805
  %808 = shalt.err (%p806)
  %s809 = scalar_lea.sflag [#allocation4], 8
  %810 = vsyncmov %s809
  %s811 = vpop.sfrf %810
  %p812 = scmp.eq.s32.totalorder %s811, 0
  %p813 = pneg %p812
  %815 = shalt.err (%p813)
  %s816 = scalar_lea.sflag [#allocation4], 9
  %817 = vsyncmov %s816
  %s818 = vpop.sfrf %817
  %p819 = scmp.eq.s32.totalorder %s818, 0
  %p820 = pneg %p819
  %822 = shalt.err (%p820)
  %s823 = scalar_lea.sflag [#allocation4], 10
  %824 = vsyncmov %s823
  %s825 = vpop.sfrf %824
  %p826 = scmp.eq.s32.totalorder %s825, 0
  %p827 = pneg %p826
  %829 = shalt.err (%p827)
  %s830 = scalar_lea.sflag [#allocation4], 11
  %831 = vsyncmov %s830
  %s832 = vpop.sfrf %831
  %p833 = scmp.eq.s32.totalorder %s832, 0
  %p834 = pneg %p833
  %836 = shalt.err (%p834)
  %s837 = scalar_lea.sflag [#allocation4], 12
  %838 = vsyncmov %s837
  %s839 = vpop.sfrf %838
  %p840 = scmp.eq.s32.totalorder %s839, 0
  %p841 = pneg %p840
  %843 = shalt.err (%p841)
  %s844 = scalar_lea.sflag [#allocation4], 13
  %845 = vsyncmov %s844
  %s846 = vpop.sfrf %845
  %p847 = scmp.eq.s32.totalorder %s846, 0
  %p848 = pneg %p847
  %850 = shalt.err (%p848)
  %s851 = scalar_lea.sflag [#allocation4], 14
  %852 = vsyncmov %s851
  %s853 = vpop.sfrf %852
  %p854 = scmp.eq.s32.totalorder %s853, 0
  %p855 = pneg %p854
  %857 = shalt.err (%p855)
  %s858 = scalar_lea.sflag [#allocation4], 15
  %859 = vsyncmov %s858
  %s860 = vpop.sfrf %859
  %p861 = scmp.eq.s32.totalorder %s860, 0
  %p862 = pneg %p861
  %864 = shalt.err (%p862)
  %s865 = scalar_lea.sflag [#allocation4], 16
  %866 = vsyncmov %s865
  %s867 = vpop.sfrf %866
  %p868 = scmp.eq.s32.totalorder %s867, 0
  %p869 = pneg %p868
  %871 = shalt.err (%p869)
  %s872 = scalar_lea.sflag [#allocation4], 17
  %873 = vsyncmov %s872
  %s874 = vpop.sfrf %873
  %p875 = scmp.eq.s32.totalorder %s874, 0
  %p876 = pneg %p875
  %878 = shalt.err (%p876)
  %s879 = scalar_lea.sflag [#allocation4], 18
  %880 = vsyncmov %s879
  %s881 = vpop.sfrf %880
  %p882 = scmp.eq.s32.totalorder %s881, 0
  %p883 = pneg %p882
  %885 = shalt.err (%p883)
  %s886 = scalar_lea.sflag [#allocation4], 19
  %887 = vsyncmov %s886
  %s888 = vpop.sfrf %887
  %p889 = scmp.eq.s32.totalorder %s888, 0
  %p890 = pneg %p889
  %892 = shalt.err (%p890)
  %s893 = scalar_lea.sflag [#allocation4], 20
  %894 = vsyncmov %s893
  %s895 = vpop.sfrf %894
  %p896 = scmp.eq.s32.totalorder %s895, 0
  %p897 = pneg %p896
  %899 = shalt.err (%p897)
  %s900 = scalar_lea.sflag [#allocation4], 21
  %901 = vsyncmov %s900
  %s902 = vpop.sfrf %901
  %p903 = scmp.eq.s32.totalorder %s902, 0
  %p904 = pneg %p903
  %906 = shalt.err (%p904)
  %s907 = scalar_lea.sflag [#allocation4], 22
  %908 = vsyncmov %s907
  %s909 = vpop.sfrf %908
  %p910 = scmp.eq.s32.totalorder %s909, 0
  %p911 = pneg %p910
  %913 = shalt.err (%p911)
  %s914 = scalar_lea.sflag [#allocation4], 23
  %915 = vsyncmov %s914
  %s916 = vpop.sfrf %915
  %p917 = scmp.eq.s32.totalorder %s916, 0
  %p918 = pneg %p917
  %920 = shalt.err (%p918)
  %s921 = scalar_lea.sflag [#allocation4], 24
  %922 = vsyncmov %s921
  %s923 = vpop.sfrf %922
  %p924 = scmp.eq.s32.totalorder %s923, 0
  %p925 = pneg %p924
  %927 = shalt.err (%p925)
  %s928 = scalar_lea.sflag [#allocation4], 25
  %929 = vsyncmov %s928
  %s930 = vpop.sfrf %929
  %p931 = scmp.eq.s32.totalorder %s930, 0
  %p932 = pneg %p931
  %934 = shalt.err (%p932)
  %s935 = scalar_lea.sflag [#allocation4], 26
  %936 = vsyncmov %s935
  %s937 = vpop.sfrf %936
  %p938 = scmp.eq.s32.totalorder %s937, 0
  %p939 = pneg %p938
  %941 = shalt.err (%p939)
  %s942 = scalar_lea.sflag [#allocation4], 27
  %943 = vsyncmov %s942
  %s944 = vpop.sfrf %943
  %p945 = scmp.eq.s32.totalorder %s944, 0
  %p946 = pneg %p945
  %948 = shalt.err (%p946)
  %s949 = scalar_lea.sflag [#allocation4], 28
  %950 = vsyncmov %s949
  %s951 = vpop.sfrf %950
  %p952 = scmp.eq.s32.totalorder %s951, 0
  %p953 = pneg %p952
  %955 = shalt.err (%p953)
  %s956 = scalar_lea.sflag [#allocation4], 29
  %957 = vsyncmov %s956
  %s958 = vpop.sfrf %957
  %p959 = scmp.eq.s32.totalorder %s958, 0
  %p960 = pneg %p959
  %962 = shalt.err (%p960)
  %s963 = scalar_lea.sflag [#allocation4], 30
  %964 = vsyncmov %s963
  %s965 = vpop.sfrf %964
  %p966 = scmp.eq.s32.totalorder %s965, 0
  %p967 = pneg %p966
  %969 = shalt.err (%p967)
  %s970 = scalar_lea.sflag [#allocation4], 31
  %971 = vsyncmov %s970
  %s972 = vpop.sfrf %971
  %p973 = scmp.eq.s32.totalorder %s972, 0
  %p974 = pneg %p973
  %976 = shalt.err (%p974)

</llo_original>
